<compile_context>
chip_gen: v6e
topology: v6e:2x2x1
jax: 0.10.0
libtpu: 0.0.40
codegen_flags: <defaults>
</compile_context>

<pallas_src>
import jax
import jax.numpy as jnp
from jax.experimental import pallas as pl
from jax.experimental.pallas import tpu as pltpu


def attention_projector_kernel(
    x_ref,        # (Bt*HW, Cs)   bf16 student tokens
    pos_ref,      # (HW, Ct)      f32 positional-embedding tokens
    qh_ref,       # (nh, HW, hd)  bf16 pre-projected, pre-scaled query heads
    wproj_ref,    # (Cs, Ct)      bf16 1x1-conv weight, BN scale folded in
    bnshift_ref,  # (1, Ct)       f32 folded conv-bias / BN shift
    wk_ref,       # (nh, hd, Ct)  bf16 per-head K weight (input dim last)
    wv_ref,       # (nh, hd, Ct)  bf16 per-head V weight (input dim last)
    wp_ref,       # (nh, hd, Ct)  bf16 per-head output-projection weight
    bp_ref,       # (1, Ct)       f32 proj bias (+ folded v-bias contribution)
    ln1_g_ref, ln1_b_ref,         # (1, Ct) f32
    w1_ref, b1_ref,               # (Ct, 4Ct) bf16, (1, 4Ct) f32
    w2_ref, b2_ref,               # (4Ct, Ct) bf16, (1, Ct) f32
    ln2_g_ref, ln2_b_ref,         # (1, Ct) f32
    out_ref,                      # (Bt*HW, Ct) f32
):
    f32, bf16 = jnp.float32, jnp.bfloat16
    eps = 1e-5

    T, _ = x_ref.shape
    HW = pos_ref.shape[0]
    Bt = T // HW
    nh, _, _ = qh_ref.shape
    Ct = out_ref.shape[-1]

    # ---- proj_student: 1x1 conv (BN scale folded into weight) + ReLU + pos --
    x = x_ref[...]                                               # (T, Cs) bf16
    s = jnp.dot(x, wproj_ref[...], preferred_element_type=f32)   # (T, Ct) f32
    s = jnp.maximum(s + bnshift_ref[...], 0.0)
    pos_rep = jnp.broadcast_to(pos_ref[...][None], (Bt, HW, Ct)).reshape(T, Ct)
    s = s + pos_rep                                              # preds_S tokens

    # ---- WindowMultiheadPosAttention (window_shapes=(1,1)) ------------------
    # q (incl. bias + softmax scale) comes precomputed from the wrapper; k-bias
    # is softmax-invariant (dropped); v-bias is folded into bp_ref.
    q_h = qh_ref[...]                                            # (nh, HW, hd)
    wk = wk_ref[...]
    wv = wv_ref[...]
    wp = wp_ref[...]

    attn_chunks = []
    for b in range(Bt):                                          # static, small
        sb = s[b * HW:(b + 1) * HW, :].astype(bf16)              # (HW, Ct)
        sb_h = jnp.broadcast_to(sb[None], (nh, HW, Ct))          # head-batched view
        # per-head K / V projections as one batched matmul each: (nh, HW, hd)
        k = jnp.einsum('hte,hde->htd', sb_h, wk,
                       preferred_element_type=f32).astype(bf16)
        v = jnp.einsum('hte,hde->htd', sb_h, wv,
                       preferred_element_type=f32).astype(bf16)
        # logits: scale already folded into q_h
        logits = jnp.einsum('hqd,htd->hqt', q_h, k,
                            preferred_element_type=f32)          # (nh, HW, HW)
        logits = logits - jnp.max(logits, axis=-1, keepdims=True)
        p = jnp.exp(logits)
        attn = p * pl.reciprocal(jnp.sum(p, axis=-1, keepdims=True), approx=True)
        o = jnp.einsum('hqt,htd->hqd', attn.astype(bf16), v,
                       preferred_element_type=f32)               # (nh, HW, hd)
        # head merge + output projection: sum_h o_h @ Wp_h (no concat/transpose)
        ob = jnp.einsum('hqd,hde->hqe', o.astype(bf16), wp,
                        preferred_element_type=f32)              # (nh, HW, Ct)
        attn_chunks.append(jnp.sum(ob, axis=0))                  # (HW, Ct)
    attn_out = attn_chunks[0] if Bt == 1 else jnp.concatenate(attn_chunks, axis=0)

    fea = attn_out + bp_ref[...] + s                             # fea_S

    # ---- LayerNorm 1 --------------------------------------------------------
    d1 = fea - jnp.mean(fea, axis=-1, keepdims=True)
    n = d1 * jax.lax.rsqrt(jnp.mean(d1 * d1, axis=-1, keepdims=True) + eps)
    n = n * ln1_g_ref[...] + ln1_b_ref[...]

    # ---- FFN (Linear -> ReLU -> Linear) + residual on its own input ---------
    h1 = jnp.dot(n.astype(bf16), w1_ref[...], preferred_element_type=f32) + b1_ref[...]
    h1 = jnp.maximum(h1, 0.0)
    f = jnp.dot(h1.astype(bf16), w2_ref[...], preferred_element_type=f32) + b2_ref[...]
    f = n + f

    # ---- LayerNorm 2 --------------------------------------------------------
    d2 = f - jnp.mean(f, axis=-1, keepdims=True)
    y = d2 * jax.lax.rsqrt(jnp.mean(d2 * d2, axis=-1, keepdims=True) + eps)
    y = y * ln2_g_ref[...] + ln2_b_ref[...]

    out_ref[...] = y.astype(out_ref.dtype)


def attention_projector_forward(x_nchw, params, *, hw_dims, num_heads,
                                softmax_scale=1.0, batch_tile=None):
    """x_nchw: [B, student_dims, H, W]  ->  [B, H*W, teacher_dims]."""
    B, Cs, H, W = x_nchw.shape
    assert (H, W) == tuple(hw_dims)
    HW = H * W
    Ct = params["w_proj"].shape[1]
    assert Ct % num_heads == 0, "teacher_dims must be divisible by num_heads"
    hd = Ct // num_heads
    f32, bf16 = jnp.float32, jnp.bfloat16

    if batch_tile is None:
        # Largest divisor of B that keeps the token slab (and VMEM use) bounded;
        # amortizes per-grid-step overhead and fills the MXU M dim for small HW.
        batch_tile = 1
        for cand in range(1, B + 1):
            if B % cand == 0 and cand * HW <= 1024:
                batch_tile = cand
    assert B % batch_tile == 0
    Bt = batch_tile
    T = Bt * HW

    # ---- NCHW -> token-major 2-D [B*HW, C]; bf16 MXU feeds -------------------
    x_tok = jnp.transpose(x_nchw, (0, 2, 3, 1)).reshape(B * HW, Cs).astype(bf16)
    pos_tok = jnp.transpose(params["pos_embed"], (0, 2, 3, 1)).reshape(HW, Ct).astype(f32)

    # ---- fold conv bias + eval-mode BatchNorm into the 1x1-conv weight ------
    inv_std = jax.lax.rsqrt(params["bn_var"].astype(f32) + 1e-5)
    bn_scale = params["bn_gamma"].astype(f32) * inv_std                       # (Ct,)
    w_proj = (params["w_proj"].astype(f32) * bn_scale[None, :]).astype(bf16)  # (Cs, Ct)
    bn_shift = (params["bn_beta"].astype(f32)
                + (params["conv_b"].astype(f32) - params["bn_mean"].astype(f32))
                * bn_scale)[None, :]

    # ---- hoist the batch-independent query projection (+ softmax scale) -----
    scale = (hd ** -0.5) * softmax_scale
    q = params["query"].astype(f32) @ params["wq"].astype(f32) + params["bq"].astype(f32)
    q_heads = (scale * q).reshape(HW, num_heads, hd).transpose(1, 0, 2).astype(bf16)

    # Head-major weight layouts so the kernel never touches the channel axis.
    def head_major(w):  # (Ct_in, nh*hd) -> (nh, hd, Ct_in)
        return jnp.transpose(w.astype(f32).reshape(w.shape[0], num_heads, hd),
                             (1, 2, 0)).astype(bf16)

    wk_h = head_major(params["wk"])          # k bias is softmax-invariant: dropped
    wv_h = head_major(params["wv"])
    wp_h = params["wp"].astype(f32).reshape(num_heads, hd, Ct).astype(bf16)
    # v-bias contribution: softmax rows sum to 1 -> constant (1, Ct) vector.
    bp_eff = (params["bp"].astype(f32).reshape(1, Ct)
              + params["bv"].astype(f32).reshape(1, Ct) @ params["wp"].astype(f32))

    w1 = params["w1"].astype(bf16)
    w2 = params["w2"].astype(bf16)

    const2 = lambda b: (0, 0)
    const3 = lambda b: (0, 0, 0)

    in_specs = [
        pl.BlockSpec((T, Cs), lambda b: (b, 0)),              # x tokens (batch-tiled)
        pl.BlockSpec((HW, Ct), const2),                       # pos tokens
        pl.BlockSpec((num_heads, HW, hd), const3),            # q heads (pre-scaled)
        pl.BlockSpec((Cs, Ct), const2),                       # conv weight (BN folded)
        pl.BlockSpec((1, Ct), const2),                        # bn shift
        pl.BlockSpec((num_heads, hd, Ct), const3),            # Wk (head-major)
        pl.BlockSpec((num_heads, hd, Ct), const3),            # Wv (head-major)
        pl.BlockSpec((num_heads, hd, Ct), const3),            # Wp (head-major)
        pl.BlockSpec((1, Ct), const2),                        # bp (+ folded v bias)
        pl.BlockSpec((1, Ct), const2), pl.BlockSpec((1, Ct), const2),          # LN1
        pl.BlockSpec((Ct, 4 * Ct), const2), pl.BlockSpec((1, 4 * Ct), const2),  # FFN W1,b1
        pl.BlockSpec((4 * Ct, Ct), const2), pl.BlockSpec((1, Ct), const2),       # FFN W2,b2
        pl.BlockSpec((1, Ct), const2), pl.BlockSpec((1, Ct), const2),          # LN2
    ]

    out2d = pl.pallas_call(
        attention_projector_kernel,
        out_shape=jax.ShapeDtypeStruct((B * HW, Ct), jnp.float32),
        grid=(B // Bt,),
        in_specs=in_specs,
        out_specs=pl.BlockSpec((T, Ct), lambda b: (b, 0)),
        compiler_params=pltpu.CompilerParams(
            dimension_semantics=("parallel",),
            vmem_limit_bytes=64 * 1024 * 1024),
    )(
        x_tok, pos_tok, q_heads, w_proj, bn_shift,
        wk_h, wv_h, wp_h, bp_eff,
        params["ln1_g"].astype(f32), params["ln1_b"].astype(f32),
        w1, params["b1"].astype(f32), w2, params["b2"].astype(f32),
        params["ln2_g"].astype(f32), params["ln2_b"].astype(f32),
    )
    return out2d.reshape(B, HW, Ct)


def init_params(key, student_dims, teacher_dims, hw_dims):
    """Deterministic synthetic parameters matching the module's __init__ shapes.
    pos_dims == teacher_dims (required by the module's forward)."""
    H, W = hw_dims
    HW = H * W
    Ct = teacher_dims
    ks = jax.random.split(key, 12)

    def nrm(k, shape, std=0.02):
        return jax.random.normal(k, shape, jnp.float32) * std

    return dict(
        w_proj=nrm(ks[0], (student_dims, Ct)),
        conv_b=nrm(ks[1], (Ct,)),
        bn_gamma=jnp.ones((Ct,), jnp.float32),
        bn_beta=jnp.zeros((Ct,), jnp.float32),
        bn_mean=jnp.zeros((Ct,), jnp.float32),
        bn_var=jnp.ones((Ct,), jnp.float32),
        pos_embed=jax.random.truncated_normal(
            ks[2], -2.0, 2.0, (1, Ct, H, W), jnp.float32) * 0.02,
        query=nrm(ks[3], (HW, Ct), std=1.0),
        wq=nrm(ks[4], (Ct, Ct)), bq=jnp.zeros((1, Ct), jnp.float32),
        wk=nrm(ks[5], (Ct, Ct)), bk=jnp.zeros((1, Ct), jnp.float32),
        wv=nrm(ks[6], (Ct, Ct)), bv=jnp.zeros((1, Ct), jnp.float32),
        wp=nrm(ks[7], (Ct, Ct)), bp=jnp.zeros((1, Ct), jnp.float32),
        ln1_g=jnp.ones((1, Ct), jnp.float32), ln1_b=jnp.zeros((1, Ct), jnp.float32),
        ln2_g=jnp.ones((1, Ct), jnp.float32), ln2_b=jnp.zeros((1, Ct), jnp.float32),
        w1=nrm(ks[8], (Ct, 4 * Ct)), b1=jnp.zeros((1, 4 * Ct), jnp.float32),
        w2=nrm(ks[9], (4 * Ct, Ct)), b2=jnp.zeros((1, Ct), jnp.float32),
    )


def reference_forward(x_nchw, params, *, hw_dims, num_heads, softmax_scale=1.0):
    """Pure-JAX f32 reference mirroring the PyTorch module (eval mode)."""
    B, Cs, H, W = x_nchw.shape
    HW = H * W
    Ct = params["w_proj"].shape[1]
    hd = Ct // num_heads
    xt = jnp.transpose(x_nchw, (0, 2, 3, 1)).reshape(B, HW, Cs)
    y = xt @ params["w_proj"] + params["conv_b"]
    inv = 1.0 / jnp.sqrt(params["bn_var"] + 1e-5)
    y = (y - params["bn_mean"]) * (params["bn_gamma"] * inv) + params["bn_beta"]
    y = jnp.maximum(y, 0.0)
    pos = jnp.transpose(params["pos_embed"], (0, 2, 3, 1)).reshape(1, HW, Ct)
    s = y + pos
    posq = jnp.broadcast_to(params["query"][None], (B, HW, Ct))
    q = posq @ params["wq"] + params["bq"]
    k = s @ params["wk"] + params["bk"]
    v = s @ params["wv"] + params["bv"]
    split = lambda z: z.reshape(B, HW, num_heads, hd).transpose(0, 2, 1, 3)
    qh, kh, vh = split(q), split(k), split(v)
    attn = jnp.einsum('bhqd,bhkd->bhqk', qh, kh) * ((hd ** -0.5) * softmax_scale)
    attn = jax.nn.softmax(attn, axis=-1)
    o = jnp.einsum('bhqk,bhkd->bhqd', attn, vh).transpose(0, 2, 1, 3).reshape(B, HW, Ct)
    o = o @ params["wp"] + params["bp"]
    fea = o + s

    def ln(z, g, b):
        mu = z.mean(-1, keepdims=True)
        var = ((z - mu) ** 2).mean(-1, keepdims=True)
        return (z - mu) / jnp.sqrt(var + 1e-5) * g + b

    n = ln(fea, params["ln1_g"], params["ln1_b"])
    h1 = jnp.maximum(n @ params["w1"] + params["b1"], 0.0)
    f = n + (h1 @ params["w2"] + params["b2"])
    return ln(f, params["ln2_g"], params["ln2_b"])


if __name__ == "__main__":
    B = 2
    student_dims = 16
    teacher_dims = 32
    H = W = 4                 # hw_dims = (4, 4) -> 16 tokens
    num_heads = 8             # head_dims = 4
    softmax_scale = 1.0       # AttentionProjector default

    key = jax.random.PRNGKey(0)
    kx, kp = jax.random.split(key)
    x = jax.random.normal(kx, (B, student_dims, H, W), jnp.float32)
    params = init_params(kp, student_dims, teacher_dims, (H, W))

    out = attention_projector_forward(
        x, params, hw_dims=(H, W), num_heads=num_heads,
        softmax_scale=softmax_scale)
    out = jax.block_until_ready(out)

    assert out.shape == (B, H * W, teacher_dims)
    assert bool(jnp.all(jnp.isfinite(out)))

    ref = reference_forward(x, params, hw_dims=(H, W), num_heads=num_heads,
                            softmax_scale=softmax_scale)
    # bf16 MXU inputs + approx-reciprocal softmax -> loose tolerance vs f32 ref.
    assert bool(jnp.allclose(out, ref, rtol=0.1, atol=0.1)), "mismatch vs f32 reference"

    print("KERNEL_OK")
</pallas_src>

<mosaic_0001>
module attributes {stable_mosaic.version = 11 : i64} {
  func.func @attention_projector_kernel(%arg0: i32, %arg1: memref<32x16xbf16, #tpu.memory_space<vmem>>, %arg2: memref<16x32xf32, #tpu.memory_space<vmem>>, %arg3: memref<8x16x4xbf16, #tpu.memory_space<vmem>>, %arg4: memref<16x32xbf16, #tpu.memory_space<vmem>>, %arg5: memref<1x32xf32, #tpu.memory_space<vmem>>, %arg6: memref<8x4x32xbf16, #tpu.memory_space<vmem>>, %arg7: memref<8x4x32xbf16, #tpu.memory_space<vmem>>, %arg8: memref<8x4x32xbf16, #tpu.memory_space<vmem>>, %arg9: memref<1x32xf32, #tpu.memory_space<vmem>>, %arg10: memref<1x32xf32, #tpu.memory_space<vmem>>, %arg11: memref<1x32xf32, #tpu.memory_space<vmem>>, %arg12: memref<32x128xbf16, #tpu.memory_space<vmem>>, %arg13: memref<1x128xf32, #tpu.memory_space<vmem>>, %arg14: memref<128x32xbf16, #tpu.memory_space<vmem>>, %arg15: memref<1x32xf32, #tpu.memory_space<vmem>>, %arg16: memref<1x32xf32, #tpu.memory_space<vmem>>, %arg17: memref<1x32xf32, #tpu.memory_space<vmem>>, %arg18: memref<32x32xf32, #tpu.memory_space<vmem>>) attributes {dimension_semantics = [#tpu.dimension_semantics<parallel>], iteration_bounds = array<i64: 1>, scalar_prefetch = 0 : i64, scratch_operands = 0 : i64, tpu.core_type = #tpu.core_type<tc>, window_params = [{transform_indices = @transform_0, window_bounds = array<i64: 32, 16>}, {pipeline_mode = #tpu.pipeline_mode<synchronous>, transform_indices = @transform_1, window_bounds = array<i64: 16, 32>}, {pipeline_mode = #tpu.pipeline_mode<synchronous>, transform_indices = @transform_2, window_bounds = array<i64: 8, 16, 4>}, {pipeline_mode = #tpu.pipeline_mode<synchronous>, transform_indices = @transform_3, window_bounds = array<i64: 16, 32>}, {pipeline_mode = #tpu.pipeline_mode<synchronous>, transform_indices = @transform_4, window_bounds = array<i64: 1, 32>}, {pipeline_mode = #tpu.pipeline_mode<synchronous>, transform_indices = @transform_5, window_bounds = array<i64: 8, 4, 32>}, {pipeline_mode = #tpu.pipeline_mode<synchronous>, transform_indices = @transform_6, window_bounds = array<i64: 8, 4, 32>}, {pipeline_mode = #tpu.pipeline_mode<synchronous>, transform_indices = @transform_7, window_bounds = array<i64: 8, 4, 32>}, {pipeline_mode = #tpu.pipeline_mode<synchronous>, transform_indices = @transform_8, window_bounds = array<i64: 1, 32>}, {pipeline_mode = #tpu.pipeline_mode<synchronous>, transform_indices = @transform_9, window_bounds = array<i64: 1, 32>}, {pipeline_mode = #tpu.pipeline_mode<synchronous>, transform_indices = @transform_10, window_bounds = array<i64: 1, 32>}, {pipeline_mode = #tpu.pipeline_mode<synchronous>, transform_indices = @transform_11, window_bounds = array<i64: 32, 128>}, {pipeline_mode = #tpu.pipeline_mode<synchronous>, transform_indices = @transform_12, window_bounds = array<i64: 1, 128>}, {pipeline_mode = #tpu.pipeline_mode<synchronous>, transform_indices = @transform_13, window_bounds = array<i64: 128, 32>}, {pipeline_mode = #tpu.pipeline_mode<synchronous>, transform_indices = @transform_14, window_bounds = array<i64: 1, 32>}, {pipeline_mode = #tpu.pipeline_mode<synchronous>, transform_indices = @transform_15, window_bounds = array<i64: 1, 32>}, {pipeline_mode = #tpu.pipeline_mode<synchronous>, transform_indices = @transform_16, window_bounds = array<i64: 1, 32>}, {transform_indices = @transform_17, window_bounds = array<i64: 32, 32>}]} {
    %c0 = arith.constant 0 : index
    %c0_0 = arith.constant 0 : index
    %0 = vector.load %arg1[%c0, %c0_0] : memref<32x16xbf16, #tpu.memory_space<vmem>>, vector<32x16xbf16>
    %c0_1 = arith.constant 0 : index
    %c0_2 = arith.constant 0 : index
    %1 = vector.load %arg4[%c0_1, %c0_2] : memref<16x32xbf16, #tpu.memory_space<vmem>>, vector<16x32xbf16>
    %cst = arith.constant dense<0.000000e+00> : vector<32x32xf32>
    %2 = tpu.matmul %0, %1, %cst {dimension_numbers = #tpu.dot_dimension_numbers<[1], [0], [0], [1], [0, 0, 1, 1], [], []>} : vector<32x16xbf16>, vector<16x32xbf16>, vector<32x32xf32> -> vector<32x32xf32>
    %c0_3 = arith.constant 0 : index
    %c0_4 = arith.constant 0 : index
    %3 = vector.load %arg5[%c0_3, %c0_4] : memref<1x32xf32, #tpu.memory_space<vmem>>, vector<1x32xf32>
    %4 = vector.broadcast %3 : vector<1x32xf32> to vector<32x32xf32>
    %5 = arith.addf %2, %4 : vector<32x32xf32>
    %cst_5 = arith.constant 0.000000e+00 : f32
    %6 = vector.broadcast %cst_5 : f32 to vector<32x32xf32>
    %7 = arith.maximumf %5, %6 : vector<32x32xf32>
    %c0_6 = arith.constant 0 : index
    %c0_7 = arith.constant 0 : index
    %8 = vector.load %arg2[%c0_6, %c0_7] : memref<16x32xf32, #tpu.memory_space<vmem>>, vector<16x32xf32>
    %9 = vector.shape_cast %8 : vector<16x32xf32> to vector<1x16x32xf32>
    %10 = vector.shape_cast %9 : vector<1x16x32xf32> to vector<1x16x32xf32>
    %11 = vector.broadcast %10 : vector<1x16x32xf32> to vector<2x16x32xf32>
    %12 = vector.shape_cast %11 : vector<2x16x32xf32> to vector<32x32xf32>
    %13 = arith.addf %7, %12 : vector<32x32xf32>
    %c0_8 = arith.constant 0 : index
    %c0_9 = arith.constant 0 : index
    %c0_10 = arith.constant 0 : index
    %14 = vector.load %arg3[%c0_8, %c0_9, %c0_10] : memref<8x16x4xbf16, #tpu.memory_space<vmem>>, vector<8x16x4xbf16>
    %c0_11 = arith.constant 0 : index
    %c0_12 = arith.constant 0 : index
    %c0_13 = arith.constant 0 : index
    %15 = vector.load %arg6[%c0_11, %c0_12, %c0_13] : memref<8x4x32xbf16, #tpu.memory_space<vmem>>, vector<8x4x32xbf16>
    %c0_14 = arith.constant 0 : index
    %c0_15 = arith.constant 0 : index
    %c0_16 = arith.constant 0 : index
    %16 = vector.load %arg7[%c0_14, %c0_15, %c0_16] : memref<8x4x32xbf16, #tpu.memory_space<vmem>>, vector<8x4x32xbf16>
    %c0_17 = arith.constant 0 : index
    %c0_18 = arith.constant 0 : index
    %c0_19 = arith.constant 0 : index
    %17 = vector.load %arg8[%c0_17, %c0_18, %c0_19] : memref<8x4x32xbf16, #tpu.memory_space<vmem>>, vector<8x4x32xbf16>
    %18 = vector.extract_strided_slice %13 {offsets = [0, 0], sizes = [16, 32], strides = [1, 1]} : vector<32x32xf32> to vector<16x32xf32>
    %19 = arith.truncf %18 : vector<16x32xf32> to vector<16x32xbf16>
    %20 = vector.shape_cast %19 : vector<16x32xbf16> to vector<1x16x32xbf16>
    %21 = vector.shape_cast %20 : vector<1x16x32xbf16> to vector<1x16x32xbf16>
    %22 = vector.broadcast %21 : vector<1x16x32xbf16> to vector<8x16x32xbf16>
    "tpu.trace_start"() <{level = 10 : i32, message = "hte,hde->htd"}> : () -> ()
    %cst_20 = arith.constant dense<0.000000e+00> : vector<8x16x4xf32>
    %23 = tpu.matmul %22, %15, %cst_20 {dimension_numbers = #tpu.dot_dimension_numbers<[2], [2], [1], [1], [0, 0, 0, 1, 1, 1], [0], [0]>} : vector<8x16x32xbf16>, vector<8x4x32xbf16>, vector<8x16x4xf32> -> vector<8x16x4xf32>
    "tpu.trace_stop"() : () -> ()
    %24 = arith.truncf %23 : vector<8x16x4xf32> to vector<8x16x4xbf16>
    "tpu.trace_start"() <{level = 10 : i32, message = "hte,hde->htd"}> : () -> ()
    %cst_21 = arith.constant dense<0.000000e+00> : vector<8x16x4xf32>
    %25 = tpu.matmul %22, %16, %cst_21 {dimension_numbers = #tpu.dot_dimension_numbers<[2], [2], [1], [1], [0, 0, 0, 1, 1, 1], [0], [0]>} : vector<8x16x32xbf16>, vector<8x4x32xbf16>, vector<8x16x4xf32> -> vector<8x16x4xf32>
    "tpu.trace_stop"() : () -> ()
    %26 = arith.truncf %25 : vector<8x16x4xf32> to vector<8x16x4xbf16>
    "tpu.trace_start"() <{level = 10 : i32, message = "hqd,htd->hqt"}> : () -> ()
    %cst_22 = arith.constant dense<0.000000e+00> : vector<8x16x16xf32>
    %27 = tpu.matmul %14, %24, %cst_22 {dimension_numbers = #tpu.dot_dimension_numbers<[2], [2], [1], [1], [0, 0, 0, 1, 1, 1], [0], [0]>} : vector<8x16x4xbf16>, vector<8x16x4xbf16>, vector<8x16x16xf32> -> vector<8x16x16xf32>
    "tpu.trace_stop"() : () -> ()
    %cst_23 = arith.constant dense<0xFF800000> : vector<8x16xf32>
    %28 = vector.multi_reduction <maximumf>, %27, %cst_23 [2] : vector<8x16x16xf32> to vector<8x16xf32>
    %29 = vector.shape_cast %28 : vector<8x16xf32> to vector<8x16x1xf32>
    %30 = vector.broadcast %29 : vector<8x16x1xf32> to vector<8x16x16xf32>
    %31 = arith.subf %27, %30 : vector<8x16x16xf32>
    %32 = math.exp %31 : vector<8x16x16xf32>
    %cst_24 = arith.constant dense<0.000000e+00> : vector<8x16xf32>
    %33 = vector.multi_reduction <add>, %32, %cst_24 [2] : vector<8x16x16xf32> to vector<8x16xf32>
    %34 = vector.shape_cast %33 : vector<8x16xf32> to vector<8x16x1xf32>
    %35 = tpu.reciprocal %34 {approx = true} : vector<8x16x1xf32> -> vector<8x16x1xf32>
    %36 = vector.broadcast %35 : vector<8x16x1xf32> to vector<8x16x16xf32>
    %37 = arith.mulf %32, %36 : vector<8x16x16xf32>
    %38 = arith.truncf %37 : vector<8x16x16xf32> to vector<8x16x16xbf16>
    "tpu.trace_start"() <{level = 10 : i32, message = "hqt,htd->hqd"}> : () -> ()
    %cst_25 = arith.constant dense<0.000000e+00> : vector<8x16x4xf32>
    %39 = tpu.matmul %38, %26, %cst_25 {dimension_numbers = #tpu.dot_dimension_numbers<[2], [1], [1], [2], [0, 0, 0, 1, 1, 2], [0], [0]>} : vector<8x16x16xbf16>, vector<8x16x4xbf16>, vector<8x16x4xf32> -> vector<8x16x4xf32>
    "tpu.trace_stop"() : () -> ()
    %40 = arith.truncf %39 : vector<8x16x4xf32> to vector<8x16x4xbf16>
    "tpu.trace_start"() <{level = 10 : i32, message = "hqd,hde->hqe"}> : () -> ()
    %cst_26 = arith.constant dense<0.000000e+00> : vector<8x16x32xf32>
    %41 = tpu.matmul %40, %17, %cst_26 {dimension_numbers = #tpu.dot_dimension_numbers<[2], [1], [1], [2], [0, 0, 0, 1, 1, 2], [0], [0]>} : vector<8x16x4xbf16>, vector<8x4x32xbf16>, vector<8x16x32xf32> -> vector<8x16x32xf32>
    "tpu.trace_stop"() : () -> ()
    %cst_27 = arith.constant dense<0.000000e+00> : vector<16x32xf32>
    %42 = vector.multi_reduction <add>, %41, %cst_27 [0] : vector<8x16x32xf32> to vector<16x32xf32>
    %43 = vector.extract_strided_slice %13 {offsets = [16, 0], sizes = [16, 32], strides = [1, 1]} : vector<32x32xf32> to vector<16x32xf32>
    %44 = arith.truncf %43 : vector<16x32xf32> to vector<16x32xbf16>
    %45 = vector.shape_cast %44 : vector<16x32xbf16> to vector<1x16x32xbf16>
    %46 = vector.shape_cast %45 : vector<1x16x32xbf16> to vector<1x16x32xbf16>
    %47 = vector.broadcast %46 : vector<1x16x32xbf16> to vector<8x16x32xbf16>
    "tpu.trace_start"() <{level = 10 : i32, message = "hte,hde->htd"}> : () -> ()
    %cst_28 = arith.constant dense<0.000000e+00> : vector<8x16x4xf32>
    %48 = tpu.matmul %47, %15, %cst_28 {dimension_numbers = #tpu.dot_dimension_numbers<[2], [2], [1], [1], [0, 0, 0, 1, 1, 1], [0], [0]>} : vector<8x16x32xbf16>, vector<8x4x32xbf16>, vector<8x16x4xf32> -> vector<8x16x4xf32>
    "tpu.trace_stop"() : () -> ()
    %49 = arith.truncf %48 : vector<8x16x4xf32> to vector<8x16x4xbf16>
    "tpu.trace_start"() <{level = 10 : i32, message = "hte,hde->htd"}> : () -> ()
    %cst_29 = arith.constant dense<0.000000e+00> : vector<8x16x4xf32>
    %50 = tpu.matmul %47, %16, %cst_29 {dimension_numbers = #tpu.dot_dimension_numbers<[2], [2], [1], [1], [0, 0, 0, 1, 1, 1], [0], [0]>} : vector<8x16x32xbf16>, vector<8x4x32xbf16>, vector<8x16x4xf32> -> vector<8x16x4xf32>
    "tpu.trace_stop"() : () -> ()
    %51 = arith.truncf %50 : vector<8x16x4xf32> to vector<8x16x4xbf16>
    "tpu.trace_start"() <{level = 10 : i32, message = "hqd,htd->hqt"}> : () -> ()
    %cst_30 = arith.constant dense<0.000000e+00> : vector<8x16x16xf32>
    %52 = tpu.matmul %14, %49, %cst_30 {dimension_numbers = #tpu.dot_dimension_numbers<[2], [2], [1], [1], [0, 0, 0, 1, 1, 1], [0], [0]>} : vector<8x16x4xbf16>, vector<8x16x4xbf16>, vector<8x16x16xf32> -> vector<8x16x16xf32>
    "tpu.trace_stop"() : () -> ()
    %cst_31 = arith.constant dense<0xFF800000> : vector<8x16xf32>
    %53 = vector.multi_reduction <maximumf>, %52, %cst_31 [2] : vector<8x16x16xf32> to vector<8x16xf32>
    %54 = vector.shape_cast %53 : vector<8x16xf32> to vector<8x16x1xf32>
    %55 = vector.broadcast %54 : vector<8x16x1xf32> to vector<8x16x16xf32>
    %56 = arith.subf %52, %55 : vector<8x16x16xf32>
    %57 = math.exp %56 : vector<8x16x16xf32>
    %cst_32 = arith.constant dense<0.000000e+00> : vector<8x16xf32>
    %58 = vector.multi_reduction <add>, %57, %cst_32 [2] : vector<8x16x16xf32> to vector<8x16xf32>
    %59 = vector.shape_cast %58 : vector<8x16xf32> to vector<8x16x1xf32>
    %60 = tpu.reciprocal %59 {approx = true} : vector<8x16x1xf32> -> vector<8x16x1xf32>
    %61 = vector.broadcast %60 : vector<8x16x1xf32> to vector<8x16x16xf32>
    %62 = arith.mulf %57, %61 : vector<8x16x16xf32>
    %63 = arith.truncf %62 : vector<8x16x16xf32> to vector<8x16x16xbf16>
    "tpu.trace_start"() <{level = 10 : i32, message = "hqt,htd->hqd"}> : () -> ()
    %cst_33 = arith.constant dense<0.000000e+00> : vector<8x16x4xf32>
    %64 = tpu.matmul %63, %51, %cst_33 {dimension_numbers = #tpu.dot_dimension_numbers<[2], [1], [1], [2], [0, 0, 0, 1, 1, 2], [0], [0]>} : vector<8x16x16xbf16>, vector<8x16x4xbf16>, vector<8x16x4xf32> -> vector<8x16x4xf32>
    "tpu.trace_stop"() : () -> ()
    %65 = arith.truncf %64 : vector<8x16x4xf32> to vector<8x16x4xbf16>
    "tpu.trace_start"() <{level = 10 : i32, message = "hqd,hde->hqe"}> : () -> ()
    %cst_34 = arith.constant dense<0.000000e+00> : vector<8x16x32xf32>
    %66 = tpu.matmul %65, %17, %cst_34 {dimension_numbers = #tpu.dot_dimension_numbers<[2], [1], [1], [2], [0, 0, 0, 1, 1, 2], [0], [0]>} : vector<8x16x4xbf16>, vector<8x4x32xbf16>, vector<8x16x32xf32> -> vector<8x16x32xf32>
    "tpu.trace_stop"() : () -> ()
    %cst_35 = arith.constant dense<0.000000e+00> : vector<16x32xf32>
    %67 = vector.multi_reduction <add>, %66, %cst_35 [0] : vector<8x16x32xf32> to vector<16x32xf32>
    %68 = tpu.concatenate %42, %67 in 0 : vector<16x32xf32>, vector<16x32xf32> -> vector<32x32xf32>
    %c0_36 = arith.constant 0 : index
    %c0_37 = arith.constant 0 : index
    %69 = vector.load %arg9[%c0_36, %c0_37] : memref<1x32xf32, #tpu.memory_space<vmem>>, vector<1x32xf32>
    %70 = vector.broadcast %69 : vector<1x32xf32> to vector<32x32xf32>
    %71 = arith.addf %68, %70 : vector<32x32xf32>
    %72 = arith.addf %71, %13 : vector<32x32xf32>
    %cst_38 = arith.constant dense<0.000000e+00> : vector<32xf32>
    %73 = vector.multi_reduction <add>, %72, %cst_38 [1] : vector<32x32xf32> to vector<32xf32>
    %74 = vector.shape_cast %73 : vector<32xf32> to vector<32x1xf32>
    %cst_39 = arith.constant 3.200000e+01 : f32
    %75 = vector.broadcast %cst_39 : f32 to vector<32x1xf32>
    %76 = arith.divf %74, %75 : vector<32x1xf32>
    %77 = vector.broadcast %76 : vector<32x1xf32> to vector<32x32xf32>
    %78 = arith.subf %72, %77 : vector<32x32xf32>
    %79 = arith.mulf %78, %78 : vector<32x32xf32>
    %cst_40 = arith.constant dense<0.000000e+00> : vector<32xf32>
    %80 = vector.multi_reduction <add>, %79, %cst_40 [1] : vector<32x32xf32> to vector<32xf32>
    %81 = vector.shape_cast %80 : vector<32xf32> to vector<32x1xf32>
    %cst_41 = arith.constant 3.200000e+01 : f32
    %82 = vector.broadcast %cst_41 : f32 to vector<32x1xf32>
    %83 = arith.divf %81, %82 : vector<32x1xf32>
    %cst_42 = arith.constant 9.99999974E-6 : f32
    %84 = vector.broadcast %cst_42 : f32 to vector<32x1xf32>
    %85 = arith.addf %83, %84 : vector<32x1xf32>
    %86 = math.rsqrt %85 : vector<32x1xf32>
    %87 = vector.broadcast %86 : vector<32x1xf32> to vector<32x32xf32>
    %88 = arith.mulf %78, %87 : vector<32x32xf32>
    %c0_43 = arith.constant 0 : index
    %c0_44 = arith.constant 0 : index
    %89 = vector.load %arg10[%c0_43, %c0_44] : memref<1x32xf32, #tpu.memory_space<vmem>>, vector<1x32xf32>
    %90 = vector.broadcast %89 : vector<1x32xf32> to vector<32x32xf32>
    %91 = arith.mulf %88, %90 : vector<32x32xf32>
    %c0_45 = arith.constant 0 : index
    %c0_46 = arith.constant 0 : index
    %92 = vector.load %arg11[%c0_45, %c0_46] : memref<1x32xf32, #tpu.memory_space<vmem>>, vector<1x32xf32>
    %93 = vector.broadcast %92 : vector<1x32xf32> to vector<32x32xf32>
    %94 = arith.addf %91, %93 : vector<32x32xf32>
    %95 = arith.truncf %94 : vector<32x32xf32> to vector<32x32xbf16>
    %c0_47 = arith.constant 0 : index
    %c0_48 = arith.constant 0 : index
    %96 = vector.load %arg12[%c0_47, %c0_48] : memref<32x128xbf16, #tpu.memory_space<vmem>>, vector<32x128xbf16>
    %cst_49 = arith.constant dense<0.000000e+00> : vector<32x128xf32>
    %97 = tpu.matmul %95, %96, %cst_49 {dimension_numbers = #tpu.dot_dimension_numbers<[1], [0], [0], [1], [0, 0, 1, 1], [], []>} : vector<32x32xbf16>, vector<32x128xbf16>, vector<32x128xf32> -> vector<32x128xf32>
    %c0_50 = arith.constant 0 : index
    %c0_51 = arith.constant 0 : index
    %98 = vector.load %arg13[%c0_50, %c0_51] : memref<1x128xf32, #tpu.memory_space<vmem>>, vector<1x128xf32>
    %99 = vector.broadcast %98 : vector<1x128xf32> to vector<32x128xf32>
    %100 = arith.addf %97, %99 : vector<32x128xf32>
    %cst_52 = arith.constant 0.000000e+00 : f32
    %101 = vector.broadcast %cst_52 : f32 to vector<32x128xf32>
    %102 = arith.maximumf %100, %101 : vector<32x128xf32>
    %103 = arith.truncf %102 : vector<32x128xf32> to vector<32x128xbf16>
    %c0_53 = arith.constant 0 : index
    %c0_54 = arith.constant 0 : index
    %104 = vector.load %arg14[%c0_53, %c0_54] : memref<128x32xbf16, #tpu.memory_space<vmem>>, vector<128x32xbf16>
    %cst_55 = arith.constant dense<0.000000e+00> : vector<32x32xf32>
    %105 = tpu.matmul %103, %104, %cst_55 {dimension_numbers = #tpu.dot_dimension_numbers<[1], [0], [0], [1], [0, 0, 1, 1], [], []>} : vector<32x128xbf16>, vector<128x32xbf16>, vector<32x32xf32> -> vector<32x32xf32>
    %c0_56 = arith.constant 0 : index
    %c0_57 = arith.constant 0 : index
    %106 = vector.load %arg15[%c0_56, %c0_57] : memref<1x32xf32, #tpu.memory_space<vmem>>, vector<1x32xf32>
    %107 = vector.broadcast %106 : vector<1x32xf32> to vector<32x32xf32>
    %108 = arith.addf %105, %107 : vector<32x32xf32>
    %109 = arith.addf %94, %108 : vector<32x32xf32>
    %cst_58 = arith.constant dense<0.000000e+00> : vector<32xf32>
    %110 = vector.multi_reduction <add>, %109, %cst_58 [1] : vector<32x32xf32> to vector<32xf32>
    %111 = vector.shape_cast %110 : vector<32xf32> to vector<32x1xf32>
    %cst_59 = arith.constant 3.200000e+01 : f32
    %112 = vector.broadcast %cst_59 : f32 to vector<32x1xf32>
    %113 = arith.divf %111, %112 : vector<32x1xf32>
    %114 = vector.broadcast %113 : vector<32x1xf32> to vector<32x32xf32>
    %115 = arith.subf %109, %114 : vector<32x32xf32>
    %116 = arith.mulf %115, %115 : vector<32x32xf32>
    %cst_60 = arith.constant dense<0.000000e+00> : vector<32xf32>
    %117 = vector.multi_reduction <add>, %116, %cst_60 [1] : vector<32x32xf32> to vector<32xf32>
    %118 = vector.shape_cast %117 : vector<32xf32> to vector<32x1xf32>
    %cst_61 = arith.constant 3.200000e+01 : f32
    %119 = vector.broadcast %cst_61 : f32 to vector<32x1xf32>
    %120 = arith.divf %118, %119 : vector<32x1xf32>
    %cst_62 = arith.constant 9.99999974E-6 : f32
    %121 = vector.broadcast %cst_62 : f32 to vector<32x1xf32>
    %122 = arith.addf %120, %121 : vector<32x1xf32>
    %123 = math.rsqrt %122 : vector<32x1xf32>
    %124 = vector.broadcast %123 : vector<32x1xf32> to vector<32x32xf32>
    %125 = arith.mulf %115, %124 : vector<32x32xf32>
    %c0_63 = arith.constant 0 : index
    %c0_64 = arith.constant 0 : index
    %126 = vector.load %arg16[%c0_63, %c0_64] : memref<1x32xf32, #tpu.memory_space<vmem>>, vector<1x32xf32>
    %127 = vector.broadcast %126 : vector<1x32xf32> to vector<32x32xf32>
    %128 = arith.mulf %125, %127 : vector<32x32xf32>
    %c0_65 = arith.constant 0 : index
    %c0_66 = arith.constant 0 : index
    %129 = vector.load %arg17[%c0_65, %c0_66] : memref<1x32xf32, #tpu.memory_space<vmem>>, vector<1x32xf32>
    %130 = vector.broadcast %129 : vector<1x32xf32> to vector<32x32xf32>
    %131 = arith.addf %128, %130 : vector<32x32xf32>
    %c0_67 = arith.constant 0 : index
    %c0_68 = arith.constant 0 : index
    %132 = vector.load %arg18[%c0_67, %c0_68] : memref<32x32xf32, #tpu.memory_space<vmem>>, vector<32x32xf32>
    tpu.vector_store %arg18[%c0_67, %c0_68], %131 {strides = array<i32>} : memref<32x32xf32, #tpu.memory_space<vmem>>, vector<32x32xf32>,
    return
  }
  func.func @transform_0(%arg0: i32) -> (i32, i32) {
    %c0_i32 = arith.constant 0 : i32
    %c0_i32_0 = arith.constant 0 : i32
    return %arg0, %c0_i32 : i32, i32
  }
  func.func @transform_1(%arg0: i32) -> (i32, i32) {
    %c0_i32 = arith.constant 0 : i32
    %c0_i32_0 = arith.constant 0 : i32
    %c0_i32_1 = arith.constant 0 : i32
    return %c0_i32, %c0_i32_0 : i32, i32
  }
  func.func @transform_2(%arg0: i32) -> (i32, i32, i32) {
    %c0_i32 = arith.constant 0 : i32
    %c0_i32_0 = arith.constant 0 : i32
    %c0_i32_1 = arith.constant 0 : i32
    %c0_i32_2 = arith.constant 0 : i32
    return %c0_i32, %c0_i32_0, %c0_i32_1 : i32, i32, i32
  }
  func.func @transform_3(%arg0: i32) -> (i32, i32) {
    %c0_i32 = arith.constant 0 : i32
    %c0_i32_0 = arith.constant 0 : i32
    %c0_i32_1 = arith.constant 0 : i32
    return %c0_i32, %c0_i32_0 : i32, i32
  }
  func.func @transform_4(%arg0: i32) -> (i32, i32) {
    %c0_i32 = arith.constant 0 : i32
    %c0_i32_0 = arith.constant 0 : i32
    %c0_i32_1 = arith.constant 0 : i32
    return %c0_i32, %c0_i32_0 : i32, i32
  }
  func.func @transform_5(%arg0: i32) -> (i32, i32, i32) {
    %c0_i32 = arith.constant 0 : i32
    %c0_i32_0 = arith.constant 0 : i32
    %c0_i32_1 = arith.constant 0 : i32
    %c0_i32_2 = arith.constant 0 : i32
    return %c0_i32, %c0_i32_0, %c0_i32_1 : i32, i32, i32
  }
  func.func @transform_6(%arg0: i32) -> (i32, i32, i32) {
    %c0_i32 = arith.constant 0 : i32
    %c0_i32_0 = arith.constant 0 : i32
    %c0_i32_1 = arith.constant 0 : i32
    %c0_i32_2 = arith.constant 0 : i32
    return %c0_i32, %c0_i32_0, %c0_i32_1 : i32, i32, i32
  }
  func.func @transform_7(%arg0: i32) -> (i32, i32, i32) {
    %c0_i32 = arith.constant 0 : i32
    %c0_i32_0 = arith.constant 0 : i32
    %c0_i32_1 = arith.constant 0 : i32
    %c0_i32_2 = arith.constant 0 : i32
    return %c0_i32, %c0_i32_0, %c0_i32_1 : i32, i32, i32
  }
  func.func @transform_8(%arg0: i32) -> (i32, i32) {
    %c0_i32 = arith.constant 0 : i32
    %c0_i32_0 = arith.constant 0 : i32
    %c0_i32_1 = arith.constant 0 : i32
    return %c0_i32, %c0_i32_0 : i32, i32
  }
  func.func @transform_9(%arg0: i32) -> (i32, i32) {
    %c0_i32 = arith.constant 0 : i32
    %c0_i32_0 = arith.constant 0 : i32
    %c0_i32_1 = arith.constant 0 : i32
    return %c0_i32, %c0_i32_0 : i32, i32
  }
  func.func @transform_10(%arg0: i32) -> (i32, i32) {
    %c0_i32 = arith.constant 0 : i32
    %c0_i32_0 = arith.constant 0 : i32
    %c0_i32_1 = arith.constant 0 : i32
    return %c0_i32, %c0_i32_0 : i32, i32
  }
  func.func @transform_11(%arg0: i32) -> (i32, i32) {
    %c0_i32 = arith.constant 0 : i32
    %c0_i32_0 = arith.constant 0 : i32
    %c0_i32_1 = arith.constant 0 : i32
    return %c0_i32, %c0_i32_0 : i32, i32
  }
  func.func @transform_12(%arg0: i32) -> (i32, i32) {
    %c0_i32 = arith.constant 0 : i32
    %c0_i32_0 = arith.constant 0 : i32
    %c0_i32_1 = arith.constant 0 : i32
    return %c0_i32, %c0_i32_0 : i32, i32
  }
  func.func @transform_13(%arg0: i32) -> (i32, i32) {
    %c0_i32 = arith.constant 0 : i32
    %c0_i32_0 = arith.constant 0 : i32
    %c0_i32_1 = arith.constant 0 : i32
    return %c0_i32, %c0_i32_0 : i32, i32
  }
  func.func @transform_14(%arg0: i32) -> (i32, i32) {
    %c0_i32 = arith.constant 0 : i32
    %c0_i32_0 = arith.constant 0 : i32
    %c0_i32_1 = arith.constant 0 : i32
    return %c0_i32, %c0_i32_0 : i32, i32
  }
  func.func @transform_15(%arg0: i32) -> (i32, i32) {
    %c0_i32 = arith.constant 0 : i32
    %c0_i32_0 = arith.constant 0 : i32
    %c0_i32_1 = arith.constant 0 : i32
    return %c0_i32, %c0_i32_0 : i32, i32
  }
  func.func @transform_16(%arg0: i32) -> (i32, i32) {
    %c0_i32 = arith.constant 0 : i32
    %c0_i32_0 = arith.constant 0 : i32
    %c0_i32_1 = arith.constant 0 : i32
    return %c0_i32, %c0_i32_0 : i32, i32
  }
  func.func @transform_17(%arg0: i32) -> (i32, i32) {
    %c0_i32 = arith.constant 0 : i32
    %c0_i32_0 = arith.constant 0 : i32
    return %arg0, %c0_i32 : i32, i32
  }
}

</mosaic_0001>

<llo_original>
// kernel: tpu_custom_call.1
$region0: #{tpu_custom_call.1}
  #allocation0 [shape = 'u32[]', space=smem, size = 0x4, offset = 0x4, fixed_abs, tag = 'smem constant byte address 0x4 - core index']
  #allocation1 [shape = 'u32[144,128]{1,0:T(1,128)}', space=vmem, size = 0x12000, scoped, tag = 'internal scratch']
  %s0 = inlined_call_operand.vmem [shape: bf16[32,16], index: 0, kind: input, shape index: {}]
  %s1 = inlined_call_operand.vmem [shape: f32[16,32], index: 1, kind: input, shape index: {}]
  %s2 = inlined_call_operand.vmem [shape: bf16[8,16,4], index: 2, kind: input, shape index: {}]
  %s3 = inlined_call_operand.vmem [shape: bf16[16,32], index: 3, kind: input, shape index: {}]
  %s4 = inlined_call_operand.vmem [shape: f32[1,32], index: 4, kind: input, shape index: {}]
  %s5 = inlined_call_operand.vmem [shape: bf16[8,4,32], index: 5, kind: input, shape index: {}]
  %s6 = inlined_call_operand.vmem [shape: bf16[8,4,32], index: 6, kind: input, shape index: {}]
  %s7 = inlined_call_operand.vmem [shape: bf16[8,4,32], index: 7, kind: input, shape index: {}]
  %s8 = inlined_call_operand.vmem [shape: f32[1,32], index: 8, kind: input, shape index: {}]
  %s9 = inlined_call_operand.vmem [shape: f32[1,32], index: 9, kind: input, shape index: {}]
  %s10 = inlined_call_operand.vmem [shape: f32[1,32], index: 10, kind: input, shape index: {}]
  %s11 = inlined_call_operand.vmem [shape: bf16[32,128], index: 11, kind: input, shape index: {}]
  %s12 = inlined_call_operand.vmem [shape: f32[1,128], index: 12, kind: input, shape index: {}]
  %s13 = inlined_call_operand.vmem [shape: bf16[128,32], index: 13, kind: input, shape index: {}]
  %s14 = inlined_call_operand.vmem [shape: f32[1,32], index: 14, kind: input, shape index: {}]
  %s15 = inlined_call_operand.vmem [shape: f32[1,32], index: 15, kind: input, shape index: {}]
  %s16 = inlined_call_operand.vmem [shape: f32[1,32], index: 16, kind: input, shape index: {}]
  %s17 = inlined_call_operand.hbm [shape: f32[32,32], index: 17, kind: output, shape index: {}]
  %s18 = sld [smem:[#allocation0]]
  $region78: #{tpu_custom_call.1} parent=0
    _
  %s20 = ssub.s32 1, %s18
  %s21 = scalar_select 0, %s20, %s18
  $region1: #{tpu_custom_call.1} parent=0
    #allocation2 [shape = 'u8[16384]{0}', space=vmem, size = 0x4000, scoped, tag = 'output window, operand 0, single buffered']
    #allocation3 [shape = 's32[1]{0}', space=sflag, size = 0x4, scoped, tag = 'scoped memory for tpu_custom_call.1']
    %22 = vsyncpa [#allocation3], 0
    // Predicated region
    $region2: #{tpu_custom_call.1} parent=1 // pred_check
      _
    $region3: #{tpu_custom_call.1} parent=1 // pred_check_branch
      %24 = sbr.rel (0) target = $region5
    $region4: #{tpu_custom_call.1} parent=1 // pred_region
      _
    $region5: #{tpu_custom_call.1} parent=1 // pred_fallthru
      _
    // Predicated region
    $region6: #{tpu_custom_call.1} parent=1 // pred_check
      _
    $region7: #{tpu_custom_call.1} parent=1 // pred_check_branch
      %26 = sbr.rel (0) target = $region9
    $region8: #{tpu_custom_call.1} parent=1 // pred_region
      _
    $region9: #{tpu_custom_call.1} parent=1 // pred_fallthru
      _
    // Predicated region
    $region10: #{tpu_custom_call.1} parent=1 // pred_check
      _
    $region11: #{tpu_custom_call.1} parent=1 // pred_check_branch
      %28 = sbr.rel (0) target = $region13
    $region12: #{tpu_custom_call.1} parent=1 // pred_region
      _
    $region13: #{tpu_custom_call.1} parent=1 // pred_fallthru
      _
    // Predicated region
    $region14: #{tpu_custom_call.1} parent=1 // pred_check
      _
    $region15: #{tpu_custom_call.1} parent=1 // pred_check_branch
      %30 = sbr.rel (0) target = $region17
    $region16: #{tpu_custom_call.1} parent=1 // pred_region
      _
    $region17: #{tpu_custom_call.1} parent=1 // pred_fallthru
      _
    // Predicated region
    $region18: #{tpu_custom_call.1} parent=1 // pred_check
      _
    $region19: #{tpu_custom_call.1} parent=1 // pred_check_branch
      %32 = sbr.rel (0) target = $region21
    $region20: #{tpu_custom_call.1} parent=1 // pred_region
      _
    $region21: #{tpu_custom_call.1} parent=1 // pred_fallthru
      _
    // Predicated region
    $region22: #{tpu_custom_call.1} parent=1 // pred_check
      _
    $region23: #{tpu_custom_call.1} parent=1 // pred_check_branch
      %34 = sbr.rel (0) target = $region25
    $region24: #{tpu_custom_call.1} parent=1 // pred_region
      _
    $region25: #{tpu_custom_call.1} parent=1 // pred_fallthru
      _
    // Predicated region
    $region26: #{tpu_custom_call.1} parent=1 // pred_check
      _
    $region27: #{tpu_custom_call.1} parent=1 // pred_check_branch
      %36 = sbr.rel (0) target = $region29
    $region28: #{tpu_custom_call.1} parent=1 // pred_region
      _
    $region29: #{tpu_custom_call.1} parent=1 // pred_fallthru
      _
    // Predicated region
    $region30: #{tpu_custom_call.1} parent=1 // pred_check
      _
    $region31: #{tpu_custom_call.1} parent=1 // pred_check_branch
      %38 = sbr.rel (0) target = $region33
    $region32: #{tpu_custom_call.1} parent=1 // pred_region
      _
    $region33: #{tpu_custom_call.1} parent=1 // pred_fallthru
      _
    // Predicated region
    $region34: #{tpu_custom_call.1} parent=1 // pred_check
      _
    $region35: #{tpu_custom_call.1} parent=1 // pred_check_branch
      %40 = sbr.rel (0) target = $region37
    $region36: #{tpu_custom_call.1} parent=1 // pred_region
      _
    $region37: #{tpu_custom_call.1} parent=1 // pred_fallthru
      _
    // Predicated region
    $region38: #{tpu_custom_call.1} parent=1 // pred_check
      _
    $region39: #{tpu_custom_call.1} parent=1 // pred_check_branch
      %42 = sbr.rel (0) target = $region41
    $region40: #{tpu_custom_call.1} parent=1 // pred_region
      _
    $region41: #{tpu_custom_call.1} parent=1 // pred_fallthru
      _
    // Predicated region
    $region42: #{tpu_custom_call.1} parent=1 // pred_check
      _
    $region43: #{tpu_custom_call.1} parent=1 // pred_check_branch
      %44 = sbr.rel (0) target = $region45
    $region44: #{tpu_custom_call.1} parent=1 // pred_region
      _
    $region45: #{tpu_custom_call.1} parent=1 // pred_fallthru
      _
    // Predicated region
    $region46: #{tpu_custom_call.1} parent=1 // pred_check
      _
    $region47: #{tpu_custom_call.1} parent=1 // pred_check_branch
      %46 = sbr.rel (0) target = $region49
    $region48: #{tpu_custom_call.1} parent=1 // pred_region
      _
    $region49: #{tpu_custom_call.1} parent=1 // pred_fallthru
      _
    // Predicated region
    $region50: #{tpu_custom_call.1} parent=1 // pred_check
      _
    $region51: #{tpu_custom_call.1} parent=1 // pred_check_branch
      %48 = sbr.rel (0) target = $region53
    $region52: #{tpu_custom_call.1} parent=1 // pred_region
      _
    $region53: #{tpu_custom_call.1} parent=1 // pred_fallthru
      _
    // Predicated region
    $region54: #{tpu_custom_call.1} parent=1 // pred_check
      _
    $region55: #{tpu_custom_call.1} parent=1 // pred_check_branch
      %50 = sbr.rel (0) target = $region57
    $region56: #{tpu_custom_call.1} parent=1 // pred_region
      _
    $region57: #{tpu_custom_call.1} parent=1 // pred_fallthru
      _
    // Predicated region
    $region58: #{tpu_custom_call.1} parent=1 // pred_check
      _
    $region59: #{tpu_custom_call.1} parent=1 // pred_check_branch
      %52 = sbr.rel (0) target = $region61
    $region60: #{tpu_custom_call.1} parent=1 // pred_region
      _
    $region61: #{tpu_custom_call.1} parent=1 // pred_fallthru
      _
    // Predicated region
    $region62: #{tpu_custom_call.1} parent=1 // pred_check
      _
    $region63: #{tpu_custom_call.1} parent=1 // pred_check_branch
      %54 = sbr.rel (0) target = $region65
    $region64: #{tpu_custom_call.1} parent=1 // pred_region
      _
    $region65: #{tpu_custom_call.1} parent=1 // pred_fallthru
      _
    // Predicated region
    $region66: #{tpu_custom_call.1} parent=1 // pred_check
      _
    $region67: #{tpu_custom_call.1} parent=1 // pred_check_branch
      %56 = sbr.rel (0) target = $region69
    $region68: #{tpu_custom_call.1} parent=1 // pred_region
      _
    $region69: #{tpu_custom_call.1} parent=1 // pred_fallthru
      _
    %v58 = vld [vmem:[%s0] sm:$0xf]
    %v59 = vld [vmem:[%s0 + $0x4] sm:$0xf]
    %v60 = vld [vmem:[%s0 + $0x8] sm:$0xf]
    %v61 = vld [vmem:[%s0 + $0xc] sm:$0xf]
    %v62 = vld [vmem:[%s3] sm:$0xf]
    %v63 = vld [vmem:[%s3 + $0x4] sm:$0xf]
    %v64 = vld [vmem:[%s4] sm:$0x1]
    %v66 = vlaneseq
    %v67 = vshrl.u32 %v66, 7
    %v68 = vsub.s32 0, %v67
    %v69 = vrot.slane %v64, %v68
    %v75 = vunpack.c.l.b16 %v58
    %v76 = vunpack.c.l.b16 %v59
    %v77 = vunpack.c.l.b16 %v60
    %v78 = vunpack.c.l.b16 %v61
    %v79 = vpack.c.b16 %v76, %v75
    %v80 = vpack.c.b16 %v78, %v77
    %v83 = vunpack.c.l.b16 %v62
    %v84 = vunpack.c.l.b16 %v63
    %v85 = vpack.c.b16 %v84, %v83
    %vm87 = vcmask 130048
    %v89 = vsel %vm87, %v79, 0
    %v92 = vsel %vm87, %v80, 0
    %94 = vmatprep.subr.bf16.mxu0 0
    %95 = vmatpush1.bf16.msra.mxu0 0
    %96 = vmatprep.subr.bf16.mxu0 0
    %97 = vmatpush1.bf16.msra.mxu0 0
    %98 = vmatprep.subr.bf16.mxu0 0
    %99 = vmatpush1.bf16.msra.mxu0 0
    %100 = vmatprep.subr.bf16.mxu0 0
    %101 = vmatpush1.bf16.msra.mxu0 0
    %102 = vmatprep.subr.bf16.mxu0 0
    %103 = vmatpush1.bf16.msra.mxu0 0
    %104 = vmatprep.subr.bf16.mxu0 0
    %105 = vmatpush1.bf16.msra.mxu0 0
    %106 = vmatprep.subr.bf16.mxu0 0
    %107 = vmatpush1.bf16.msra.mxu0 0
    %108 = vmatprep.subr.bf16.mxu0 0
    %109 = vmatpush1.bf16.msra.mxu0 %v85
    %110 = vmatprep.subr.bf16.mxu0 0
    %111 = vmatpush2.bf16.msra.mxu0 0
    %112 = vmatprep.subr.bf16.mxu0 0
    %113 = vmatpush2.bf16.msra.mxu0 0
    %114 = vmatprep.subr.bf16.mxu0 0
    %115 = vmatpush2.bf16.msra.mxu0 0
    %116 = vmatprep.subr.bf16.mxu0 0
    %117 = vmatpush2.bf16.msra.mxu0 0
    %118 = vmatprep.subr.bf16.mxu0 0
    %119 = vmatpush2.bf16.msra.mxu0 0
    %120 = vmatprep.subr.bf16.mxu0 0
    %121 = vmatpush2.bf16.msra.mxu0 0
    %122 = vmatprep.subr.bf16.mxu0 0
    %123 = vmatpush2.bf16.msra.mxu0 0
    %124 = vmatprep.subr.bf16.mxu0 0
    %125 = vmatpush2.bf16.msra.mxu0 0
    %126 = vmatprep.mubr.bf16.mxu0 0
    %127 = vmatmul.mubr.bf16.gmra.mxu0 %v89
    %v128 = vpop.f32.mrf.mxu0
    %v129 = vadd.f32 %v69, %v128
    %v130 = vpop.f32.mrf.mxu0
    %v131 = vpop.f32.mrf.mxu0
    %v132 = vadd.f32 %v69, %v131
    %v133 = vpop.f32.mrf.mxu0
    %134 = vmatprep.mubr.bf16.mxu0 0
    %135 = vmatmul.mubr.bf16.gmra.mxu0 %v92
    %v136 = vpop.f32.mrf.mxu0
    %v137 = vadd.f32 %v69, %v136
    %v138 = vpop.f32.mrf.mxu0
    %v139 = vpop.f32.mrf.mxu0
    %v140 = vadd.f32 %v69, %v139
    %v141 = vpop.f32.mrf.mxu0
    %142 = vdwg.mxu0
    %v143 = vmax.f32 %v129, 0.0
    %v144 = vmax.f32 %v132, 0.0
    %v145 = vmax.f32 %v137, 0.0
    %v146 = vmax.f32 %v140, 0.0
    %v147 = vld [vmem:[%s1] sm:$0xff]
    %v148 = vld [vmem:[%s1 + $0x8] sm:$0xff]
    %v149 = vadd.f32 %v143, %v147
    %v150 = vadd.f32 %v144, %v148
    %v151 = vadd.f32 %v145, %v147
    %v152 = vadd.f32 %v146, %v148
    %v153 = vld [vmem:[%s2] sm:$0xf]
    %v154 = vld [vmem:[%s2 + $0x4] sm:$0xf]
    %v155 = vld [vmem:[%s2 + $0x8] sm:$0xf]
    %v156 = vld [vmem:[%s2 + $0xc] sm:$0xf]
    %v157 = vld [vmem:[%s2 + $0x10] sm:$0xf]
    %v158 = vld [vmem:[%s2 + $0x14] sm:$0xf]
    %v159 = vld [vmem:[%s2 + $0x18] sm:$0xf]
    %v160 = vld [vmem:[%s2 + $0x1c] sm:$0xf]
    %v161 = vld [vmem:[%s2 + $0x20] sm:$0xf]
    %v162 = vld [vmem:[%s2 + $0x24] sm:$0xf]
    %v163 = vld [vmem:[%s2 + $0x28] sm:$0xf]
    %v164 = vld [vmem:[%s2 + $0x2c] sm:$0xf]
    %v165 = vld [vmem:[%s2 + $0x30] sm:$0xf]
    %v166 = vld [vmem:[%s2 + $0x34] sm:$0xf]
    %v167 = vld [vmem:[%s2 + $0x38] sm:$0xf]
    %v168 = vld [vmem:[%s2 + $0x3c] sm:$0xf]
    %v169 = vld [vmem:[%s5] sm:$0x3]
    %v170 = vld [vmem:[%s5 + $0x2] sm:$0x3]
    %v171 = vld [vmem:[%s5 + $0x4] sm:$0x3]
    %v172 = vld [vmem:[%s5 + $0x6] sm:$0x3]
    %v173 = vld [vmem:[%s5 + $0x8] sm:$0x3]
    %v174 = vld [vmem:[%s5 + $0xa] sm:$0x3]
    %v175 = vld [vmem:[%s5 + $0xc] sm:$0x3]
    %v176 = vld [vmem:[%s5 + $0xe] sm:$0x3]
    %v177 = vld [vmem:[%s6] sm:$0x3]
    %v178 = vld [vmem:[%s6 + $0x2] sm:$0x3]
    %v179 = vld [vmem:[%s6 + $0x4] sm:$0x3]
    %v180 = vld [vmem:[%s6 + $0x6] sm:$0x3]
    %v181 = vld [vmem:[%s6 + $0x8] sm:$0x3]
    %v182 = vld [vmem:[%s6 + $0xa] sm:$0x3]
    %v183 = vld [vmem:[%s6 + $0xc] sm:$0x3]
    %v184 = vld [vmem:[%s6 + $0xe] sm:$0x3]
    %v185 = vld [vmem:[%s7] sm:$0x3]
    %v186 = vld [vmem:[%s7 + $0x2] sm:$0x3]
    %v187 = vld [vmem:[%s7 + $0x4] sm:$0x3]
    %v188 = vld [vmem:[%s7 + $0x6] sm:$0x3]
    %v189 = vld [vmem:[%s7 + $0x8] sm:$0x3]
    %v190 = vld [vmem:[%s7 + $0xa] sm:$0x3]
    %v191 = vld [vmem:[%s7 + $0xc] sm:$0x3]
    %v192 = vld [vmem:[%s7 + $0xe] sm:$0x3]
    %v193 = vpack.c.bf16 %v150, %v149
    %vm194 = vcmask 261120
    %v196 = vsel %vm194, %v193, 0
    %v199 = vsel %vm194, %v169, 0
    %201 = vmatprep.subr.bf16.mxu0 0
    %202 = vmatpush1.bf16.xpose.msra.mxu0 0
    %203 = vmatprep.subr.bf16.mxu0 0
    %204 = vmatpush1.bf16.xpose.msra.mxu0 0
    %205 = vmatprep.subr.bf16.mxu0 0
    %206 = vmatpush1.bf16.xpose.msra.mxu0 0
    %207 = vmatprep.subr.bf16.mxu0 0
    %208 = vmatpush1.bf16.xpose.msra.mxu0 0
    %209 = vmatprep.subr.bf16.mxu0 0
    %210 = vmatpush1.bf16.xpose.msra.mxu0 0
    %211 = vmatprep.subr.bf16.mxu0 0
    %212 = vmatpush1.bf16.xpose.msra.mxu0 0
    %213 = vmatprep.subr.bf16.mxu0 0
    %214 = vmatpush1.bf16.xpose.msra.mxu0 0
    %215 = vmatprep.subr.bf16.mxu0 0
    %216 = vmatpush1.bf16.xpose.msra.mxu0 %v199
    %217 = vmatprep.subr.bf16.mxu0 0
    %218 = vmatpush2.bf16.xpose.msra.mxu0 0
    %219 = vmatprep.subr.bf16.mxu0 0
    %220 = vmatpush2.bf16.xpose.msra.mxu0 0
    %221 = vmatprep.subr.bf16.mxu0 0
    %222 = vmatpush2.bf16.xpose.msra.mxu0 0
    %223 = vmatprep.subr.bf16.mxu0 0
    %224 = vmatpush2.bf16.xpose.msra.mxu0 0
    %225 = vmatprep.subr.bf16.mxu0 0
    %226 = vmatpush2.bf16.xpose.msra.mxu0 0
    %227 = vmatprep.subr.bf16.mxu0 0
    %228 = vmatpush2.bf16.xpose.msra.mxu0 0
    %229 = vmatprep.subr.bf16.mxu0 0
    %230 = vmatpush2.bf16.xpose.msra.mxu0 0
    %231 = vmatprep.subr.bf16.mxu0 0
    %232 = vmatpush2.bf16.xpose.msra.mxu0 0
    %233 = vmatprep.mubr.bf16.mxu0 0
    %234 = vmatmul.mubr.bf16.gmra.mxu0 %v196
    %v235 = vpop.f32.mrf.mxu0
    %v236 = vadd.f32 0.0, %v235
    %v237 = vpop.f32.mrf.mxu0
    %v238 = vpop.f32.mrf.mxu0
    %v239 = vadd.f32 0.0, %v238
    %v240 = vpop.f32.mrf.mxu0
    %241 = vdwg.mxu0
    %v243 = vsel %vm194, %v170, 0
    %245 = vmatprep.subr.bf16.mxu0 0
    %246 = vmatpush1.bf16.xpose.msra.mxu0 0
    %247 = vmatprep.subr.bf16.mxu0 0
    %248 = vmatpush1.bf16.xpose.msra.mxu0 0
    %249 = vmatprep.subr.bf16.mxu0 0
    %250 = vmatpush1.bf16.xpose.msra.mxu0 0
    %251 = vmatprep.subr.bf16.mxu0 0
    %252 = vmatpush1.bf16.xpose.msra.mxu0 0
    %253 = vmatprep.subr.bf16.mxu0 0
    %254 = vmatpush1.bf16.xpose.msra.mxu0 0
    %255 = vmatprep.subr.bf16.mxu0 0
    %256 = vmatpush1.bf16.xpose.msra.mxu0 0
    %257 = vmatprep.subr.bf16.mxu0 0
    %258 = vmatpush1.bf16.xpose.msra.mxu0 0
    %259 = vmatprep.subr.bf16.mxu0 0
    %260 = vmatpush1.bf16.xpose.msra.mxu0 %v243
    %261 = vmatprep.subr.bf16.mxu0 0
    %262 = vmatpush2.bf16.xpose.msra.mxu0 0
    %263 = vmatprep.subr.bf16.mxu0 0
    %264 = vmatpush2.bf16.xpose.msra.mxu0 0
    %265 = vmatprep.subr.bf16.mxu0 0
    %266 = vmatpush2.bf16.xpose.msra.mxu0 0
    %267 = vmatprep.subr.bf16.mxu0 0
    %268 = vmatpush2.bf16.xpose.msra.mxu0 0
    %269 = vmatprep.subr.bf16.mxu0 0
    %270 = vmatpush2.bf16.xpose.msra.mxu0 0
    %271 = vmatprep.subr.bf16.mxu0 0
    %272 = vmatpush2.bf16.xpose.msra.mxu0 0
    %273 = vmatprep.subr.bf16.mxu0 0
    %274 = vmatpush2.bf16.xpose.msra.mxu0 0
    %275 = vmatprep.subr.bf16.mxu0 0
    %276 = vmatpush2.bf16.xpose.msra.mxu0 0
    %277 = vmatprep.mubr.bf16.mxu0 0
    %278 = vmatmul.mubr.bf16.gmra.mxu0 %v196
    %v279 = vpop.f32.mrf.mxu0
    %v280 = vadd.f32 0.0, %v279
    %v281 = vpop.f32.mrf.mxu0
    %v282 = vpop.f32.mrf.mxu0
    %v283 = vadd.f32 0.0, %v282
    %v284 = vpop.f32.mrf.mxu0
    %285 = vdwg.mxu0
    %v287 = vsel %vm194, %v171, 0
    %289 = vmatprep.subr.bf16.mxu0 0
    %290 = vmatpush1.bf16.xpose.msra.mxu0 0
    %291 = vmatprep.subr.bf16.mxu0 0
    %292 = vmatpush1.bf16.xpose.msra.mxu0 0
    %293 = vmatprep.subr.bf16.mxu0 0
    %294 = vmatpush1.bf16.xpose.msra.mxu0 0
    %295 = vmatprep.subr.bf16.mxu0 0
    %296 = vmatpush1.bf16.xpose.msra.mxu0 0
    %297 = vmatprep.subr.bf16.mxu0 0
    %298 = vmatpush1.bf16.xpose.msra.mxu0 0
    %299 = vmatprep.subr.bf16.mxu0 0
    %300 = vmatpush1.bf16.xpose.msra.mxu0 0
    %301 = vmatprep.subr.bf16.mxu0 0
    %302 = vmatpush1.bf16.xpose.msra.mxu0 0
    %303 = vmatprep.subr.bf16.mxu0 0
    %304 = vmatpush1.bf16.xpose.msra.mxu0 %v287
    %305 = vmatprep.subr.bf16.mxu0 0
    %306 = vmatpush2.bf16.xpose.msra.mxu0 0
    %307 = vmatprep.subr.bf16.mxu0 0
    %308 = vmatpush2.bf16.xpose.msra.mxu0 0
    %309 = vmatprep.subr.bf16.mxu0 0
    %310 = vmatpush2.bf16.xpose.msra.mxu0 0
    %311 = vmatprep.subr.bf16.mxu0 0
    %312 = vmatpush2.bf16.xpose.msra.mxu0 0
    %313 = vmatprep.subr.bf16.mxu0 0
    %314 = vmatpush2.bf16.xpose.msra.mxu0 0
    %315 = vmatprep.subr.bf16.mxu0 0
    %316 = vmatpush2.bf16.xpose.msra.mxu0 0
    %317 = vmatprep.subr.bf16.mxu0 0
    %318 = vmatpush2.bf16.xpose.msra.mxu0 0
    %319 = vmatprep.subr.bf16.mxu0 0
    %320 = vmatpush2.bf16.xpose.msra.mxu0 0
    %321 = vmatprep.mubr.bf16.mxu0 0
    %322 = vmatmul.mubr.bf16.gmra.mxu0 %v196
    %v323 = vpop.f32.mrf.mxu0
    %v324 = vadd.f32 0.0, %v323
    %v325 = vpop.f32.mrf.mxu0
    %v326 = vpop.f32.mrf.mxu0
    %v327 = vadd.f32 0.0, %v326
    %v328 = vpop.f32.mrf.mxu0
    %329 = vdwg.mxu0
    %v331 = vsel %vm194, %v172, 0
    %333 = vmatprep.subr.bf16.mxu0 0
    %334 = vmatpush1.bf16.xpose.msra.mxu0 0
    %335 = vmatprep.subr.bf16.mxu0 0
    %336 = vmatpush1.bf16.xpose.msra.mxu0 0
    %337 = vmatprep.subr.bf16.mxu0 0
    %338 = vmatpush1.bf16.xpose.msra.mxu0 0
    %339 = vmatprep.subr.bf16.mxu0 0
    %340 = vmatpush1.bf16.xpose.msra.mxu0 0
    %341 = vmatprep.subr.bf16.mxu0 0
    %342 = vmatpush1.bf16.xpose.msra.mxu0 0
    %343 = vmatprep.subr.bf16.mxu0 0
    %344 = vmatpush1.bf16.xpose.msra.mxu0 0
    %345 = vmatprep.subr.bf16.mxu0 0
    %346 = vmatpush1.bf16.xpose.msra.mxu0 0
    %347 = vmatprep.subr.bf16.mxu0 0
    %348 = vmatpush1.bf16.xpose.msra.mxu0 %v331
    %349 = vmatprep.subr.bf16.mxu0 0
    %350 = vmatpush2.bf16.xpose.msra.mxu0 0
    %351 = vmatprep.subr.bf16.mxu0 0
    %352 = vmatpush2.bf16.xpose.msra.mxu0 0
    %353 = vmatprep.subr.bf16.mxu0 0
    %354 = vmatpush2.bf16.xpose.msra.mxu0 0
    %355 = vmatprep.subr.bf16.mxu0 0
    %356 = vmatpush2.bf16.xpose.msra.mxu0 0
    %357 = vmatprep.subr.bf16.mxu0 0
    %358 = vmatpush2.bf16.xpose.msra.mxu0 0
    %359 = vmatprep.subr.bf16.mxu0 0
    %360 = vmatpush2.bf16.xpose.msra.mxu0 0
    %361 = vmatprep.subr.bf16.mxu0 0
    %362 = vmatpush2.bf16.xpose.msra.mxu0 0
    %363 = vmatprep.subr.bf16.mxu0 0
    %364 = vmatpush2.bf16.xpose.msra.mxu0 0
    %365 = vmatprep.mubr.bf16.mxu0 0
    %366 = vmatmul.mubr.bf16.gmra.mxu0 %v196
    %v367 = vpop.f32.mrf.mxu0
    %v368 = vadd.f32 0.0, %v367
    %v369 = vpop.f32.mrf.mxu0
    %v370 = vpop.f32.mrf.mxu0
    %v371 = vadd.f32 0.0, %v370
    %v372 = vpop.f32.mrf.mxu0
    %373 = vdwg.mxu0
    %v375 = vsel %vm194, %v173, 0
    %377 = vmatprep.subr.bf16.mxu0 0
    %378 = vmatpush1.bf16.xpose.msra.mxu0 0
    %379 = vmatprep.subr.bf16.mxu0 0
    %380 = vmatpush1.bf16.xpose.msra.mxu0 0
    %381 = vmatprep.subr.bf16.mxu0 0
    %382 = vmatpush1.bf16.xpose.msra.mxu0 0
    %383 = vmatprep.subr.bf16.mxu0 0
    %384 = vmatpush1.bf16.xpose.msra.mxu0 0
    %385 = vmatprep.subr.bf16.mxu0 0
    %386 = vmatpush1.bf16.xpose.msra.mxu0 0
    %387 = vmatprep.subr.bf16.mxu0 0
    %388 = vmatpush1.bf16.xpose.msra.mxu0 0
    %389 = vmatprep.subr.bf16.mxu0 0
    %390 = vmatpush1.bf16.xpose.msra.mxu0 0
    %391 = vmatprep.subr.bf16.mxu0 0
    %392 = vmatpush1.bf16.xpose.msra.mxu0 %v375
    %393 = vmatprep.subr.bf16.mxu0 0
    %394 = vmatpush2.bf16.xpose.msra.mxu0 0
    %395 = vmatprep.subr.bf16.mxu0 0
    %396 = vmatpush2.bf16.xpose.msra.mxu0 0
    %397 = vmatprep.subr.bf16.mxu0 0
    %398 = vmatpush2.bf16.xpose.msra.mxu0 0
    %399 = vmatprep.subr.bf16.mxu0 0
    %400 = vmatpush2.bf16.xpose.msra.mxu0 0
    %401 = vmatprep.subr.bf16.mxu0 0
    %402 = vmatpush2.bf16.xpose.msra.mxu0 0
    %403 = vmatprep.subr.bf16.mxu0 0
    %404 = vmatpush2.bf16.xpose.msra.mxu0 0
    %405 = vmatprep.subr.bf16.mxu0 0
    %406 = vmatpush2.bf16.xpose.msra.mxu0 0
    %407 = vmatprep.subr.bf16.mxu0 0
    %408 = vmatpush2.bf16.xpose.msra.mxu0 0
    %409 = vmatprep.mubr.bf16.mxu0 0
    %410 = vmatmul.mubr.bf16.gmra.mxu0 %v196
    %v411 = vpop.f32.mrf.mxu0
    %v412 = vadd.f32 0.0, %v411
    %v413 = vpop.f32.mrf.mxu0
    %v414 = vpop.f32.mrf.mxu0
    %v415 = vadd.f32 0.0, %v414
    %v416 = vpop.f32.mrf.mxu0
    %417 = vdwg.mxu0
    %v419 = vsel %vm194, %v174, 0
    %421 = vmatprep.subr.bf16.mxu0 0
    %422 = vmatpush1.bf16.xpose.msra.mxu0 0
    %423 = vmatprep.subr.bf16.mxu0 0
    %424 = vmatpush1.bf16.xpose.msra.mxu0 0
    %425 = vmatprep.subr.bf16.mxu0 0
    %426 = vmatpush1.bf16.xpose.msra.mxu0 0
    %427 = vmatprep.subr.bf16.mxu0 0
    %428 = vmatpush1.bf16.xpose.msra.mxu0 0
    %429 = vmatprep.subr.bf16.mxu0 0
    %430 = vmatpush1.bf16.xpose.msra.mxu0 0
    %431 = vmatprep.subr.bf16.mxu0 0
    %432 = vmatpush1.bf16.xpose.msra.mxu0 0
    %433 = vmatprep.subr.bf16.mxu0 0
    %434 = vmatpush1.bf16.xpose.msra.mxu0 0
    %435 = vmatprep.subr.bf16.mxu0 0
    %436 = vmatpush1.bf16.xpose.msra.mxu0 %v419
    %437 = vmatprep.subr.bf16.mxu0 0
    %438 = vmatpush2.bf16.xpose.msra.mxu0 0
    %439 = vmatprep.subr.bf16.mxu0 0
    %440 = vmatpush2.bf16.xpose.msra.mxu0 0
    %441 = vmatprep.subr.bf16.mxu0 0
    %442 = vmatpush2.bf16.xpose.msra.mxu0 0
    %443 = vmatprep.subr.bf16.mxu0 0
    %444 = vmatpush2.bf16.xpose.msra.mxu0 0
    %445 = vmatprep.subr.bf16.mxu0 0
    %446 = vmatpush2.bf16.xpose.msra.mxu0 0
    %447 = vmatprep.subr.bf16.mxu0 0
    %448 = vmatpush2.bf16.xpose.msra.mxu0 0
    %449 = vmatprep.subr.bf16.mxu0 0
    %450 = vmatpush2.bf16.xpose.msra.mxu0 0
    %451 = vmatprep.subr.bf16.mxu0 0
    %452 = vmatpush2.bf16.xpose.msra.mxu0 0
    %453 = vmatprep.mubr.bf16.mxu0 0
    %454 = vmatmul.mubr.bf16.gmra.mxu0 %v196
    %v455 = vpop.f32.mrf.mxu0
    %v456 = vadd.f32 0.0, %v455
    %v457 = vpop.f32.mrf.mxu0
    %v458 = vpop.f32.mrf.mxu0
    %v459 = vadd.f32 0.0, %v458
    %v460 = vpop.f32.mrf.mxu0
    %461 = vdwg.mxu0
    %v463 = vsel %vm194, %v175, 0
    %465 = vmatprep.subr.bf16.mxu0 0
    %466 = vmatpush1.bf16.xpose.msra.mxu0 0
    %467 = vmatprep.subr.bf16.mxu0 0
    %468 = vmatpush1.bf16.xpose.msra.mxu0 0
    %469 = vmatprep.subr.bf16.mxu0 0
    %470 = vmatpush1.bf16.xpose.msra.mxu0 0
    %471 = vmatprep.subr.bf16.mxu0 0
    %472 = vmatpush1.bf16.xpose.msra.mxu0 0
    %473 = vmatprep.subr.bf16.mxu0 0
    %474 = vmatpush1.bf16.xpose.msra.mxu0 0
    %475 = vmatprep.subr.bf16.mxu0 0
    %476 = vmatpush1.bf16.xpose.msra.mxu0 0
    %477 = vmatprep.subr.bf16.mxu0 0
    %478 = vmatpush1.bf16.xpose.msra.mxu0 0
    %479 = vmatprep.subr.bf16.mxu0 0
    %480 = vmatpush1.bf16.xpose.msra.mxu0 %v463
    %481 = vmatprep.subr.bf16.mxu0 0
    %482 = vmatpush2.bf16.xpose.msra.mxu0 0
    %483 = vmatprep.subr.bf16.mxu0 0
    %484 = vmatpush2.bf16.xpose.msra.mxu0 0
    %485 = vmatprep.subr.bf16.mxu0 0
    %486 = vmatpush2.bf16.xpose.msra.mxu0 0
    %487 = vmatprep.subr.bf16.mxu0 0
    %488 = vmatpush2.bf16.xpose.msra.mxu0 0
    %489 = vmatprep.subr.bf16.mxu0 0
    %490 = vmatpush2.bf16.xpose.msra.mxu0 0
    %491 = vmatprep.subr.bf16.mxu0 0
    %492 = vmatpush2.bf16.xpose.msra.mxu0 0
    %493 = vmatprep.subr.bf16.mxu0 0
    %494 = vmatpush2.bf16.xpose.msra.mxu0 0
    %495 = vmatprep.subr.bf16.mxu0 0
    %496 = vmatpush2.bf16.xpose.msra.mxu0 0
    %497 = vmatprep.mubr.bf16.mxu0 0
    %498 = vmatmul.mubr.bf16.gmra.mxu0 %v196
    %v499 = vpop.f32.mrf.mxu0
    %v500 = vadd.f32 0.0, %v499
    %v501 = vpop.f32.mrf.mxu0
    %v502 = vpop.f32.mrf.mxu0
    %v503 = vadd.f32 0.0, %v502
    %v504 = vpop.f32.mrf.mxu0
    %505 = vdwg.mxu0
    %v507 = vsel %vm194, %v176, 0
    %509 = vmatprep.subr.bf16.mxu0 0
    %510 = vmatpush1.bf16.xpose.msra.mxu0 0
    %511 = vmatprep.subr.bf16.mxu0 0
    %512 = vmatpush1.bf16.xpose.msra.mxu0 0
    %513 = vmatprep.subr.bf16.mxu0 0
    %514 = vmatpush1.bf16.xpose.msra.mxu0 0
    %515 = vmatprep.subr.bf16.mxu0 0
    %516 = vmatpush1.bf16.xpose.msra.mxu0 0
    %517 = vmatprep.subr.bf16.mxu0 0
    %518 = vmatpush1.bf16.xpose.msra.mxu0 0
    %519 = vmatprep.subr.bf16.mxu0 0
    %520 = vmatpush1.bf16.xpose.msra.mxu0 0
    %521 = vmatprep.subr.bf16.mxu0 0
    %522 = vmatpush1.bf16.xpose.msra.mxu0 0
    %523 = vmatprep.subr.bf16.mxu0 0
    %524 = vmatpush1.bf16.xpose.msra.mxu0 %v507
    %525 = vmatprep.subr.bf16.mxu0 0
    %526 = vmatpush2.bf16.xpose.msra.mxu0 0
    %527 = vmatprep.subr.bf16.mxu0 0
    %528 = vmatpush2.bf16.xpose.msra.mxu0 0
    %529 = vmatprep.subr.bf16.mxu0 0
    %530 = vmatpush2.bf16.xpose.msra.mxu0 0
    %531 = vmatprep.subr.bf16.mxu0 0
    %532 = vmatpush2.bf16.xpose.msra.mxu0 0
    %533 = vmatprep.subr.bf16.mxu0 0
    %534 = vmatpush2.bf16.xpose.msra.mxu0 0
    %535 = vmatprep.subr.bf16.mxu0 0
    %536 = vmatpush2.bf16.xpose.msra.mxu0 0
    %537 = vmatprep.subr.bf16.mxu0 0
    %538 = vmatpush2.bf16.xpose.msra.mxu0 0
    %539 = vmatprep.subr.bf16.mxu0 0
    %540 = vmatpush2.bf16.xpose.msra.mxu0 0
    %541 = vmatprep.mubr.bf16.mxu0 0
    %542 = vmatmul.mubr.bf16.gmra.mxu0 %v196
    %v543 = vpop.f32.mrf.mxu0
    %v544 = vadd.f32 0.0, %v543
    %v545 = vpop.f32.mrf.mxu0
    %v546 = vpop.f32.mrf.mxu0
    %v547 = vadd.f32 0.0, %v546
    %v548 = vpop.f32.mrf.mxu0
    %549 = vdwg.mxu0
    %v550 = vpack.c.bf16 %v239, %v236
    %v551 = vpack.c.bf16 %v283, %v280
    %v552 = vpack.c.bf16 %v327, %v324
    %v553 = vpack.c.bf16 %v371, %v368
    %v554 = vpack.c.bf16 %v415, %v412
    %v555 = vpack.c.bf16 %v459, %v456
    %v556 = vpack.c.bf16 %v503, %v500
    %v557 = vpack.c.bf16 %v547, %v544
    %v559 = vsel %vm194, %v177, 0
    %561 = vmatprep.subr.bf16.mxu0 0
    %562 = vmatpush1.bf16.xpose.msra.mxu0 0
    %563 = vmatprep.subr.bf16.mxu0 0
    %564 = vmatpush1.bf16.xpose.msra.mxu0 0
    %565 = vmatprep.subr.bf16.mxu0 0
    %566 = vmatpush1.bf16.xpose.msra.mxu0 0
    %567 = vmatprep.subr.bf16.mxu0 0
    %568 = vmatpush1.bf16.xpose.msra.mxu0 0
    %569 = vmatprep.subr.bf16.mxu0 0
    %570 = vmatpush1.bf16.xpose.msra.mxu0 0
    %571 = vmatprep.subr.bf16.mxu0 0
    %572 = vmatpush1.bf16.xpose.msra.mxu0 0
    %573 = vmatprep.subr.bf16.mxu0 0
    %574 = vmatpush1.bf16.xpose.msra.mxu0 0
    %575 = vmatprep.subr.bf16.mxu0 0
    %576 = vmatpush1.bf16.xpose.msra.mxu0 %v559
    %577 = vmatprep.subr.bf16.mxu0 0
    %578 = vmatpush2.bf16.xpose.msra.mxu0 0
    %579 = vmatprep.subr.bf16.mxu0 0
    %580 = vmatpush2.bf16.xpose.msra.mxu0 0
    %581 = vmatprep.subr.bf16.mxu0 0
    %582 = vmatpush2.bf16.xpose.msra.mxu0 0
    %583 = vmatprep.subr.bf16.mxu0 0
    %584 = vmatpush2.bf16.xpose.msra.mxu0 0
    %585 = vmatprep.subr.bf16.mxu0 0
    %586 = vmatpush2.bf16.xpose.msra.mxu0 0
    %587 = vmatprep.subr.bf16.mxu0 0
    %588 = vmatpush2.bf16.xpose.msra.mxu0 0
    %589 = vmatprep.subr.bf16.mxu0 0
    %590 = vmatpush2.bf16.xpose.msra.mxu0 0
    %591 = vmatprep.subr.bf16.mxu0 0
    %592 = vmatpush2.bf16.xpose.msra.mxu0 0
    %593 = vmatprep.mubr.bf16.mxu0 0
    %594 = vmatmul.mubr.bf16.gmra.mxu0 %v196
    %v595 = vpop.f32.mrf.mxu0
    %v596 = vadd.f32 0.0, %v595
    %v597 = vpop.f32.mrf.mxu0
    %v598 = vpop.f32.mrf.mxu0
    %v599 = vadd.f32 0.0, %v598
    %v600 = vpop.f32.mrf.mxu0
    %601 = vdwg.mxu0
    %v603 = vsel %vm194, %v178, 0
    %605 = vmatprep.subr.bf16.mxu0 0
    %606 = vmatpush1.bf16.xpose.msra.mxu0 0
    %607 = vmatprep.subr.bf16.mxu0 0
    %608 = vmatpush1.bf16.xpose.msra.mxu0 0
    %609 = vmatprep.subr.bf16.mxu0 0
    %610 = vmatpush1.bf16.xpose.msra.mxu0 0
    %611 = vmatprep.subr.bf16.mxu0 0
    %612 = vmatpush1.bf16.xpose.msra.mxu0 0
    %613 = vmatprep.subr.bf16.mxu0 0
    %614 = vmatpush1.bf16.xpose.msra.mxu0 0
    %615 = vmatprep.subr.bf16.mxu0 0
    %616 = vmatpush1.bf16.xpose.msra.mxu0 0
    %617 = vmatprep.subr.bf16.mxu0 0
    %618 = vmatpush1.bf16.xpose.msra.mxu0 0
    %619 = vmatprep.subr.bf16.mxu0 0
    %620 = vmatpush1.bf16.xpose.msra.mxu0 %v603
    %621 = vmatprep.subr.bf16.mxu0 0
    %622 = vmatpush2.bf16.xpose.msra.mxu0 0
    %623 = vmatprep.subr.bf16.mxu0 0
    %624 = vmatpush2.bf16.xpose.msra.mxu0 0
    %625 = vmatprep.subr.bf16.mxu0 0
    %626 = vmatpush2.bf16.xpose.msra.mxu0 0
    %627 = vmatprep.subr.bf16.mxu0 0
    %628 = vmatpush2.bf16.xpose.msra.mxu0 0
    %629 = vmatprep.subr.bf16.mxu0 0
    %630 = vmatpush2.bf16.xpose.msra.mxu0 0
    %631 = vmatprep.subr.bf16.mxu0 0
    %632 = vmatpush2.bf16.xpose.msra.mxu0 0
    %633 = vmatprep.subr.bf16.mxu0 0
    %634 = vmatpush2.bf16.xpose.msra.mxu0 0
    %635 = vmatprep.subr.bf16.mxu0 0
    %636 = vmatpush2.bf16.xpose.msra.mxu0 0
    %637 = vmatprep.mubr.bf16.mxu0 0
    %638 = vmatmul.mubr.bf16.gmra.mxu0 %v196
    %v639 = vpop.f32.mrf.mxu0
    %v640 = vadd.f32 0.0, %v639
    %v641 = vpop.f32.mrf.mxu0
    %v642 = vpop.f32.mrf.mxu0
    %v643 = vadd.f32 0.0, %v642
    %v644 = vpop.f32.mrf.mxu0
    %645 = vdwg.mxu0
    %v647 = vsel %vm194, %v179, 0
    %649 = vmatprep.subr.bf16.mxu0 0
    %650 = vmatpush1.bf16.xpose.msra.mxu0 0
    %651 = vmatprep.subr.bf16.mxu0 0
    %652 = vmatpush1.bf16.xpose.msra.mxu0 0
    %653 = vmatprep.subr.bf16.mxu0 0
    %654 = vmatpush1.bf16.xpose.msra.mxu0 0
    %655 = vmatprep.subr.bf16.mxu0 0
    %656 = vmatpush1.bf16.xpose.msra.mxu0 0
    %657 = vmatprep.subr.bf16.mxu0 0
    %658 = vmatpush1.bf16.xpose.msra.mxu0 0
    %659 = vmatprep.subr.bf16.mxu0 0
    %660 = vmatpush1.bf16.xpose.msra.mxu0 0
    %661 = vmatprep.subr.bf16.mxu0 0
    %662 = vmatpush1.bf16.xpose.msra.mxu0 0
    %663 = vmatprep.subr.bf16.mxu0 0
    %664 = vmatpush1.bf16.xpose.msra.mxu0 %v647
    %665 = vmatprep.subr.bf16.mxu0 0
    %666 = vmatpush2.bf16.xpose.msra.mxu0 0
    %667 = vmatprep.subr.bf16.mxu0 0
    %668 = vmatpush2.bf16.xpose.msra.mxu0 0
    %669 = vmatprep.subr.bf16.mxu0 0
    %670 = vmatpush2.bf16.xpose.msra.mxu0 0
    %671 = vmatprep.subr.bf16.mxu0 0
    %672 = vmatpush2.bf16.xpose.msra.mxu0 0
    %673 = vmatprep.subr.bf16.mxu0 0
    %674 = vmatpush2.bf16.xpose.msra.mxu0 0
    %675 = vmatprep.subr.bf16.mxu0 0
    %676 = vmatpush2.bf16.xpose.msra.mxu0 0
    %677 = vmatprep.subr.bf16.mxu0 0
    %678 = vmatpush2.bf16.xpose.msra.mxu0 0
    %679 = vmatprep.subr.bf16.mxu0 0
    %680 = vmatpush2.bf16.xpose.msra.mxu0 0
    %681 = vmatprep.mubr.bf16.mxu0 0
    %682 = vmatmul.mubr.bf16.gmra.mxu0 %v196
    %v683 = vpop.f32.mrf.mxu0
    %v684 = vadd.f32 0.0, %v683
    %v685 = vpop.f32.mrf.mxu0
    %v686 = vpop.f32.mrf.mxu0
    %v687 = vadd.f32 0.0, %v686
    %v688 = vpop.f32.mrf.mxu0
    %689 = vdwg.mxu0
    %v691 = vsel %vm194, %v180, 0
    %693 = vmatprep.subr.bf16.mxu0 0
    %694 = vmatpush1.bf16.xpose.msra.mxu0 0
    %695 = vmatprep.subr.bf16.mxu0 0
    %696 = vmatpush1.bf16.xpose.msra.mxu0 0
    %697 = vmatprep.subr.bf16.mxu0 0
    %698 = vmatpush1.bf16.xpose.msra.mxu0 0
    %699 = vmatprep.subr.bf16.mxu0 0
    %700 = vmatpush1.bf16.xpose.msra.mxu0 0
    %701 = vmatprep.subr.bf16.mxu0 0
    %702 = vmatpush1.bf16.xpose.msra.mxu0 0
    %703 = vmatprep.subr.bf16.mxu0 0
    %704 = vmatpush1.bf16.xpose.msra.mxu0 0
    %705 = vmatprep.subr.bf16.mxu0 0
    %706 = vmatpush1.bf16.xpose.msra.mxu0 0
    %707 = vmatprep.subr.bf16.mxu0 0
    %708 = vmatpush1.bf16.xpose.msra.mxu0 %v691
    %709 = vmatprep.subr.bf16.mxu0 0
    %710 = vmatpush2.bf16.xpose.msra.mxu0 0
    %711 = vmatprep.subr.bf16.mxu0 0
    %712 = vmatpush2.bf16.xpose.msra.mxu0 0
    %713 = vmatprep.subr.bf16.mxu0 0
    %714 = vmatpush2.bf16.xpose.msra.mxu0 0
    %715 = vmatprep.subr.bf16.mxu0 0
    %716 = vmatpush2.bf16.xpose.msra.mxu0 0
    %717 = vmatprep.subr.bf16.mxu0 0
    %718 = vmatpush2.bf16.xpose.msra.mxu0 0
    %719 = vmatprep.subr.bf16.mxu0 0
    %720 = vmatpush2.bf16.xpose.msra.mxu0 0
    %721 = vmatprep.subr.bf16.mxu0 0
    %722 = vmatpush2.bf16.xpose.msra.mxu0 0
    %723 = vmatprep.subr.bf16.mxu0 0
    %724 = vmatpush2.bf16.xpose.msra.mxu0 0
    %725 = vmatprep.mubr.bf16.mxu0 0
    %726 = vmatmul.mubr.bf16.gmra.mxu0 %v196
    %v727 = vpop.f32.mrf.mxu0
    %v728 = vadd.f32 0.0, %v727
    %v729 = vpop.f32.mrf.mxu0
    %v730 = vpop.f32.mrf.mxu0
    %v731 = vadd.f32 0.0, %v730
    %v732 = vpop.f32.mrf.mxu0
    %733 = vdwg.mxu0
    %v735 = vsel %vm194, %v181, 0
    %737 = vmatprep.subr.bf16.mxu0 0
    %738 = vmatpush1.bf16.xpose.msra.mxu0 0
    %739 = vmatprep.subr.bf16.mxu0 0
    %740 = vmatpush1.bf16.xpose.msra.mxu0 0
    %741 = vmatprep.subr.bf16.mxu0 0
    %742 = vmatpush1.bf16.xpose.msra.mxu0 0
    %743 = vmatprep.subr.bf16.mxu0 0
    %744 = vmatpush1.bf16.xpose.msra.mxu0 0
    %745 = vmatprep.subr.bf16.mxu0 0
    %746 = vmatpush1.bf16.xpose.msra.mxu0 0
    %747 = vmatprep.subr.bf16.mxu0 0
    %748 = vmatpush1.bf16.xpose.msra.mxu0 0
    %749 = vmatprep.subr.bf16.mxu0 0
    %750 = vmatpush1.bf16.xpose.msra.mxu0 0
    %751 = vmatprep.subr.bf16.mxu0 0
    %752 = vmatpush1.bf16.xpose.msra.mxu0 %v735
    %753 = vmatprep.subr.bf16.mxu0 0
    %754 = vmatpush2.bf16.xpose.msra.mxu0 0
    %755 = vmatprep.subr.bf16.mxu0 0
    %756 = vmatpush2.bf16.xpose.msra.mxu0 0
    %757 = vmatprep.subr.bf16.mxu0 0
    %758 = vmatpush2.bf16.xpose.msra.mxu0 0
    %759 = vmatprep.subr.bf16.mxu0 0
    %760 = vmatpush2.bf16.xpose.msra.mxu0 0
    %761 = vmatprep.subr.bf16.mxu0 0
    %762 = vmatpush2.bf16.xpose.msra.mxu0 0
    %763 = vmatprep.subr.bf16.mxu0 0
    %764 = vmatpush2.bf16.xpose.msra.mxu0 0
    %765 = vmatprep.subr.bf16.mxu0 0
    %766 = vmatpush2.bf16.xpose.msra.mxu0 0
    %767 = vmatprep.subr.bf16.mxu0 0
    %768 = vmatpush2.bf16.xpose.msra.mxu0 0
    %769 = vmatprep.mubr.bf16.mxu0 0
    %770 = vmatmul.mubr.bf16.gmra.mxu0 %v196
    %v771 = vpop.f32.mrf.mxu0
    %v772 = vadd.f32 0.0, %v771
    %v773 = vpop.f32.mrf.mxu0
    %v774 = vpop.f32.mrf.mxu0
    %v775 = vadd.f32 0.0, %v774
    %v776 = vpop.f32.mrf.mxu0
    %777 = vdwg.mxu0
    %v779 = vsel %vm194, %v182, 0
    %781 = vmatprep.subr.bf16.mxu0 0
    %782 = vmatpush1.bf16.xpose.msra.mxu0 0
    %783 = vmatprep.subr.bf16.mxu0 0
    %784 = vmatpush1.bf16.xpose.msra.mxu0 0
    %785 = vmatprep.subr.bf16.mxu0 0
    %786 = vmatpush1.bf16.xpose.msra.mxu0 0
    %787 = vmatprep.subr.bf16.mxu0 0
    %788 = vmatpush1.bf16.xpose.msra.mxu0 0
    %789 = vmatprep.subr.bf16.mxu0 0
    %790 = vmatpush1.bf16.xpose.msra.mxu0 0
    %791 = vmatprep.subr.bf16.mxu0 0
    %792 = vmatpush1.bf16.xpose.msra.mxu0 0
    %793 = vmatprep.subr.bf16.mxu0 0
    %794 = vmatpush1.bf16.xpose.msra.mxu0 0
    %795 = vmatprep.subr.bf16.mxu0 0
    %796 = vmatpush1.bf16.xpose.msra.mxu0 %v779
    %797 = vmatprep.subr.bf16.mxu0 0
    %798 = vmatpush2.bf16.xpose.msra.mxu0 0
    %799 = vmatprep.subr.bf16.mxu0 0
    %800 = vmatpush2.bf16.xpose.msra.mxu0 0
    %801 = vmatprep.subr.bf16.mxu0 0
    %802 = vmatpush2.bf16.xpose.msra.mxu0 0
    %803 = vmatprep.subr.bf16.mxu0 0
    %804 = vmatpush2.bf16.xpose.msra.mxu0 0
    %805 = vmatprep.subr.bf16.mxu0 0
    %806 = vmatpush2.bf16.xpose.msra.mxu0 0
    %807 = vmatprep.subr.bf16.mxu0 0
    %808 = vmatpush2.bf16.xpose.msra.mxu0 0
    %809 = vmatprep.subr.bf16.mxu0 0
    %810 = vmatpush2.bf16.xpose.msra.mxu0 0
    %811 = vmatprep.subr.bf16.mxu0 0
    %812 = vmatpush2.bf16.xpose.msra.mxu0 0
    %813 = vmatprep.mubr.bf16.mxu0 0
    %814 = vmatmul.mubr.bf16.gmra.mxu0 %v196
    %v815 = vpop.f32.mrf.mxu0
    %v816 = vadd.f32 0.0, %v815
    %v817 = vpop.f32.mrf.mxu0
    %v818 = vpop.f32.mrf.mxu0
    %v819 = vadd.f32 0.0, %v818
    %v820 = vpop.f32.mrf.mxu0
    %821 = vdwg.mxu0
    %v823 = vsel %vm194, %v183, 0
    %825 = vmatprep.subr.bf16.mxu0 0
    %826 = vmatpush1.bf16.xpose.msra.mxu0 0
    %827 = vmatprep.subr.bf16.mxu0 0
    %828 = vmatpush1.bf16.xpose.msra.mxu0 0
    %829 = vmatprep.subr.bf16.mxu0 0
    %830 = vmatpush1.bf16.xpose.msra.mxu0 0
    %831 = vmatprep.subr.bf16.mxu0 0
    %832 = vmatpush1.bf16.xpose.msra.mxu0 0
    %833 = vmatprep.subr.bf16.mxu0 0
    %834 = vmatpush1.bf16.xpose.msra.mxu0 0
    %835 = vmatprep.subr.bf16.mxu0 0
    %836 = vmatpush1.bf16.xpose.msra.mxu0 0
    %837 = vmatprep.subr.bf16.mxu0 0
    %838 = vmatpush1.bf16.xpose.msra.mxu0 0
    %839 = vmatprep.subr.bf16.mxu0 0
    %840 = vmatpush1.bf16.xpose.msra.mxu0 %v823
    %841 = vmatprep.subr.bf16.mxu0 0
    %842 = vmatpush2.bf16.xpose.msra.mxu0 0
    %843 = vmatprep.subr.bf16.mxu0 0
    %844 = vmatpush2.bf16.xpose.msra.mxu0 0
    %845 = vmatprep.subr.bf16.mxu0 0
    %846 = vmatpush2.bf16.xpose.msra.mxu0 0
    %847 = vmatprep.subr.bf16.mxu0 0
    %848 = vmatpush2.bf16.xpose.msra.mxu0 0
    %849 = vmatprep.subr.bf16.mxu0 0
    %850 = vmatpush2.bf16.xpose.msra.mxu0 0
    %851 = vmatprep.subr.bf16.mxu0 0
    %852 = vmatpush2.bf16.xpose.msra.mxu0 0
    %853 = vmatprep.subr.bf16.mxu0 0
    %854 = vmatpush2.bf16.xpose.msra.mxu0 0
    %855 = vmatprep.subr.bf16.mxu0 0
    %856 = vmatpush2.bf16.xpose.msra.mxu0 0
    %857 = vmatprep.mubr.bf16.mxu0 0
    %858 = vmatmul.mubr.bf16.gmra.mxu0 %v196
    %v859 = vpop.f32.mrf.mxu0
    %v860 = vadd.f32 0.0, %v859
    %v861 = vpop.f32.mrf.mxu0
    %v862 = vpop.f32.mrf.mxu0
    %v863 = vadd.f32 0.0, %v862
    %v864 = vpop.f32.mrf.mxu0
    %865 = vdwg.mxu0
    %v867 = vsel %vm194, %v184, 0
    %869 = vmatprep.subr.bf16.mxu0 0
    %870 = vmatpush1.bf16.xpose.msra.mxu0 0
    %871 = vmatprep.subr.bf16.mxu0 0
    %872 = vmatpush1.bf16.xpose.msra.mxu0 0
    %873 = vmatprep.subr.bf16.mxu0 0
    %874 = vmatpush1.bf16.xpose.msra.mxu0 0
    %875 = vmatprep.subr.bf16.mxu0 0
    %876 = vmatpush1.bf16.xpose.msra.mxu0 0
    %877 = vmatprep.subr.bf16.mxu0 0
    %878 = vmatpush1.bf16.xpose.msra.mxu0 0
    %879 = vmatprep.subr.bf16.mxu0 0
    %880 = vmatpush1.bf16.xpose.msra.mxu0 0
    %881 = vmatprep.subr.bf16.mxu0 0
    %882 = vmatpush1.bf16.xpose.msra.mxu0 0
    %883 = vmatprep.subr.bf16.mxu0 0
    %884 = vmatpush1.bf16.xpose.msra.mxu0 %v867
    %885 = vmatprep.subr.bf16.mxu0 0
    %886 = vmatpush2.bf16.xpose.msra.mxu0 0
    %887 = vmatprep.subr.bf16.mxu0 0
    %888 = vmatpush2.bf16.xpose.msra.mxu0 0
    %889 = vmatprep.subr.bf16.mxu0 0
    %890 = vmatpush2.bf16.xpose.msra.mxu0 0
    %891 = vmatprep.subr.bf16.mxu0 0
    %892 = vmatpush2.bf16.xpose.msra.mxu0 0
    %893 = vmatprep.subr.bf16.mxu0 0
    %894 = vmatpush2.bf16.xpose.msra.mxu0 0
    %895 = vmatprep.subr.bf16.mxu0 0
    %896 = vmatpush2.bf16.xpose.msra.mxu0 0
    %897 = vmatprep.subr.bf16.mxu0 0
    %898 = vmatpush2.bf16.xpose.msra.mxu0 0
    %899 = vmatprep.subr.bf16.mxu0 0
    %900 = vmatpush2.bf16.xpose.msra.mxu0 0
    %901 = vmatprep.mubr.bf16.mxu0 0
    %902 = vmatmul.mubr.bf16.gmra.mxu0 %v196
    %v903 = vpop.f32.mrf.mxu0
    %v904 = vadd.f32 0.0, %v903
    %v905 = vpop.f32.mrf.mxu0
    %v906 = vpop.f32.mrf.mxu0
    %v907 = vadd.f32 0.0, %v906
    %v908 = vpop.f32.mrf.mxu0
    %909 = vdwg.mxu0
    %v910 = vpack.c.bf16 %v599, %v596
    %v911 = vpack.c.bf16 %v643, %v640
    %v912 = vpack.c.bf16 %v687, %v684
    %v913 = vpack.c.bf16 %v731, %v728
    %v914 = vpack.c.bf16 %v775, %v772
    %v915 = vpack.c.bf16 %v819, %v816
    %v916 = vpack.c.bf16 %v863, %v860
    %v917 = vpack.c.bf16 %v907, %v904
    %v920 = vunpack.c.l.b16 %v153
    %v921 = vunpack.c.l.b16 %v154
    %v922 = vpack.c.b16 %v921, %v920
    %vm923 = vcmask 31744
    %v925 = vsel %vm923, %v922, 0
    %v928 = vsel %vm923, %v550, 0
    %930 = vmatprep.subr.bf16.mxu0 0
    %931 = vmatpush1.bf16.xpose.msra.mxu0 0
    %932 = vmatprep.subr.bf16.mxu0 0
    %933 = vmatpush1.bf16.xpose.msra.mxu0 0
    %934 = vmatprep.subr.bf16.mxu0 0
    %935 = vmatpush1.bf16.xpose.msra.mxu0 0
    %936 = vmatprep.subr.bf16.mxu0 0
    %937 = vmatpush1.bf16.xpose.msra.mxu0 0
    %938 = vmatprep.subr.bf16.mxu0 0
    %939 = vmatpush1.bf16.xpose.msra.mxu0 0
    %940 = vmatprep.subr.bf16.mxu0 0
    %941 = vmatpush1.bf16.xpose.msra.mxu0 0
    %942 = vmatprep.subr.bf16.mxu0 0
    %943 = vmatpush1.bf16.xpose.msra.mxu0 0
    %944 = vmatprep.subr.bf16.mxu0 0
    %945 = vmatpush1.bf16.xpose.msra.mxu0 %v928
    %946 = vmatprep.subr.bf16.mxu0 0
    %947 = vmatpush2.bf16.xpose.msra.mxu0 0
    %948 = vmatprep.subr.bf16.mxu0 0
    %949 = vmatpush2.bf16.xpose.msra.mxu0 0
    %950 = vmatprep.subr.bf16.mxu0 0
    %951 = vmatpush2.bf16.xpose.msra.mxu0 0
    %952 = vmatprep.subr.bf16.mxu0 0
    %953 = vmatpush2.bf16.xpose.msra.mxu0 0
    %954 = vmatprep.subr.bf16.mxu0 0
    %955 = vmatpush2.bf16.xpose.msra.mxu0 0
    %956 = vmatprep.subr.bf16.mxu0 0
    %957 = vmatpush2.bf16.xpose.msra.mxu0 0
    %958 = vmatprep.subr.bf16.mxu0 0
    %959 = vmatpush2.bf16.xpose.msra.mxu0 0
    %960 = vmatprep.subr.bf16.mxu0 0
    %961 = vmatpush2.bf16.xpose.msra.mxu0 0
    %962 = vmatprep.mubr.bf16.mxu0 0
    %963 = vmatmul.mubr.bf16.gmra.mxu0 %v925
    %v964 = vpop.f32.mrf.mxu0
    %v965 = vadd.f32 0.0, %v964
    %v966 = vpop.f32.mrf.mxu0
    %v967 = vpop.f32.mrf.mxu0
    %v968 = vadd.f32 0.0, %v967
    %v969 = vpop.f32.mrf.mxu0
    %970 = vdwg.mxu0
    %v973 = vunpack.c.l.b16 %v155
    %v974 = vunpack.c.l.b16 %v156
    %v975 = vpack.c.b16 %v974, %v973
    %v977 = vsel %vm923, %v975, 0
    %v980 = vsel %vm923, %v551, 0
    %982 = vmatprep.subr.bf16.mxu0 0
    %983 = vmatpush1.bf16.xpose.msra.mxu0 0
    %984 = vmatprep.subr.bf16.mxu0 0
    %985 = vmatpush1.bf16.xpose.msra.mxu0 0
    %986 = vmatprep.subr.bf16.mxu0 0
    %987 = vmatpush1.bf16.xpose.msra.mxu0 0
    %988 = vmatprep.subr.bf16.mxu0 0
    %989 = vmatpush1.bf16.xpose.msra.mxu0 0
    %990 = vmatprep.subr.bf16.mxu0 0
    %991 = vmatpush1.bf16.xpose.msra.mxu0 0
    %992 = vmatprep.subr.bf16.mxu0 0
    %993 = vmatpush1.bf16.xpose.msra.mxu0 0
    %994 = vmatprep.subr.bf16.mxu0 0
    %995 = vmatpush1.bf16.xpose.msra.mxu0 0
    %996 = vmatprep.subr.bf16.mxu0 0
    %997 = vmatpush1.bf16.xpose.msra.mxu0 %v980
    %998 = vmatprep.subr.bf16.mxu0 0
    %999 = vmatpush2.bf16.xpose.msra.mxu0 0
    %1000 = vmatprep.subr.bf16.mxu0 0
    %1001 = vmatpush2.bf16.xpose.msra.mxu0 0
    %1002 = vmatprep.subr.bf16.mxu0 0
    %1003 = vmatpush2.bf16.xpose.msra.mxu0 0
    %1004 = vmatprep.subr.bf16.mxu0 0
    %1005 = vmatpush2.bf16.xpose.msra.mxu0 0
    %1006 = vmatprep.subr.bf16.mxu0 0
    %1007 = vmatpush2.bf16.xpose.msra.mxu0 0
    %1008 = vmatprep.subr.bf16.mxu0 0
    %1009 = vmatpush2.bf16.xpose.msra.mxu0 0
    %1010 = vmatprep.subr.bf16.mxu0 0
    %1011 = vmatpush2.bf16.xpose.msra.mxu0 0
    %1012 = vmatprep.subr.bf16.mxu0 0
    %1013 = vmatpush2.bf16.xpose.msra.mxu0 0
    %1014 = vmatprep.mubr.bf16.mxu0 0
    %1015 = vmatmul.mubr.bf16.gmra.mxu0 %v977
    %v1016 = vpop.f32.mrf.mxu0
    %v1017 = vadd.f32 0.0, %v1016
    %v1018 = vpop.f32.mrf.mxu0
    %v1019 = vpop.f32.mrf.mxu0
    %v1020 = vadd.f32 0.0, %v1019
    %v1021 = vpop.f32.mrf.mxu0
    %1022 = vdwg.mxu0
    %v1025 = vunpack.c.l.b16 %v157
    %v1026 = vunpack.c.l.b16 %v158
    %v1027 = vpack.c.b16 %v1026, %v1025
    %v1029 = vsel %vm923, %v1027, 0
    %v1032 = vsel %vm923, %v552, 0
    %1034 = vmatprep.subr.bf16.mxu0 0
    %1035 = vmatpush1.bf16.xpose.msra.mxu0 0
    %1036 = vmatprep.subr.bf16.mxu0 0
    %1037 = vmatpush1.bf16.xpose.msra.mxu0 0
    %1038 = vmatprep.subr.bf16.mxu0 0
    %1039 = vmatpush1.bf16.xpose.msra.mxu0 0
    %1040 = vmatprep.subr.bf16.mxu0 0
    %1041 = vmatpush1.bf16.xpose.msra.mxu0 0
    %1042 = vmatprep.subr.bf16.mxu0 0
    %1043 = vmatpush1.bf16.xpose.msra.mxu0 0
    %1044 = vmatprep.subr.bf16.mxu0 0
    %1045 = vmatpush1.bf16.xpose.msra.mxu0 0
    %1046 = vmatprep.subr.bf16.mxu0 0
    %1047 = vmatpush1.bf16.xpose.msra.mxu0 0
    %1048 = vmatprep.subr.bf16.mxu0 0
    %1049 = vmatpush1.bf16.xpose.msra.mxu0 %v1032
    %1050 = vmatprep.subr.bf16.mxu0 0
    %1051 = vmatpush2.bf16.xpose.msra.mxu0 0
    %1052 = vmatprep.subr.bf16.mxu0 0
    %1053 = vmatpush2.bf16.xpose.msra.mxu0 0
    %1054 = vmatprep.subr.bf16.mxu0 0
    %1055 = vmatpush2.bf16.xpose.msra.mxu0 0
    %1056 = vmatprep.subr.bf16.mxu0 0
    %1057 = vmatpush2.bf16.xpose.msra.mxu0 0
    %1058 = vmatprep.subr.bf16.mxu0 0
    %1059 = vmatpush2.bf16.xpose.msra.mxu0 0
    %1060 = vmatprep.subr.bf16.mxu0 0
    %1061 = vmatpush2.bf16.xpose.msra.mxu0 0
    %1062 = vmatprep.subr.bf16.mxu0 0
    %1063 = vmatpush2.bf16.xpose.msra.mxu0 0
    %1064 = vmatprep.subr.bf16.mxu0 0
    %1065 = vmatpush2.bf16.xpose.msra.mxu0 0
    %1066 = vmatprep.mubr.bf16.mxu0 0
    %1067 = vmatmul.mubr.bf16.gmra.mxu0 %v1029
    %v1068 = vpop.f32.mrf.mxu0
    %v1069 = vadd.f32 0.0, %v1068
    %v1070 = vpop.f32.mrf.mxu0
    %v1071 = vpop.f32.mrf.mxu0
    %v1072 = vadd.f32 0.0, %v1071
    %v1073 = vpop.f32.mrf.mxu0
    %1074 = vdwg.mxu0
    %v1077 = vunpack.c.l.b16 %v159
    %v1078 = vunpack.c.l.b16 %v160
    %v1079 = vpack.c.b16 %v1078, %v1077
    %v1081 = vsel %vm923, %v1079, 0
    %v1084 = vsel %vm923, %v553, 0
    %1086 = vmatprep.subr.bf16.mxu0 0
    %1087 = vmatpush1.bf16.xpose.msra.mxu0 0
    %1088 = vmatprep.subr.bf16.mxu0 0
    %1089 = vmatpush1.bf16.xpose.msra.mxu0 0
    %1090 = vmatprep.subr.bf16.mxu0 0
    %1091 = vmatpush1.bf16.xpose.msra.mxu0 0
    %1092 = vmatprep.subr.bf16.mxu0 0
    %1093 = vmatpush1.bf16.xpose.msra.mxu0 0
    %1094 = vmatprep.subr.bf16.mxu0 0
    %1095 = vmatpush1.bf16.xpose.msra.mxu0 0
    %1096 = vmatprep.subr.bf16.mxu0 0
    %1097 = vmatpush1.bf16.xpose.msra.mxu0 0
    %1098 = vmatprep.subr.bf16.mxu0 0
    %1099 = vmatpush1.bf16.xpose.msra.mxu0 0
    %1100 = vmatprep.subr.bf16.mxu0 0
    %1101 = vmatpush1.bf16.xpose.msra.mxu0 %v1084
    %1102 = vmatprep.subr.bf16.mxu0 0
    %1103 = vmatpush2.bf16.xpose.msra.mxu0 0
    %1104 = vmatprep.subr.bf16.mxu0 0
    %1105 = vmatpush2.bf16.xpose.msra.mxu0 0
    %1106 = vmatprep.subr.bf16.mxu0 0
    %1107 = vmatpush2.bf16.xpose.msra.mxu0 0
    %1108 = vmatprep.subr.bf16.mxu0 0
    %1109 = vmatpush2.bf16.xpose.msra.mxu0 0
    %1110 = vmatprep.subr.bf16.mxu0 0
    %1111 = vmatpush2.bf16.xpose.msra.mxu0 0
    %1112 = vmatprep.subr.bf16.mxu0 0
    %1113 = vmatpush2.bf16.xpose.msra.mxu0 0
    %1114 = vmatprep.subr.bf16.mxu0 0
    %1115 = vmatpush2.bf16.xpose.msra.mxu0 0
    %1116 = vmatprep.subr.bf16.mxu0 0
    %1117 = vmatpush2.bf16.xpose.msra.mxu0 0
    %1118 = vmatprep.mubr.bf16.mxu0 0
    %1119 = vmatmul.mubr.bf16.gmra.mxu0 %v1081
    %v1120 = vpop.f32.mrf.mxu0
    %v1121 = vadd.f32 0.0, %v1120
    %v1122 = vpop.f32.mrf.mxu0
    %v1123 = vpop.f32.mrf.mxu0
    %v1124 = vadd.f32 0.0, %v1123
    %v1125 = vpop.f32.mrf.mxu0
    %1126 = vdwg.mxu0
    %v1129 = vunpack.c.l.b16 %v161
    %v1130 = vunpack.c.l.b16 %v162
    %v1131 = vpack.c.b16 %v1130, %v1129
    %v1133 = vsel %vm923, %v1131, 0
    %v1136 = vsel %vm923, %v554, 0
    %1138 = vmatprep.subr.bf16.mxu0 0
    %1139 = vmatpush1.bf16.xpose.msra.mxu0 0
    %1140 = vmatprep.subr.bf16.mxu0 0
    %1141 = vmatpush1.bf16.xpose.msra.mxu0 0
    %1142 = vmatprep.subr.bf16.mxu0 0
    %1143 = vmatpush1.bf16.xpose.msra.mxu0 0
    %1144 = vmatprep.subr.bf16.mxu0 0
    %1145 = vmatpush1.bf16.xpose.msra.mxu0 0
    %1146 = vmatprep.subr.bf16.mxu0 0
    %1147 = vmatpush1.bf16.xpose.msra.mxu0 0
    %1148 = vmatprep.subr.bf16.mxu0 0
    %1149 = vmatpush1.bf16.xpose.msra.mxu0 0
    %1150 = vmatprep.subr.bf16.mxu0 0
    %1151 = vmatpush1.bf16.xpose.msra.mxu0 0
    %1152 = vmatprep.subr.bf16.mxu0 0
    %1153 = vmatpush1.bf16.xpose.msra.mxu0 %v1136
    %1154 = vmatprep.subr.bf16.mxu0 0
    %1155 = vmatpush2.bf16.xpose.msra.mxu0 0
    %1156 = vmatprep.subr.bf16.mxu0 0
    %1157 = vmatpush2.bf16.xpose.msra.mxu0 0
    %1158 = vmatprep.subr.bf16.mxu0 0
    %1159 = vmatpush2.bf16.xpose.msra.mxu0 0
    %1160 = vmatprep.subr.bf16.mxu0 0
    %1161 = vmatpush2.bf16.xpose.msra.mxu0 0
    %1162 = vmatprep.subr.bf16.mxu0 0
    %1163 = vmatpush2.bf16.xpose.msra.mxu0 0
    %1164 = vmatprep.subr.bf16.mxu0 0
    %1165 = vmatpush2.bf16.xpose.msra.mxu0 0
    %1166 = vmatprep.subr.bf16.mxu0 0
    %1167 = vmatpush2.bf16.xpose.msra.mxu0 0
    %1168 = vmatprep.subr.bf16.mxu0 0
    %1169 = vmatpush2.bf16.xpose.msra.mxu0 0
    %1170 = vmatprep.mubr.bf16.mxu0 0
    %1171 = vmatmul.mubr.bf16.gmra.mxu0 %v1133
    %v1172 = vpop.f32.mrf.mxu0
    %v1173 = vadd.f32 0.0, %v1172
    %v1174 = vpop.f32.mrf.mxu0
    %v1175 = vpop.f32.mrf.mxu0
    %v1176 = vadd.f32 0.0, %v1175
    %v1177 = vpop.f32.mrf.mxu0
    %1178 = vdwg.mxu0
    %v1181 = vunpack.c.l.b16 %v163
    %v1182 = vunpack.c.l.b16 %v164
    %v1183 = vpack.c.b16 %v1182, %v1181
    %v1185 = vsel %vm923, %v1183, 0
    %v1188 = vsel %vm923, %v555, 0
    %1190 = vmatprep.subr.bf16.mxu0 0
    %1191 = vmatpush1.bf16.xpose.msra.mxu0 0
    %1192 = vmatprep.subr.bf16.mxu0 0
    %1193 = vmatpush1.bf16.xpose.msra.mxu0 0
    %1194 = vmatprep.subr.bf16.mxu0 0
    %1195 = vmatpush1.bf16.xpose.msra.mxu0 0
    %1196 = vmatprep.subr.bf16.mxu0 0
    %1197 = vmatpush1.bf16.xpose.msra.mxu0 0
    %1198 = vmatprep.subr.bf16.mxu0 0
    %1199 = vmatpush1.bf16.xpose.msra.mxu0 0
    %1200 = vmatprep.subr.bf16.mxu0 0
    %1201 = vmatpush1.bf16.xpose.msra.mxu0 0
    %1202 = vmatprep.subr.bf16.mxu0 0
    %1203 = vmatpush1.bf16.xpose.msra.mxu0 0
    %1204 = vmatprep.subr.bf16.mxu0 0
    %1205 = vmatpush1.bf16.xpose.msra.mxu0 %v1188
    %1206 = vmatprep.subr.bf16.mxu0 0
    %1207 = vmatpush2.bf16.xpose.msra.mxu0 0
    %1208 = vmatprep.subr.bf16.mxu0 0
    %1209 = vmatpush2.bf16.xpose.msra.mxu0 0
    %1210 = vmatprep.subr.bf16.mxu0 0
    %1211 = vmatpush2.bf16.xpose.msra.mxu0 0
    %1212 = vmatprep.subr.bf16.mxu0 0
    %1213 = vmatpush2.bf16.xpose.msra.mxu0 0
    %1214 = vmatprep.subr.bf16.mxu0 0
    %1215 = vmatpush2.bf16.xpose.msra.mxu0 0
    %1216 = vmatprep.subr.bf16.mxu0 0
    %1217 = vmatpush2.bf16.xpose.msra.mxu0 0
    %1218 = vmatprep.subr.bf16.mxu0 0
    %1219 = vmatpush2.bf16.xpose.msra.mxu0 0
    %1220 = vmatprep.subr.bf16.mxu0 0
    %1221 = vmatpush2.bf16.xpose.msra.mxu0 0
    %1222 = vmatprep.mubr.bf16.mxu0 0
    %1223 = vmatmul.mubr.bf16.gmra.mxu0 %v1185
    %v1224 = vpop.f32.mrf.mxu0
    %v1225 = vadd.f32 0.0, %v1224
    %v1226 = vpop.f32.mrf.mxu0
    %v1227 = vpop.f32.mrf.mxu0
    %v1228 = vadd.f32 0.0, %v1227
    %v1229 = vpop.f32.mrf.mxu0
    %1230 = vdwg.mxu0
    %v1233 = vunpack.c.l.b16 %v165
    %v1234 = vunpack.c.l.b16 %v166
    %v1235 = vpack.c.b16 %v1234, %v1233
    %v1237 = vsel %vm923, %v1235, 0
    %v1240 = vsel %vm923, %v556, 0
    %1242 = vmatprep.subr.bf16.mxu0 0
    %1243 = vmatpush1.bf16.xpose.msra.mxu0 0
    %1244 = vmatprep.subr.bf16.mxu0 0
    %1245 = vmatpush1.bf16.xpose.msra.mxu0 0
    %1246 = vmatprep.subr.bf16.mxu0 0
    %1247 = vmatpush1.bf16.xpose.msra.mxu0 0
    %1248 = vmatprep.subr.bf16.mxu0 0
    %1249 = vmatpush1.bf16.xpose.msra.mxu0 0
    %1250 = vmatprep.subr.bf16.mxu0 0
    %1251 = vmatpush1.bf16.xpose.msra.mxu0 0
    %1252 = vmatprep.subr.bf16.mxu0 0
    %1253 = vmatpush1.bf16.xpose.msra.mxu0 0
    %1254 = vmatprep.subr.bf16.mxu0 0
    %1255 = vmatpush1.bf16.xpose.msra.mxu0 0
    %1256 = vmatprep.subr.bf16.mxu0 0
    %1257 = vmatpush1.bf16.xpose.msra.mxu0 %v1240
    %1258 = vmatprep.subr.bf16.mxu0 0
    %1259 = vmatpush2.bf16.xpose.msra.mxu0 0
    %1260 = vmatprep.subr.bf16.mxu0 0
    %1261 = vmatpush2.bf16.xpose.msra.mxu0 0
    %1262 = vmatprep.subr.bf16.mxu0 0
    %1263 = vmatpush2.bf16.xpose.msra.mxu0 0
    %1264 = vmatprep.subr.bf16.mxu0 0
    %1265 = vmatpush2.bf16.xpose.msra.mxu0 0
    %1266 = vmatprep.subr.bf16.mxu0 0
    %1267 = vmatpush2.bf16.xpose.msra.mxu0 0
    %1268 = vmatprep.subr.bf16.mxu0 0
    %1269 = vmatpush2.bf16.xpose.msra.mxu0 0
    %1270 = vmatprep.subr.bf16.mxu0 0
    %1271 = vmatpush2.bf16.xpose.msra.mxu0 0
    %1272 = vmatprep.subr.bf16.mxu0 0
    %1273 = vmatpush2.bf16.xpose.msra.mxu0 0
    %1274 = vmatprep.mubr.bf16.mxu0 0
    %1275 = vmatmul.mubr.bf16.gmra.mxu0 %v1237
    %v1276 = vpop.f32.mrf.mxu0
    %v1277 = vadd.f32 0.0, %v1276
    %v1278 = vpop.f32.mrf.mxu0
    %v1279 = vpop.f32.mrf.mxu0
    %v1280 = vadd.f32 0.0, %v1279
    %v1281 = vpop.f32.mrf.mxu0
    %1282 = vdwg.mxu0
    %v1285 = vunpack.c.l.b16 %v167
    %v1286 = vunpack.c.l.b16 %v168
    %v1287 = vpack.c.b16 %v1286, %v1285
    %v1289 = vsel %vm923, %v1287, 0
    %v1292 = vsel %vm923, %v557, 0
    %1294 = vmatprep.subr.bf16.mxu0 0
    %1295 = vmatpush1.bf16.xpose.msra.mxu0 0
    %1296 = vmatprep.subr.bf16.mxu0 0
    %1297 = vmatpush1.bf16.xpose.msra.mxu0 0
    %1298 = vmatprep.subr.bf16.mxu0 0
    %1299 = vmatpush1.bf16.xpose.msra.mxu0 0
    %1300 = vmatprep.subr.bf16.mxu0 0
    %1301 = vmatpush1.bf16.xpose.msra.mxu0 0
    %1302 = vmatprep.subr.bf16.mxu0 0
    %1303 = vmatpush1.bf16.xpose.msra.mxu0 0
    %1304 = vmatprep.subr.bf16.mxu0 0
    %1305 = vmatpush1.bf16.xpose.msra.mxu0 0
    %1306 = vmatprep.subr.bf16.mxu0 0
    %1307 = vmatpush1.bf16.xpose.msra.mxu0 0
    %1308 = vmatprep.subr.bf16.mxu0 0
    %1309 = vmatpush1.bf16.xpose.msra.mxu0 %v1292
    %1310 = vmatprep.subr.bf16.mxu0 0
    %1311 = vmatpush2.bf16.xpose.msra.mxu0 0
    %1312 = vmatprep.subr.bf16.mxu0 0
    %1313 = vmatpush2.bf16.xpose.msra.mxu0 0
    %1314 = vmatprep.subr.bf16.mxu0 0
    %1315 = vmatpush2.bf16.xpose.msra.mxu0 0
    %1316 = vmatprep.subr.bf16.mxu0 0
    %1317 = vmatpush2.bf16.xpose.msra.mxu0 0
    %1318 = vmatprep.subr.bf16.mxu0 0
    %1319 = vmatpush2.bf16.xpose.msra.mxu0 0
    %1320 = vmatprep.subr.bf16.mxu0 0
    %1321 = vmatpush2.bf16.xpose.msra.mxu0 0
    %1322 = vmatprep.subr.bf16.mxu0 0
    %1323 = vmatpush2.bf16.xpose.msra.mxu0 0
    %1324 = vmatprep.subr.bf16.mxu0 0
    %1325 = vmatpush2.bf16.xpose.msra.mxu0 0
    %1326 = vmatprep.mubr.bf16.mxu0 0
    %1327 = vmatmul.mubr.bf16.gmra.mxu0 %v1289
    %v1328 = vpop.f32.mrf.mxu0
    %v1329 = vadd.f32 0.0, %v1328
    %v1330 = vpop.f32.mrf.mxu0
    %v1331 = vpop.f32.mrf.mxu0
    %v1332 = vadd.f32 0.0, %v1331
    %v1333 = vpop.f32.mrf.mxu0
    %1334 = vdwg.mxu0
    %v1335 = vsel %vm87, %v965, -inf
    %1336 = vmax.xlane.f32.xlu0 %v1335
    %v1337 = vpop.xlane.xlu0 %1336
    %v1338 = vsel %vm87, %v968, -inf
    %1339 = vmax.xlane.f32.xlu0 %v1338
    %v1340 = vpop.xlane.xlu0 %1339
    %v1341 = vsel %vm87, %v1017, -inf
    %1342 = vmax.xlane.f32.xlu0 %v1341
    %v1343 = vpop.xlane.xlu0 %1342
    %v1344 = vsel %vm87, %v1020, -inf
    %1345 = vmax.xlane.f32.xlu0 %v1344
    %v1346 = vpop.xlane.xlu0 %1345
    %v1347 = vsel %vm87, %v1069, -inf
    %1348 = vmax.xlane.f32.xlu0 %v1347
    %v1349 = vpop.xlane.xlu0 %1348
    %v1350 = vsel %vm87, %v1072, -inf
    %1351 = vmax.xlane.f32.xlu0 %v1350
    %v1352 = vpop.xlane.xlu0 %1351
    %v1353 = vsel %vm87, %v1121, -inf
    %1354 = vmax.xlane.f32.xlu0 %v1353
    %v1355 = vpop.xlane.xlu0 %1354
    %v1356 = vsel %vm87, %v1124, -inf
    %1357 = vmax.xlane.f32.xlu0 %v1356
    %v1358 = vpop.xlane.xlu0 %1357
    %v1359 = vsel %vm87, %v1173, -inf
    %1360 = vmax.xlane.f32.xlu0 %v1359
    %v1361 = vpop.xlane.xlu0 %1360
    %v1362 = vsel %vm87, %v1176, -inf
    %1363 = vmax.xlane.f32.xlu0 %v1362
    %v1364 = vpop.xlane.xlu0 %1363
    %v1365 = vsel %vm87, %v1225, -inf
    %1366 = vmax.xlane.f32.xlu0 %v1365
    %v1367 = vpop.xlane.xlu0 %1366
    %v1368 = vsel %vm87, %v1228, -inf
    %1369 = vmax.xlane.f32.xlu0 %v1368
    %v1370 = vpop.xlane.xlu0 %1369
    %v1371 = vsel %vm87, %v1277, -inf
    %1372 = vmax.xlane.f32.xlu0 %v1371
    %v1373 = vpop.xlane.xlu0 %1372
    %v1374 = vsel %vm87, %v1280, -inf
    %1375 = vmax.xlane.f32.xlu0 %v1374
    %v1376 = vpop.xlane.xlu0 %1375
    %v1377 = vsel %vm87, %v1329, -inf
    %1378 = vmax.xlane.f32.xlu0 %v1377
    %v1379 = vpop.xlane.xlu0 %1378
    %v1380 = vsel %vm87, %v1332, -inf
    %1381 = vmax.xlane.f32.xlu0 %v1380
    %v1382 = vpop.xlane.xlu0 %1381
    %v1383 = vsub.f32 %v965, %v1337
    %v1384 = vsub.f32 %v968, %v1340
    %v1385 = vsub.f32 %v1017, %v1343
    %v1386 = vsub.f32 %v1020, %v1346
    %v1387 = vsub.f32 %v1069, %v1349
    %v1388 = vsub.f32 %v1072, %v1352
    %v1389 = vsub.f32 %v1121, %v1355
    %v1390 = vsub.f32 %v1124, %v1358
    %v1391 = vsub.f32 %v1173, %v1361
    %v1392 = vsub.f32 %v1176, %v1364
    %v1393 = vsub.f32 %v1225, %v1367
    %v1394 = vsub.f32 %v1228, %v1370
    %v1395 = vsub.f32 %v1277, %v1373
    %v1396 = vsub.f32 %v1280, %v1376
    %v1397 = vsub.f32 %v1329, %v1379
    %v1398 = vsub.f32 %v1332, %v1382
    %v1399 = vmul.f32 %v1383, 1.442695
    %v1400 = vpow.pop %v1399
    %v1401 = vmul.f32 %v1384, 1.442695
    %v1402 = vpow.pop %v1401
    %v1403 = vmul.f32 %v1385, 1.442695
    %v1404 = vpow.pop %v1403
    %v1405 = vmul.f32 %v1386, 1.442695
    %v1406 = vpow.pop %v1405
    %v1407 = vmul.f32 %v1387, 1.442695
    %v1408 = vpow.pop %v1407
    %v1409 = vmul.f32 %v1388, 1.442695
    %v1410 = vpow.pop %v1409
    %v1411 = vmul.f32 %v1389, 1.442695
    %v1412 = vpow.pop %v1411
    %v1413 = vmul.f32 %v1390, 1.442695
    %v1414 = vpow.pop %v1413
    %v1415 = vmul.f32 %v1391, 1.442695
    %v1416 = vpow.pop %v1415
    %v1417 = vmul.f32 %v1392, 1.442695
    %v1418 = vpow.pop %v1417
    %v1419 = vmul.f32 %v1393, 1.442695
    %v1420 = vpow.pop %v1419
    %v1421 = vmul.f32 %v1394, 1.442695
    %v1422 = vpow.pop %v1421
    %v1423 = vmul.f32 %v1395, 1.442695
    %v1424 = vpow.pop %v1423
    %v1425 = vmul.f32 %v1396, 1.442695
    %v1426 = vpow.pop %v1425
    %v1427 = vmul.f32 %v1397, 1.442695
    %v1428 = vpow.pop %v1427
    %v1429 = vmul.f32 %v1398, 1.442695
    %v1430 = vpow.pop %v1429
    %v1431 = vsel %vm87, %v1400, 0.0
    %1432 = vadd.xlane.f32.xlu0 %v1431
    %v1433 = vpop.xlane.xlu0 %1432
    %v1434 = vsel %vm87, %v1402, 0.0
    %1435 = vadd.xlane.f32.xlu0 %v1434
    %v1436 = vpop.xlane.xlu0 %1435
    %v1437 = vsel %vm87, %v1404, 0.0
    %1438 = vadd.xlane.f32.xlu0 %v1437
    %v1439 = vpop.xlane.xlu0 %1438
    %v1440 = vsel %vm87, %v1406, 0.0
    %1441 = vadd.xlane.f32.xlu0 %v1440
    %v1442 = vpop.xlane.xlu0 %1441
    %v1443 = vsel %vm87, %v1408, 0.0
    %1444 = vadd.xlane.f32.xlu0 %v1443
    %v1445 = vpop.xlane.xlu0 %1444
    %v1446 = vsel %vm87, %v1410, 0.0
    %1447 = vadd.xlane.f32.xlu0 %v1446
    %v1448 = vpop.xlane.xlu0 %1447
    %v1449 = vsel %vm87, %v1412, 0.0
    %1450 = vadd.xlane.f32.xlu0 %v1449
    %v1451 = vpop.xlane.xlu0 %1450
    %v1452 = vsel %vm87, %v1414, 0.0
    %1453 = vadd.xlane.f32.xlu0 %v1452
    %v1454 = vpop.xlane.xlu0 %1453
    %v1455 = vsel %vm87, %v1416, 0.0
    %1456 = vadd.xlane.f32.xlu0 %v1455
    %v1457 = vpop.xlane.xlu0 %1456
    %v1458 = vsel %vm87, %v1418, 0.0
    %1459 = vadd.xlane.f32.xlu0 %v1458
    %v1460 = vpop.xlane.xlu0 %1459
    %v1461 = vsel %vm87, %v1420, 0.0
    %1462 = vadd.xlane.f32.xlu0 %v1461
    %v1463 = vpop.xlane.xlu0 %1462
    %v1464 = vsel %vm87, %v1422, 0.0
    %1465 = vadd.xlane.f32.xlu0 %v1464
    %v1466 = vpop.xlane.xlu0 %1465
    %v1467 = vsel %vm87, %v1424, 0.0
    %1468 = vadd.xlane.f32.xlu0 %v1467
    %v1469 = vpop.xlane.xlu0 %1468
    %v1470 = vsel %vm87, %v1426, 0.0
    %1471 = vadd.xlane.f32.xlu0 %v1470
    %v1472 = vpop.xlane.xlu0 %1471
    %v1473 = vsel %vm87, %v1428, 0.0
    %1474 = vadd.xlane.f32.xlu0 %v1473
    %v1475 = vpop.xlane.xlu0 %1474
    %v1476 = vsel %vm87, %v1430, 0.0
    %1477 = vadd.xlane.f32.xlu0 %v1476
    %v1478 = vpop.xlane.xlu0 %1477
    %v1479 = vrcp.pop %v1433
    %v1480 = vrcp.pop %v1436
    %v1481 = vrcp.pop %v1439
    %v1482 = vrcp.pop %v1442
    %v1483 = vrcp.pop %v1445
    %v1484 = vrcp.pop %v1448
    %v1485 = vrcp.pop %v1451
    %v1486 = vrcp.pop %v1454
    %v1487 = vrcp.pop %v1457
    %v1488 = vrcp.pop %v1460
    %v1489 = vrcp.pop %v1463
    %v1490 = vrcp.pop %v1466
    %v1491 = vrcp.pop %v1469
    %v1492 = vrcp.pop %v1472
    %v1493 = vrcp.pop %v1475
    %v1494 = vrcp.pop %v1478
    %v1495 = vmul.f32 %v1400, %v1479
    %v1496 = vmul.f32 %v1402, %v1480
    %v1497 = vmul.f32 %v1404, %v1481
    %v1498 = vmul.f32 %v1406, %v1482
    %v1499 = vmul.f32 %v1408, %v1483
    %v1500 = vmul.f32 %v1410, %v1484
    %v1501 = vmul.f32 %v1412, %v1485
    %v1502 = vmul.f32 %v1414, %v1486
    %v1503 = vmul.f32 %v1416, %v1487
    %v1504 = vmul.f32 %v1418, %v1488
    %v1505 = vmul.f32 %v1420, %v1489
    %v1506 = vmul.f32 %v1422, %v1490
    %v1507 = vmul.f32 %v1424, %v1491
    %v1508 = vmul.f32 %v1426, %v1492
    %v1509 = vmul.f32 %v1428, %v1493
    %v1510 = vmul.f32 %v1430, %v1494
    %v1511 = vpack.c.bf16 %v1496, %v1495
    %v1512 = vpack.c.bf16 %v1498, %v1497
    %v1513 = vpack.c.bf16 %v1500, %v1499
    %v1514 = vpack.c.bf16 %v1502, %v1501
    %v1515 = vpack.c.bf16 %v1504, %v1503
    %v1516 = vpack.c.bf16 %v1506, %v1505
    %v1517 = vpack.c.bf16 %v1508, %v1507
    %v1518 = vpack.c.bf16 %v1510, %v1509
    %v1520 = vsel %vm87, %v1511, 0
    %1522 = vmatprep.subr.bf16.mxu0 0
    %1523 = vmatpush1.bf16.msra.mxu0 0
    %1524 = vmatprep.subr.bf16.mxu0 0
    %1525 = vmatpush1.bf16.msra.mxu0 0
    %1526 = vmatprep.subr.bf16.mxu0 0
    %1527 = vmatpush1.bf16.msra.mxu0 0
    %1528 = vmatprep.subr.bf16.mxu0 0
    %1529 = vmatpush1.bf16.msra.mxu0 0
    %1530 = vmatprep.subr.bf16.mxu0 0
    %1531 = vmatpush1.bf16.msra.mxu0 0
    %1532 = vmatprep.subr.bf16.mxu0 0
    %1533 = vmatpush1.bf16.msra.mxu0 0
    %1534 = vmatprep.subr.bf16.mxu0 0
    %1535 = vmatpush1.bf16.msra.mxu0 0
    %1536 = vmatprep.subr.bf16.mxu0 0
    %1537 = vmatpush1.bf16.msra.mxu0 %v910
    %1538 = vmatprep.subr.bf16.mxu0 0
    %1539 = vmatpush2.bf16.msra.mxu0 0
    %1540 = vmatprep.subr.bf16.mxu0 0
    %1541 = vmatpush2.bf16.msra.mxu0 0
    %1542 = vmatprep.subr.bf16.mxu0 0
    %1543 = vmatpush2.bf16.msra.mxu0 0
    %1544 = vmatprep.subr.bf16.mxu0 0
    %1545 = vmatpush2.bf16.msra.mxu0 0
    %1546 = vmatprep.subr.bf16.mxu0 0
    %1547 = vmatpush2.bf16.msra.mxu0 0
    %1548 = vmatprep.subr.bf16.mxu0 0
    %1549 = vmatpush2.bf16.msra.mxu0 0
    %1550 = vmatprep.subr.bf16.mxu0 0
    %1551 = vmatpush2.bf16.msra.mxu0 0
    %1552 = vmatprep.subr.bf16.mxu0 0
    %1553 = vmatpush2.bf16.msra.mxu0 0
    %1554 = vmatprep.mubr.bf16.mxu0 0
    %1555 = vmatmul.mubr.bf16.gmra.mxu0 %v1520
    %v1556 = vpop.f32.mrf.mxu0
    %v1557 = vadd.f32 0.0, %v1556
    %v1558 = vpop.f32.mrf.mxu0
    %v1559 = vpop.f32.mrf.mxu0
    %v1560 = vadd.f32 0.0, %v1559
    %v1561 = vpop.f32.mrf.mxu0
    %1562 = vdwg.mxu0
    %v1564 = vsel %vm87, %v1512, 0
    %1566 = vmatprep.subr.bf16.mxu0 0
    %1567 = vmatpush1.bf16.msra.mxu0 0
    %1568 = vmatprep.subr.bf16.mxu0 0
    %1569 = vmatpush1.bf16.msra.mxu0 0
    %1570 = vmatprep.subr.bf16.mxu0 0
    %1571 = vmatpush1.bf16.msra.mxu0 0
    %1572 = vmatprep.subr.bf16.mxu0 0
    %1573 = vmatpush1.bf16.msra.mxu0 0
    %1574 = vmatprep.subr.bf16.mxu0 0
    %1575 = vmatpush1.bf16.msra.mxu0 0
    %1576 = vmatprep.subr.bf16.mxu0 0
    %1577 = vmatpush1.bf16.msra.mxu0 0
    %1578 = vmatprep.subr.bf16.mxu0 0
    %1579 = vmatpush1.bf16.msra.mxu0 0
    %1580 = vmatprep.subr.bf16.mxu0 0
    %1581 = vmatpush1.bf16.msra.mxu0 %v911
    %1582 = vmatprep.subr.bf16.mxu0 0
    %1583 = vmatpush2.bf16.msra.mxu0 0
    %1584 = vmatprep.subr.bf16.mxu0 0
    %1585 = vmatpush2.bf16.msra.mxu0 0
    %1586 = vmatprep.subr.bf16.mxu0 0
    %1587 = vmatpush2.bf16.msra.mxu0 0
    %1588 = vmatprep.subr.bf16.mxu0 0
    %1589 = vmatpush2.bf16.msra.mxu0 0
    %1590 = vmatprep.subr.bf16.mxu0 0
    %1591 = vmatpush2.bf16.msra.mxu0 0
    %1592 = vmatprep.subr.bf16.mxu0 0
    %1593 = vmatpush2.bf16.msra.mxu0 0
    %1594 = vmatprep.subr.bf16.mxu0 0
    %1595 = vmatpush2.bf16.msra.mxu0 0
    %1596 = vmatprep.subr.bf16.mxu0 0
    %1597 = vmatpush2.bf16.msra.mxu0 0
    %1598 = vmatprep.mubr.bf16.mxu0 0
    %1599 = vmatmul.mubr.bf16.gmra.mxu0 %v1564
    %v1600 = vpop.f32.mrf.mxu0
    %v1601 = vadd.f32 0.0, %v1600
    %v1602 = vpop.f32.mrf.mxu0
    %v1603 = vpop.f32.mrf.mxu0
    %v1604 = vadd.f32 0.0, %v1603
    %v1605 = vpop.f32.mrf.mxu0
    %1606 = vdwg.mxu0
    %v1608 = vsel %vm87, %v1513, 0
    %1610 = vmatprep.subr.bf16.mxu0 0
    %1611 = vmatpush1.bf16.msra.mxu0 0
    %1612 = vmatprep.subr.bf16.mxu0 0
    %1613 = vmatpush1.bf16.msra.mxu0 0
    %1614 = vmatprep.subr.bf16.mxu0 0
    %1615 = vmatpush1.bf16.msra.mxu0 0
    %1616 = vmatprep.subr.bf16.mxu0 0
    %1617 = vmatpush1.bf16.msra.mxu0 0
    %1618 = vmatprep.subr.bf16.mxu0 0
    %1619 = vmatpush1.bf16.msra.mxu0 0
    %1620 = vmatprep.subr.bf16.mxu0 0
    %1621 = vmatpush1.bf16.msra.mxu0 0
    %1622 = vmatprep.subr.bf16.mxu0 0
    %1623 = vmatpush1.bf16.msra.mxu0 0
    %1624 = vmatprep.subr.bf16.mxu0 0
    %1625 = vmatpush1.bf16.msra.mxu0 %v912
    %1626 = vmatprep.subr.bf16.mxu0 0
    %1627 = vmatpush2.bf16.msra.mxu0 0
    %1628 = vmatprep.subr.bf16.mxu0 0
    %1629 = vmatpush2.bf16.msra.mxu0 0
    %1630 = vmatprep.subr.bf16.mxu0 0
    %1631 = vmatpush2.bf16.msra.mxu0 0
    %1632 = vmatprep.subr.bf16.mxu0 0
    %1633 = vmatpush2.bf16.msra.mxu0 0
    %1634 = vmatprep.subr.bf16.mxu0 0
    %1635 = vmatpush2.bf16.msra.mxu0 0
    %1636 = vmatprep.subr.bf16.mxu0 0
    %1637 = vmatpush2.bf16.msra.mxu0 0
    %1638 = vmatprep.subr.bf16.mxu0 0
    %1639 = vmatpush2.bf16.msra.mxu0 0
    %1640 = vmatprep.subr.bf16.mxu0 0
    %1641 = vmatpush2.bf16.msra.mxu0 0
    %1642 = vmatprep.mubr.bf16.mxu0 0
    %1643 = vmatmul.mubr.bf16.gmra.mxu0 %v1608
    %v1644 = vpop.f32.mrf.mxu0
    %v1645 = vadd.f32 0.0, %v1644
    %v1646 = vpop.f32.mrf.mxu0
    %v1647 = vpop.f32.mrf.mxu0
    %v1648 = vadd.f32 0.0, %v1647
    %v1649 = vpop.f32.mrf.mxu0
    %1650 = vdwg.mxu0
    %v1652 = vsel %vm87, %v1514, 0
    %1654 = vmatprep.subr.bf16.mxu0 0
    %1655 = vmatpush1.bf16.msra.mxu0 0
    %1656 = vmatprep.subr.bf16.mxu0 0
    %1657 = vmatpush1.bf16.msra.mxu0 0
    %1658 = vmatprep.subr.bf16.mxu0 0
    %1659 = vmatpush1.bf16.msra.mxu0 0
    %1660 = vmatprep.subr.bf16.mxu0 0
    %1661 = vmatpush1.bf16.msra.mxu0 0
    %1662 = vmatprep.subr.bf16.mxu0 0
    %1663 = vmatpush1.bf16.msra.mxu0 0
    %1664 = vmatprep.subr.bf16.mxu0 0
    %1665 = vmatpush1.bf16.msra.mxu0 0
    %1666 = vmatprep.subr.bf16.mxu0 0
    %1667 = vmatpush1.bf16.msra.mxu0 0
    %1668 = vmatprep.subr.bf16.mxu0 0
    %1669 = vmatpush1.bf16.msra.mxu0 %v913
    %1670 = vmatprep.subr.bf16.mxu0 0
    %1671 = vmatpush2.bf16.msra.mxu0 0
    %1672 = vmatprep.subr.bf16.mxu0 0
    %1673 = vmatpush2.bf16.msra.mxu0 0
    %1674 = vmatprep.subr.bf16.mxu0 0
    %1675 = vmatpush2.bf16.msra.mxu0 0
    %1676 = vmatprep.subr.bf16.mxu0 0
    %1677 = vmatpush2.bf16.msra.mxu0 0
    %1678 = vmatprep.subr.bf16.mxu0 0
    %1679 = vmatpush2.bf16.msra.mxu0 0
    %1680 = vmatprep.subr.bf16.mxu0 0
    %1681 = vmatpush2.bf16.msra.mxu0 0
    %1682 = vmatprep.subr.bf16.mxu0 0
    %1683 = vmatpush2.bf16.msra.mxu0 0
    %1684 = vmatprep.subr.bf16.mxu0 0
    %1685 = vmatpush2.bf16.msra.mxu0 0
    %1686 = vmatprep.mubr.bf16.mxu0 0
    %1687 = vmatmul.mubr.bf16.gmra.mxu0 %v1652
    %v1688 = vpop.f32.mrf.mxu0
    %v1689 = vadd.f32 0.0, %v1688
    %v1690 = vpop.f32.mrf.mxu0
    %v1691 = vpop.f32.mrf.mxu0
    %v1692 = vadd.f32 0.0, %v1691
    %v1693 = vpop.f32.mrf.mxu0
    %1694 = vdwg.mxu0
    %v1696 = vsel %vm87, %v1515, 0
    %1698 = vmatprep.subr.bf16.mxu0 0
    %1699 = vmatpush1.bf16.msra.mxu0 0
    %1700 = vmatprep.subr.bf16.mxu0 0
    %1701 = vmatpush1.bf16.msra.mxu0 0
    %1702 = vmatprep.subr.bf16.mxu0 0
    %1703 = vmatpush1.bf16.msra.mxu0 0
    %1704 = vmatprep.subr.bf16.mxu0 0
    %1705 = vmatpush1.bf16.msra.mxu0 0
    %1706 = vmatprep.subr.bf16.mxu0 0
    %1707 = vmatpush1.bf16.msra.mxu0 0
    %1708 = vmatprep.subr.bf16.mxu0 0
    %1709 = vmatpush1.bf16.msra.mxu0 0
    %1710 = vmatprep.subr.bf16.mxu0 0
    %1711 = vmatpush1.bf16.msra.mxu0 0
    %1712 = vmatprep.subr.bf16.mxu0 0
    %1713 = vmatpush1.bf16.msra.mxu0 %v914
    %1714 = vmatprep.subr.bf16.mxu0 0
    %1715 = vmatpush2.bf16.msra.mxu0 0
    %1716 = vmatprep.subr.bf16.mxu0 0
    %1717 = vmatpush2.bf16.msra.mxu0 0
    %1718 = vmatprep.subr.bf16.mxu0 0
    %1719 = vmatpush2.bf16.msra.mxu0 0
    %1720 = vmatprep.subr.bf16.mxu0 0
    %1721 = vmatpush2.bf16.msra.mxu0 0
    %1722 = vmatprep.subr.bf16.mxu0 0
    %1723 = vmatpush2.bf16.msra.mxu0 0
    %1724 = vmatprep.subr.bf16.mxu0 0
    %1725 = vmatpush2.bf16.msra.mxu0 0
    %1726 = vmatprep.subr.bf16.mxu0 0
    %1727 = vmatpush2.bf16.msra.mxu0 0
    %1728 = vmatprep.subr.bf16.mxu0 0
    %1729 = vmatpush2.bf16.msra.mxu0 0
    %1730 = vmatprep.mubr.bf16.mxu0 0
    %1731 = vmatmul.mubr.bf16.gmra.mxu0 %v1696
    %v1732 = vpop.f32.mrf.mxu0
    %v1733 = vadd.f32 0.0, %v1732
    %v1734 = vpop.f32.mrf.mxu0
    %v1735 = vpop.f32.mrf.mxu0
    %v1736 = vadd.f32 0.0, %v1735
    %v1737 = vpop.f32.mrf.mxu0
    %1738 = vdwg.mxu0
    %v1740 = vsel %vm87, %v1516, 0
    %1742 = vmatprep.subr.bf16.mxu0 0
    %1743 = vmatpush1.bf16.msra.mxu0 0
    %1744 = vmatprep.subr.bf16.mxu0 0
    %1745 = vmatpush1.bf16.msra.mxu0 0
    %1746 = vmatprep.subr.bf16.mxu0 0
    %1747 = vmatpush1.bf16.msra.mxu0 0
    %1748 = vmatprep.subr.bf16.mxu0 0
    %1749 = vmatpush1.bf16.msra.mxu0 0
    %1750 = vmatprep.subr.bf16.mxu0 0
    %1751 = vmatpush1.bf16.msra.mxu0 0
    %1752 = vmatprep.subr.bf16.mxu0 0
    %1753 = vmatpush1.bf16.msra.mxu0 0
    %1754 = vmatprep.subr.bf16.mxu0 0
    %1755 = vmatpush1.bf16.msra.mxu0 0
    %1756 = vmatprep.subr.bf16.mxu0 0
    %1757 = vmatpush1.bf16.msra.mxu0 %v915
    %1758 = vmatprep.subr.bf16.mxu0 0
    %1759 = vmatpush2.bf16.msra.mxu0 0
    %1760 = vmatprep.subr.bf16.mxu0 0
    %1761 = vmatpush2.bf16.msra.mxu0 0
    %1762 = vmatprep.subr.bf16.mxu0 0
    %1763 = vmatpush2.bf16.msra.mxu0 0
    %1764 = vmatprep.subr.bf16.mxu0 0
    %1765 = vmatpush2.bf16.msra.mxu0 0
    %1766 = vmatprep.subr.bf16.mxu0 0
    %1767 = vmatpush2.bf16.msra.mxu0 0
    %1768 = vmatprep.subr.bf16.mxu0 0
    %1769 = vmatpush2.bf16.msra.mxu0 0
    %1770 = vmatprep.subr.bf16.mxu0 0
    %1771 = vmatpush2.bf16.msra.mxu0 0
    %1772 = vmatprep.subr.bf16.mxu0 0
    %1773 = vmatpush2.bf16.msra.mxu0 0
    %1774 = vmatprep.mubr.bf16.mxu0 0
    %1775 = vmatmul.mubr.bf16.gmra.mxu0 %v1740
    %v1776 = vpop.f32.mrf.mxu0
    %v1777 = vadd.f32 0.0, %v1776
    %v1778 = vpop.f32.mrf.mxu0
    %v1779 = vpop.f32.mrf.mxu0
    %v1780 = vadd.f32 0.0, %v1779
    %v1781 = vpop.f32.mrf.mxu0
    %1782 = vdwg.mxu0
    %v1784 = vsel %vm87, %v1517, 0
    %1786 = vmatprep.subr.bf16.mxu0 0
    %1787 = vmatpush1.bf16.msra.mxu0 0
    %1788 = vmatprep.subr.bf16.mxu0 0
    %1789 = vmatpush1.bf16.msra.mxu0 0
    %1790 = vmatprep.subr.bf16.mxu0 0
    %1791 = vmatpush1.bf16.msra.mxu0 0
    %1792 = vmatprep.subr.bf16.mxu0 0
    %1793 = vmatpush1.bf16.msra.mxu0 0
    %1794 = vmatprep.subr.bf16.mxu0 0
    %1795 = vmatpush1.bf16.msra.mxu0 0
    %1796 = vmatprep.subr.bf16.mxu0 0
    %1797 = vmatpush1.bf16.msra.mxu0 0
    %1798 = vmatprep.subr.bf16.mxu0 0
    %1799 = vmatpush1.bf16.msra.mxu0 0
    %1800 = vmatprep.subr.bf16.mxu0 0
    %1801 = vmatpush1.bf16.msra.mxu0 %v916
    %1802 = vmatprep.subr.bf16.mxu0 0
    %1803 = vmatpush2.bf16.msra.mxu0 0
    %1804 = vmatprep.subr.bf16.mxu0 0
    %1805 = vmatpush2.bf16.msra.mxu0 0
    %1806 = vmatprep.subr.bf16.mxu0 0
    %1807 = vmatpush2.bf16.msra.mxu0 0
    %1808 = vmatprep.subr.bf16.mxu0 0
    %1809 = vmatpush2.bf16.msra.mxu0 0
    %1810 = vmatprep.subr.bf16.mxu0 0
    %1811 = vmatpush2.bf16.msra.mxu0 0
    %1812 = vmatprep.subr.bf16.mxu0 0
    %1813 = vmatpush2.bf16.msra.mxu0 0
    %1814 = vmatprep.subr.bf16.mxu0 0
    %1815 = vmatpush2.bf16.msra.mxu0 0
    %1816 = vmatprep.subr.bf16.mxu0 0
    %1817 = vmatpush2.bf16.msra.mxu0 0
    %1818 = vmatprep.mubr.bf16.mxu0 0
    %1819 = vmatmul.mubr.bf16.gmra.mxu0 %v1784
    %v1820 = vpop.f32.mrf.mxu0
    %v1821 = vadd.f32 0.0, %v1820
    %v1822 = vpop.f32.mrf.mxu0
    %v1823 = vpop.f32.mrf.mxu0
    %v1824 = vadd.f32 0.0, %v1823
    %v1825 = vpop.f32.mrf.mxu0
    %1826 = vdwg.mxu0
    %v1828 = vsel %vm87, %v1518, 0
    %1830 = vmatprep.subr.bf16.mxu0 0
    %1831 = vmatpush1.bf16.msra.mxu0 0
    %1832 = vmatprep.subr.bf16.mxu0 0
    %1833 = vmatpush1.bf16.msra.mxu0 0
    %1834 = vmatprep.subr.bf16.mxu0 0
    %1835 = vmatpush1.bf16.msra.mxu0 0
    %1836 = vmatprep.subr.bf16.mxu0 0
    %1837 = vmatpush1.bf16.msra.mxu0 0
    %1838 = vmatprep.subr.bf16.mxu0 0
    %1839 = vmatpush1.bf16.msra.mxu0 0
    %1840 = vmatprep.subr.bf16.mxu0 0
    %1841 = vmatpush1.bf16.msra.mxu0 0
    %1842 = vmatprep.subr.bf16.mxu0 0
    %1843 = vmatpush1.bf16.msra.mxu0 0
    %1844 = vmatprep.subr.bf16.mxu0 0
    %1845 = vmatpush1.bf16.msra.mxu0 %v917
    %1846 = vmatprep.subr.bf16.mxu0 0
    %1847 = vmatpush2.bf16.msra.mxu0 0
    %1848 = vmatprep.subr.bf16.mxu0 0
    %1849 = vmatpush2.bf16.msra.mxu0 0
    %1850 = vmatprep.subr.bf16.mxu0 0
    %1851 = vmatpush2.bf16.msra.mxu0 0
    %1852 = vmatprep.subr.bf16.mxu0 0
    %1853 = vmatpush2.bf16.msra.mxu0 0
    %1854 = vmatprep.subr.bf16.mxu0 0
    %1855 = vmatpush2.bf16.msra.mxu0 0
    %1856 = vmatprep.subr.bf16.mxu0 0
    %1857 = vmatpush2.bf16.msra.mxu0 0
    %1858 = vmatprep.subr.bf16.mxu0 0
    %1859 = vmatpush2.bf16.msra.mxu0 0
    %1860 = vmatprep.subr.bf16.mxu0 0
    %1861 = vmatpush2.bf16.msra.mxu0 0
    %1862 = vmatprep.mubr.bf16.mxu0 0
    %1863 = vmatmul.mubr.bf16.gmra.mxu0 %v1828
    %v1864 = vpop.f32.mrf.mxu0
    %v1865 = vadd.f32 0.0, %v1864
    %v1866 = vpop.f32.mrf.mxu0
    %v1867 = vpop.f32.mrf.mxu0
    %v1868 = vadd.f32 0.0, %v1867
    %v1869 = vpop.f32.mrf.mxu0
    %1870 = vdwg.mxu0
    %v1871 = vpack.c.bf16 %v1560, %v1557
    %v1872 = vpack.c.bf16 %v1604, %v1601
    %v1873 = vpack.c.bf16 %v1648, %v1645
    %v1874 = vpack.c.bf16 %v1692, %v1689
    %v1875 = vpack.c.bf16 %v1736, %v1733
    %v1876 = vpack.c.bf16 %v1780, %v1777
    %v1877 = vpack.c.bf16 %v1824, %v1821
    %v1878 = vpack.c.bf16 %v1868, %v1865
    %v1880 = vsel %vm923, %v1871, 0
    %vm1882 = vcmask 1041408
    %v1884 = vsel %vm1882, %v185, 0
    %1886 = vmatprep.subr.bf16.mxu0 0
    %1887 = vmatpush1.bf16.msra.mxu0 0
    %1888 = vmatprep.subr.bf16.mxu0 0
    %1889 = vmatpush1.bf16.msra.mxu0 0
    %1890 = vmatprep.subr.bf16.mxu0 0
    %1891 = vmatpush1.bf16.msra.mxu0 0
    %1892 = vmatprep.subr.bf16.mxu0 0
    %1893 = vmatpush1.bf16.msra.mxu0 0
    %1894 = vmatprep.subr.bf16.mxu0 0
    %1895 = vmatpush1.bf16.msra.mxu0 0
    %1896 = vmatprep.subr.bf16.mxu0 0
    %1897 = vmatpush1.bf16.msra.mxu0 0
    %1898 = vmatprep.subr.bf16.mxu0 0
    %1899 = vmatpush1.bf16.msra.mxu0 0
    %1900 = vmatprep.subr.bf16.mxu0 0
    %1901 = vmatpush1.bf16.msra.mxu0 %v1884
    %1902 = vmatprep.subr.bf16.mxu0 0
    %1903 = vmatpush2.bf16.msra.mxu0 0
    %1904 = vmatprep.subr.bf16.mxu0 0
    %1905 = vmatpush2.bf16.msra.mxu0 0
    %1906 = vmatprep.subr.bf16.mxu0 0
    %1907 = vmatpush2.bf16.msra.mxu0 0
    %1908 = vmatprep.subr.bf16.mxu0 0
    %1909 = vmatpush2.bf16.msra.mxu0 0
    %1910 = vmatprep.subr.bf16.mxu0 0
    %1911 = vmatpush2.bf16.msra.mxu0 0
    %1912 = vmatprep.subr.bf16.mxu0 0
    %1913 = vmatpush2.bf16.msra.mxu0 0
    %1914 = vmatprep.subr.bf16.mxu0 0
    %1915 = vmatpush2.bf16.msra.mxu0 0
    %1916 = vmatprep.subr.bf16.mxu0 0
    %1917 = vmatpush2.bf16.msra.mxu0 0
    %1918 = vmatprep.mubr.bf16.mxu0 0
    %1919 = vmatmul.mubr.bf16.gmra.mxu0 %v1880
    %v1920 = vpop.f32.mrf.mxu0
    %v1921 = vadd.f32 0.0, %v1920
    %v1922 = vpop.f32.mrf.mxu0
    %v1923 = vpop.f32.mrf.mxu0
    %v1924 = vadd.f32 0.0, %v1923
    %v1925 = vpop.f32.mrf.mxu0
    %1926 = vdwg.mxu0
    %v1928 = vsel %vm923, %v1872, 0
    %v1931 = vsel %vm1882, %v186, 0
    %1933 = vmatprep.subr.bf16.mxu0 0
    %1934 = vmatpush1.bf16.msra.mxu0 0
    %1935 = vmatprep.subr.bf16.mxu0 0
    %1936 = vmatpush1.bf16.msra.mxu0 0
    %1937 = vmatprep.subr.bf16.mxu0 0
    %1938 = vmatpush1.bf16.msra.mxu0 0
    %1939 = vmatprep.subr.bf16.mxu0 0
    %1940 = vmatpush1.bf16.msra.mxu0 0
    %1941 = vmatprep.subr.bf16.mxu0 0
    %1942 = vmatpush1.bf16.msra.mxu0 0
    %1943 = vmatprep.subr.bf16.mxu0 0
    %1944 = vmatpush1.bf16.msra.mxu0 0
    %1945 = vmatprep.subr.bf16.mxu0 0
    %1946 = vmatpush1.bf16.msra.mxu0 0
    %1947 = vmatprep.subr.bf16.mxu0 0
    %1948 = vmatpush1.bf16.msra.mxu0 %v1931
    %1949 = vmatprep.subr.bf16.mxu0 0
    %1950 = vmatpush2.bf16.msra.mxu0 0
    %1951 = vmatprep.subr.bf16.mxu0 0
    %1952 = vmatpush2.bf16.msra.mxu0 0
    %1953 = vmatprep.subr.bf16.mxu0 0
    %1954 = vmatpush2.bf16.msra.mxu0 0
    %1955 = vmatprep.subr.bf16.mxu0 0
    %1956 = vmatpush2.bf16.msra.mxu0 0
    %1957 = vmatprep.subr.bf16.mxu0 0
    %1958 = vmatpush2.bf16.msra.mxu0 0
    %1959 = vmatprep.subr.bf16.mxu0 0
    %1960 = vmatpush2.bf16.msra.mxu0 0
    %1961 = vmatprep.subr.bf16.mxu0 0
    %1962 = vmatpush2.bf16.msra.mxu0 0
    %1963 = vmatprep.subr.bf16.mxu0 0
    %1964 = vmatpush2.bf16.msra.mxu0 0
    %1965 = vmatprep.mubr.bf16.mxu0 0
    %1966 = vmatmul.mubr.bf16.gmra.mxu0 %v1928
    %v1967 = vpop.f32.mrf.mxu0
    %v1968 = vadd.f32 0.0, %v1967
    %v1969 = vpop.f32.mrf.mxu0
    %v1970 = vpop.f32.mrf.mxu0
    %v1971 = vadd.f32 0.0, %v1970
    %v1972 = vpop.f32.mrf.mxu0
    %1973 = vdwg.mxu0
    %v1975 = vsel %vm923, %v1873, 0
    %v1978 = vsel %vm1882, %v187, 0
    %1980 = vmatprep.subr.bf16.mxu0 0
    %1981 = vmatpush1.bf16.msra.mxu0 0
    %1982 = vmatprep.subr.bf16.mxu0 0
    %1983 = vmatpush1.bf16.msra.mxu0 0
    %1984 = vmatprep.subr.bf16.mxu0 0
    %1985 = vmatpush1.bf16.msra.mxu0 0
    %1986 = vmatprep.subr.bf16.mxu0 0
    %1987 = vmatpush1.bf16.msra.mxu0 0
    %1988 = vmatprep.subr.bf16.mxu0 0
    %1989 = vmatpush1.bf16.msra.mxu0 0
    %1990 = vmatprep.subr.bf16.mxu0 0
    %1991 = vmatpush1.bf16.msra.mxu0 0
    %1992 = vmatprep.subr.bf16.mxu0 0
    %1993 = vmatpush1.bf16.msra.mxu0 0
    %1994 = vmatprep.subr.bf16.mxu0 0
    %1995 = vmatpush1.bf16.msra.mxu0 %v1978
    %1996 = vmatprep.subr.bf16.mxu0 0
    %1997 = vmatpush2.bf16.msra.mxu0 0
    %1998 = vmatprep.subr.bf16.mxu0 0
    %1999 = vmatpush2.bf16.msra.mxu0 0
    %2000 = vmatprep.subr.bf16.mxu0 0
    %2001 = vmatpush2.bf16.msra.mxu0 0
    %2002 = vmatprep.subr.bf16.mxu0 0
    %2003 = vmatpush2.bf16.msra.mxu0 0
    %2004 = vmatprep.subr.bf16.mxu0 0
    %2005 = vmatpush2.bf16.msra.mxu0 0
    %2006 = vmatprep.subr.bf16.mxu0 0
    %2007 = vmatpush2.bf16.msra.mxu0 0
    %2008 = vmatprep.subr.bf16.mxu0 0
    %2009 = vmatpush2.bf16.msra.mxu0 0
    %2010 = vmatprep.subr.bf16.mxu0 0
    %2011 = vmatpush2.bf16.msra.mxu0 0
    %2012 = vmatprep.mubr.bf16.mxu0 0
    %2013 = vmatmul.mubr.bf16.gmra.mxu0 %v1975
    %v2014 = vpop.f32.mrf.mxu0
    %v2015 = vadd.f32 0.0, %v2014
    %v2016 = vpop.f32.mrf.mxu0
    %v2017 = vpop.f32.mrf.mxu0
    %v2018 = vadd.f32 0.0, %v2017
    %v2019 = vpop.f32.mrf.mxu0
    %2020 = vdwg.mxu0
    %v2022 = vsel %vm923, %v1874, 0
    %v2025 = vsel %vm1882, %v188, 0
    %2027 = vmatprep.subr.bf16.mxu0 0
    %2028 = vmatpush1.bf16.msra.mxu0 0
    %2029 = vmatprep.subr.bf16.mxu0 0
    %2030 = vmatpush1.bf16.msra.mxu0 0
    %2031 = vmatprep.subr.bf16.mxu0 0
    %2032 = vmatpush1.bf16.msra.mxu0 0
    %2033 = vmatprep.subr.bf16.mxu0 0
    %2034 = vmatpush1.bf16.msra.mxu0 0
    %2035 = vmatprep.subr.bf16.mxu0 0
    %2036 = vmatpush1.bf16.msra.mxu0 0
    %2037 = vmatprep.subr.bf16.mxu0 0
    %2038 = vmatpush1.bf16.msra.mxu0 0
    %2039 = vmatprep.subr.bf16.mxu0 0
    %2040 = vmatpush1.bf16.msra.mxu0 0
    %2041 = vmatprep.subr.bf16.mxu0 0
    %2042 = vmatpush1.bf16.msra.mxu0 %v2025
    %2043 = vmatprep.subr.bf16.mxu0 0
    %2044 = vmatpush2.bf16.msra.mxu0 0
    %2045 = vmatprep.subr.bf16.mxu0 0
    %2046 = vmatpush2.bf16.msra.mxu0 0
    %2047 = vmatprep.subr.bf16.mxu0 0
    %2048 = vmatpush2.bf16.msra.mxu0 0
    %2049 = vmatprep.subr.bf16.mxu0 0
    %2050 = vmatpush2.bf16.msra.mxu0 0
    %2051 = vmatprep.subr.bf16.mxu0 0
    %2052 = vmatpush2.bf16.msra.mxu0 0
    %2053 = vmatprep.subr.bf16.mxu0 0
    %2054 = vmatpush2.bf16.msra.mxu0 0
    %2055 = vmatprep.subr.bf16.mxu0 0
    %2056 = vmatpush2.bf16.msra.mxu0 0
    %2057 = vmatprep.subr.bf16.mxu0 0
    %2058 = vmatpush2.bf16.msra.mxu0 0
    %2059 = vmatprep.mubr.bf16.mxu0 0
    %2060 = vmatmul.mubr.bf16.gmra.mxu0 %v2022
    %v2061 = vpop.f32.mrf.mxu0
    %v2062 = vadd.f32 0.0, %v2061
    %v2063 = vpop.f32.mrf.mxu0
    %v2064 = vpop.f32.mrf.mxu0
    %v2065 = vadd.f32 0.0, %v2064
    %v2066 = vpop.f32.mrf.mxu0
    %2067 = vdwg.mxu0
    %v2069 = vsel %vm923, %v1875, 0
    %v2072 = vsel %vm1882, %v189, 0
    %2074 = vmatprep.subr.bf16.mxu0 0
    %2075 = vmatpush1.bf16.msra.mxu0 0
    %2076 = vmatprep.subr.bf16.mxu0 0
    %2077 = vmatpush1.bf16.msra.mxu0 0
    %2078 = vmatprep.subr.bf16.mxu0 0
    %2079 = vmatpush1.bf16.msra.mxu0 0
    %2080 = vmatprep.subr.bf16.mxu0 0
    %2081 = vmatpush1.bf16.msra.mxu0 0
    %2082 = vmatprep.subr.bf16.mxu0 0
    %2083 = vmatpush1.bf16.msra.mxu0 0
    %2084 = vmatprep.subr.bf16.mxu0 0
    %2085 = vmatpush1.bf16.msra.mxu0 0
    %2086 = vmatprep.subr.bf16.mxu0 0
    %2087 = vmatpush1.bf16.msra.mxu0 0
    %2088 = vmatprep.subr.bf16.mxu0 0
    %2089 = vmatpush1.bf16.msra.mxu0 %v2072
    %2090 = vmatprep.subr.bf16.mxu0 0
    %2091 = vmatpush2.bf16.msra.mxu0 0
    %2092 = vmatprep.subr.bf16.mxu0 0
    %2093 = vmatpush2.bf16.msra.mxu0 0
    %2094 = vmatprep.subr.bf16.mxu0 0
    %2095 = vmatpush2.bf16.msra.mxu0 0
    %2096 = vmatprep.subr.bf16.mxu0 0
    %2097 = vmatpush2.bf16.msra.mxu0 0
    %2098 = vmatprep.subr.bf16.mxu0 0
    %2099 = vmatpush2.bf16.msra.mxu0 0
    %2100 = vmatprep.subr.bf16.mxu0 0
    %2101 = vmatpush2.bf16.msra.mxu0 0
    %2102 = vmatprep.subr.bf16.mxu0 0
    %2103 = vmatpush2.bf16.msra.mxu0 0
    %2104 = vmatprep.subr.bf16.mxu0 0
    %2105 = vmatpush2.bf16.msra.mxu0 0
    %2106 = vmatprep.mubr.bf16.mxu0 0
    %2107 = vmatmul.mubr.bf16.gmra.mxu0 %v2069
    %v2108 = vpop.f32.mrf.mxu0
    %v2109 = vadd.f32 0.0, %v2108
    %v2110 = vpop.f32.mrf.mxu0
    %v2111 = vpop.f32.mrf.mxu0
    %v2112 = vadd.f32 0.0, %v2111
    %v2113 = vpop.f32.mrf.mxu0
    %2114 = vdwg.mxu0
    %v2116 = vsel %vm923, %v1876, 0
    %v2119 = vsel %vm1882, %v190, 0
    %2121 = vmatprep.subr.bf16.mxu0 0
    %2122 = vmatpush1.bf16.msra.mxu0 0
    %2123 = vmatprep.subr.bf16.mxu0 0
    %2124 = vmatpush1.bf16.msra.mxu0 0
    %2125 = vmatprep.subr.bf16.mxu0 0
    %2126 = vmatpush1.bf16.msra.mxu0 0
    %2127 = vmatprep.subr.bf16.mxu0 0
    %2128 = vmatpush1.bf16.msra.mxu0 0
    %2129 = vmatprep.subr.bf16.mxu0 0
    %2130 = vmatpush1.bf16.msra.mxu0 0
    %2131 = vmatprep.subr.bf16.mxu0 0
    %2132 = vmatpush1.bf16.msra.mxu0 0
    %2133 = vmatprep.subr.bf16.mxu0 0
    %2134 = vmatpush1.bf16.msra.mxu0 0
    %2135 = vmatprep.subr.bf16.mxu0 0
    %2136 = vmatpush1.bf16.msra.mxu0 %v2119
    %2137 = vmatprep.subr.bf16.mxu0 0
    %2138 = vmatpush2.bf16.msra.mxu0 0
    %2139 = vmatprep.subr.bf16.mxu0 0
    %2140 = vmatpush2.bf16.msra.mxu0 0
    %2141 = vmatprep.subr.bf16.mxu0 0
    %2142 = vmatpush2.bf16.msra.mxu0 0
    %2143 = vmatprep.subr.bf16.mxu0 0
    %2144 = vmatpush2.bf16.msra.mxu0 0
    %2145 = vmatprep.subr.bf16.mxu0 0
    %2146 = vmatpush2.bf16.msra.mxu0 0
    %2147 = vmatprep.subr.bf16.mxu0 0
    %2148 = vmatpush2.bf16.msra.mxu0 0
    %2149 = vmatprep.subr.bf16.mxu0 0
    %2150 = vmatpush2.bf16.msra.mxu0 0
    %2151 = vmatprep.subr.bf16.mxu0 0
    %2152 = vmatpush2.bf16.msra.mxu0 0
    %2153 = vmatprep.mubr.bf16.mxu0 0
    %2154 = vmatmul.mubr.bf16.gmra.mxu0 %v2116
    %v2155 = vpop.f32.mrf.mxu0
    %v2156 = vadd.f32 0.0, %v2155
    %v2157 = vpop.f32.mrf.mxu0
    %v2158 = vpop.f32.mrf.mxu0
    %v2159 = vadd.f32 0.0, %v2158
    %v2160 = vpop.f32.mrf.mxu0
    %2161 = vdwg.mxu0
    %v2163 = vsel %vm923, %v1877, 0
    %v2166 = vsel %vm1882, %v191, 0
    %2168 = vmatprep.subr.bf16.mxu0 0
    %2169 = vmatpush1.bf16.msra.mxu0 0
    %2170 = vmatprep.subr.bf16.mxu0 0
    %2171 = vmatpush1.bf16.msra.mxu0 0
    %2172 = vmatprep.subr.bf16.mxu0 0
    %2173 = vmatpush1.bf16.msra.mxu0 0
    %2174 = vmatprep.subr.bf16.mxu0 0
    %2175 = vmatpush1.bf16.msra.mxu0 0
    %2176 = vmatprep.subr.bf16.mxu0 0
    %2177 = vmatpush1.bf16.msra.mxu0 0
    %2178 = vmatprep.subr.bf16.mxu0 0
    %2179 = vmatpush1.bf16.msra.mxu0 0
    %2180 = vmatprep.subr.bf16.mxu0 0
    %2181 = vmatpush1.bf16.msra.mxu0 0
    %2182 = vmatprep.subr.bf16.mxu0 0
    %2183 = vmatpush1.bf16.msra.mxu0 %v2166
    %2184 = vmatprep.subr.bf16.mxu0 0
    %2185 = vmatpush2.bf16.msra.mxu0 0
    %2186 = vmatprep.subr.bf16.mxu0 0
    %2187 = vmatpush2.bf16.msra.mxu0 0
    %2188 = vmatprep.subr.bf16.mxu0 0
    %2189 = vmatpush2.bf16.msra.mxu0 0
    %2190 = vmatprep.subr.bf16.mxu0 0
    %2191 = vmatpush2.bf16.msra.mxu0 0
    %2192 = vmatprep.subr.bf16.mxu0 0
    %2193 = vmatpush2.bf16.msra.mxu0 0
    %2194 = vmatprep.subr.bf16.mxu0 0
    %2195 = vmatpush2.bf16.msra.mxu0 0
    %2196 = vmatprep.subr.bf16.mxu0 0
    %2197 = vmatpush2.bf16.msra.mxu0 0
    %2198 = vmatprep.subr.bf16.mxu0 0
    %2199 = vmatpush2.bf16.msra.mxu0 0
    %2200 = vmatprep.mubr.bf16.mxu0 0
    %2201 = vmatmul.mubr.bf16.gmra.mxu0 %v2163
    %v2202 = vpop.f32.mrf.mxu0
    %v2203 = vadd.f32 0.0, %v2202
    %v2204 = vpop.f32.mrf.mxu0
    %v2205 = vpop.f32.mrf.mxu0
    %v2206 = vadd.f32 0.0, %v2205
    %v2207 = vpop.f32.mrf.mxu0
    %2208 = vdwg.mxu0
    %v2210 = vsel %vm923, %v1878, 0
    %v2213 = vsel %vm1882, %v192, 0
    %2215 = vmatprep.subr.bf16.mxu0 0
    %2216 = vmatpush1.bf16.msra.mxu0 0
    %2217 = vmatprep.subr.bf16.mxu0 0
    %2218 = vmatpush1.bf16.msra.mxu0 0
    %2219 = vmatprep.subr.bf16.mxu0 0
    %2220 = vmatpush1.bf16.msra.mxu0 0
    %2221 = vmatprep.subr.bf16.mxu0 0
    %2222 = vmatpush1.bf16.msra.mxu0 0
    %2223 = vmatprep.subr.bf16.mxu0 0
    %2224 = vmatpush1.bf16.msra.mxu0 0
    %2225 = vmatprep.subr.bf16.mxu0 0
    %2226 = vmatpush1.bf16.msra.mxu0 0
    %2227 = vmatprep.subr.bf16.mxu0 0
    %2228 = vmatpush1.bf16.msra.mxu0 0
    %2229 = vmatprep.subr.bf16.mxu0 0
    %2230 = vmatpush1.bf16.msra.mxu0 %v2213
    %2231 = vmatprep.subr.bf16.mxu0 0
    %2232 = vmatpush2.bf16.msra.mxu0 0
    %2233 = vmatprep.subr.bf16.mxu0 0
    %2234 = vmatpush2.bf16.msra.mxu0 0
    %2235 = vmatprep.subr.bf16.mxu0 0
    %2236 = vmatpush2.bf16.msra.mxu0 0
    %2237 = vmatprep.subr.bf16.mxu0 0
    %2238 = vmatpush2.bf16.msra.mxu0 0
    %2239 = vmatprep.subr.bf16.mxu0 0
    %2240 = vmatpush2.bf16.msra.mxu0 0
    %2241 = vmatprep.subr.bf16.mxu0 0
    %2242 = vmatpush2.bf16.msra.mxu0 0
    %2243 = vmatprep.subr.bf16.mxu0 0
    %2244 = vmatpush2.bf16.msra.mxu0 0
    %2245 = vmatprep.subr.bf16.mxu0 0
    %2246 = vmatpush2.bf16.msra.mxu0 0
    %2247 = vmatprep.mubr.bf16.mxu0 0
    %2248 = vmatmul.mubr.bf16.gmra.mxu0 %v2210
    %v2249 = vpop.f32.mrf.mxu0
    %v2250 = vadd.f32 0.0, %v2249
    %v2251 = vpop.f32.mrf.mxu0
    %v2252 = vpop.f32.mrf.mxu0
    %v2253 = vadd.f32 0.0, %v2252
    %v2254 = vpop.f32.mrf.mxu0
    %2255 = vdwg.mxu0
    %v2256 = vsel %vm194, %v1921, 0.0
    %v2257 = vsel %vm194, %v1968, 0.0
    %v2258 = vadd.f32 %v2256, %v2257
    %v2259 = vsel %vm194, %v2015, 0.0
    %v2260 = vadd.f32 %v2258, %v2259
    %v2261 = vsel %vm194, %v2062, 0.0
    %v2262 = vadd.f32 %v2260, %v2261
    %v2263 = vsel %vm194, %v2109, 0.0
    %v2264 = vadd.f32 %v2262, %v2263
    %v2265 = vsel %vm194, %v2156, 0.0
    %v2266 = vadd.f32 %v2264, %v2265
    %v2267 = vsel %vm194, %v2203, 0.0
    %v2268 = vadd.f32 %v2266, %v2267
    %v2269 = vsel %vm194, %v2250, 0.0
    %v2270 = vadd.f32 %v2268, %v2269
    %v2271 = vsel %vm194, %v1924, 0.0
    %v2272 = vsel %vm194, %v1971, 0.0
    %v2273 = vadd.f32 %v2271, %v2272
    %v2274 = vsel %vm194, %v2018, 0.0
    %v2275 = vadd.f32 %v2273, %v2274
    %v2276 = vsel %vm194, %v2065, 0.0
    %v2277 = vadd.f32 %v2275, %v2276
    %v2278 = vsel %vm194, %v2112, 0.0
    %v2279 = vadd.f32 %v2277, %v2278
    %v2280 = vsel %vm194, %v2159, 0.0
    %v2281 = vadd.f32 %v2279, %v2280
    %v2282 = vsel %vm194, %v2206, 0.0
    %v2283 = vadd.f32 %v2281, %v2282
    %v2284 = vsel %vm194, %v2253, 0.0
    %v2285 = vadd.f32 %v2283, %v2284
    %v2286 = vpack.c.bf16 %v152, %v151
    %v2288 = vsel %vm194, %v2286, 0
    %2290 = vmatprep.subr.bf16.mxu0 0
    %2291 = vmatpush1.bf16.xpose.msra.mxu0 0
    %2292 = vmatprep.subr.bf16.mxu0 0
    %2293 = vmatpush1.bf16.xpose.msra.mxu0 0
    %2294 = vmatprep.subr.bf16.mxu0 0
    %2295 = vmatpush1.bf16.xpose.msra.mxu0 0
    %2296 = vmatprep.subr.bf16.mxu0 0
    %2297 = vmatpush1.bf16.xpose.msra.mxu0 0
    %2298 = vmatprep.subr.bf16.mxu0 0
    %2299 = vmatpush1.bf16.xpose.msra.mxu0 0
    %2300 = vmatprep.subr.bf16.mxu0 0
    %2301 = vmatpush1.bf16.xpose.msra.mxu0 0
    %2302 = vmatprep.subr.bf16.mxu0 0
    %2303 = vmatpush1.bf16.xpose.msra.mxu0 0
    %2304 = vmatprep.subr.bf16.mxu0 0
    %2305 = vmatpush1.bf16.xpose.msra.mxu0 %v199
    %2306 = vmatprep.subr.bf16.mxu0 0
    %2307 = vmatpush2.bf16.xpose.msra.mxu0 0
    %2308 = vmatprep.subr.bf16.mxu0 0
    %2309 = vmatpush2.bf16.xpose.msra.mxu0 0
    %2310 = vmatprep.subr.bf16.mxu0 0
    %2311 = vmatpush2.bf16.xpose.msra.mxu0 0
    %2312 = vmatprep.subr.bf16.mxu0 0
    %2313 = vmatpush2.bf16.xpose.msra.mxu0 0
    %2314 = vmatprep.subr.bf16.mxu0 0
    %2315 = vmatpush2.bf16.xpose.msra.mxu0 0
    %2316 = vmatprep.subr.bf16.mxu0 0
    %2317 = vmatpush2.bf16.xpose.msra.mxu0 0
    %2318 = vmatprep.subr.bf16.mxu0 0
    %2319 = vmatpush2.bf16.xpose.msra.mxu0 0
    %2320 = vmatprep.subr.bf16.mxu0 0
    %2321 = vmatpush2.bf16.xpose.msra.mxu0 0
    %2322 = vmatprep.mubr.bf16.mxu0 0
    %2323 = vmatmul.mubr.bf16.gmra.mxu0 %v2288
    %v2324 = vpop.f32.mrf.mxu0
    %v2325 = vadd.f32 0.0, %v2324
    %v2326 = vpop.f32.mrf.mxu0
    %v2327 = vpop.f32.mrf.mxu0
    %v2328 = vadd.f32 0.0, %v2327
    %v2329 = vpop.f32.mrf.mxu0
    %2330 = vdwg.mxu0
    %2331 = vmatprep.subr.bf16.mxu0 0
    %2332 = vmatpush1.bf16.xpose.msra.mxu0 0
    %2333 = vmatprep.subr.bf16.mxu0 0
    %2334 = vmatpush1.bf16.xpose.msra.mxu0 0
    %2335 = vmatprep.subr.bf16.mxu0 0
    %2336 = vmatpush1.bf16.xpose.msra.mxu0 0
    %2337 = vmatprep.subr.bf16.mxu0 0
    %2338 = vmatpush1.bf16.xpose.msra.mxu0 0
    %2339 = vmatprep.subr.bf16.mxu0 0
    %2340 = vmatpush1.bf16.xpose.msra.mxu0 0
    %2341 = vmatprep.subr.bf16.mxu0 0
    %2342 = vmatpush1.bf16.xpose.msra.mxu0 0
    %2343 = vmatprep.subr.bf16.mxu0 0
    %2344 = vmatpush1.bf16.xpose.msra.mxu0 0
    %2345 = vmatprep.subr.bf16.mxu0 0
    %2346 = vmatpush1.bf16.xpose.msra.mxu0 %v243
    %2347 = vmatprep.subr.bf16.mxu0 0
    %2348 = vmatpush2.bf16.xpose.msra.mxu0 0
    %2349 = vmatprep.subr.bf16.mxu0 0
    %2350 = vmatpush2.bf16.xpose.msra.mxu0 0
    %2351 = vmatprep.subr.bf16.mxu0 0
    %2352 = vmatpush2.bf16.xpose.msra.mxu0 0
    %2353 = vmatprep.subr.bf16.mxu0 0
    %2354 = vmatpush2.bf16.xpose.msra.mxu0 0
    %2355 = vmatprep.subr.bf16.mxu0 0
    %2356 = vmatpush2.bf16.xpose.msra.mxu0 0
    %2357 = vmatprep.subr.bf16.mxu0 0
    %2358 = vmatpush2.bf16.xpose.msra.mxu0 0
    %2359 = vmatprep.subr.bf16.mxu0 0
    %2360 = vmatpush2.bf16.xpose.msra.mxu0 0
    %2361 = vmatprep.subr.bf16.mxu0 0
    %2362 = vmatpush2.bf16.xpose.msra.mxu0 0
    %2363 = vmatprep.mubr.bf16.mxu0 0
    %2364 = vmatmul.mubr.bf16.gmra.mxu0 %v2288
    %v2365 = vpop.f32.mrf.mxu0
    %v2366 = vadd.f32 0.0, %v2365
    %v2367 = vpop.f32.mrf.mxu0
    %v2368 = vpop.f32.mrf.mxu0
    %v2369 = vadd.f32 0.0, %v2368
    %v2370 = vpop.f32.mrf.mxu0
    %2371 = vdwg.mxu0
    %2372 = vmatprep.subr.bf16.mxu0 0
    %2373 = vmatpush1.bf16.xpose.msra.mxu0 0
    %2374 = vmatprep.subr.bf16.mxu0 0
    %2375 = vmatpush1.bf16.xpose.msra.mxu0 0
    %2376 = vmatprep.subr.bf16.mxu0 0
    %2377 = vmatpush1.bf16.xpose.msra.mxu0 0
    %2378 = vmatprep.subr.bf16.mxu0 0
    %2379 = vmatpush1.bf16.xpose.msra.mxu0 0
    %2380 = vmatprep.subr.bf16.mxu0 0
    %2381 = vmatpush1.bf16.xpose.msra.mxu0 0
    %2382 = vmatprep.subr.bf16.mxu0 0
    %2383 = vmatpush1.bf16.xpose.msra.mxu0 0
    %2384 = vmatprep.subr.bf16.mxu0 0
    %2385 = vmatpush1.bf16.xpose.msra.mxu0 0
    %2386 = vmatprep.subr.bf16.mxu0 0
    %2387 = vmatpush1.bf16.xpose.msra.mxu0 %v287
    %2388 = vmatprep.subr.bf16.mxu0 0
    %2389 = vmatpush2.bf16.xpose.msra.mxu0 0
    %2390 = vmatprep.subr.bf16.mxu0 0
    %2391 = vmatpush2.bf16.xpose.msra.mxu0 0
    %2392 = vmatprep.subr.bf16.mxu0 0
    %2393 = vmatpush2.bf16.xpose.msra.mxu0 0
    %2394 = vmatprep.subr.bf16.mxu0 0
    %2395 = vmatpush2.bf16.xpose.msra.mxu0 0
    %2396 = vmatprep.subr.bf16.mxu0 0
    %2397 = vmatpush2.bf16.xpose.msra.mxu0 0
    %2398 = vmatprep.subr.bf16.mxu0 0
    %2399 = vmatpush2.bf16.xpose.msra.mxu0 0
    %2400 = vmatprep.subr.bf16.mxu0 0
    %2401 = vmatpush2.bf16.xpose.msra.mxu0 0
    %2402 = vmatprep.subr.bf16.mxu0 0
    %2403 = vmatpush2.bf16.xpose.msra.mxu0 0
    %2404 = vmatprep.mubr.bf16.mxu0 0
    %2405 = vmatmul.mubr.bf16.gmra.mxu0 %v2288
    %v2406 = vpop.f32.mrf.mxu0
    %v2407 = vadd.f32 0.0, %v2406
    %v2408 = vpop.f32.mrf.mxu0
    %v2409 = vpop.f32.mrf.mxu0
    %v2410 = vadd.f32 0.0, %v2409
    %v2411 = vpop.f32.mrf.mxu0
    %2412 = vdwg.mxu0
    %2413 = vmatprep.subr.bf16.mxu0 0
    %2414 = vmatpush1.bf16.xpose.msra.mxu0 0
    %2415 = vmatprep.subr.bf16.mxu0 0
    %2416 = vmatpush1.bf16.xpose.msra.mxu0 0
    %2417 = vmatprep.subr.bf16.mxu0 0
    %2418 = vmatpush1.bf16.xpose.msra.mxu0 0
    %2419 = vmatprep.subr.bf16.mxu0 0
    %2420 = vmatpush1.bf16.xpose.msra.mxu0 0
    %2421 = vmatprep.subr.bf16.mxu0 0
    %2422 = vmatpush1.bf16.xpose.msra.mxu0 0
    %2423 = vmatprep.subr.bf16.mxu0 0
    %2424 = vmatpush1.bf16.xpose.msra.mxu0 0
    %2425 = vmatprep.subr.bf16.mxu0 0
    %2426 = vmatpush1.bf16.xpose.msra.mxu0 0
    %2427 = vmatprep.subr.bf16.mxu0 0
    %2428 = vmatpush1.bf16.xpose.msra.mxu0 %v331
    %2429 = vmatprep.subr.bf16.mxu0 0
    %2430 = vmatpush2.bf16.xpose.msra.mxu0 0
    %2431 = vmatprep.subr.bf16.mxu0 0
    %2432 = vmatpush2.bf16.xpose.msra.mxu0 0
    %2433 = vmatprep.subr.bf16.mxu0 0
    %2434 = vmatpush2.bf16.xpose.msra.mxu0 0
    %2435 = vmatprep.subr.bf16.mxu0 0
    %2436 = vmatpush2.bf16.xpose.msra.mxu0 0
    %2437 = vmatprep.subr.bf16.mxu0 0
    %2438 = vmatpush2.bf16.xpose.msra.mxu0 0
    %2439 = vmatprep.subr.bf16.mxu0 0
    %2440 = vmatpush2.bf16.xpose.msra.mxu0 0
    %2441 = vmatprep.subr.bf16.mxu0 0
    %2442 = vmatpush2.bf16.xpose.msra.mxu0 0
    %2443 = vmatprep.subr.bf16.mxu0 0
    %2444 = vmatpush2.bf16.xpose.msra.mxu0 0
    %2445 = vmatprep.mubr.bf16.mxu0 0
    %2446 = vmatmul.mubr.bf16.gmra.mxu0 %v2288
    %v2447 = vpop.f32.mrf.mxu0
    %v2448 = vadd.f32 0.0, %v2447
    %v2449 = vpop.f32.mrf.mxu0
    %v2450 = vpop.f32.mrf.mxu0
    %v2451 = vadd.f32 0.0, %v2450
    %v2452 = vpop.f32.mrf.mxu0
    %2453 = vdwg.mxu0
    %2454 = vmatprep.subr.bf16.mxu0 0
    %2455 = vmatpush1.bf16.xpose.msra.mxu0 0
    %2456 = vmatprep.subr.bf16.mxu0 0
    %2457 = vmatpush1.bf16.xpose.msra.mxu0 0
    %2458 = vmatprep.subr.bf16.mxu0 0
    %2459 = vmatpush1.bf16.xpose.msra.mxu0 0
    %2460 = vmatprep.subr.bf16.mxu0 0
    %2461 = vmatpush1.bf16.xpose.msra.mxu0 0
    %2462 = vmatprep.subr.bf16.mxu0 0
    %2463 = vmatpush1.bf16.xpose.msra.mxu0 0
    %2464 = vmatprep.subr.bf16.mxu0 0
    %2465 = vmatpush1.bf16.xpose.msra.mxu0 0
    %2466 = vmatprep.subr.bf16.mxu0 0
    %2467 = vmatpush1.bf16.xpose.msra.mxu0 0
    %2468 = vmatprep.subr.bf16.mxu0 0
    %2469 = vmatpush1.bf16.xpose.msra.mxu0 %v375
    %2470 = vmatprep.subr.bf16.mxu0 0
    %2471 = vmatpush2.bf16.xpose.msra.mxu0 0
    %2472 = vmatprep.subr.bf16.mxu0 0
    %2473 = vmatpush2.bf16.xpose.msra.mxu0 0
    %2474 = vmatprep.subr.bf16.mxu0 0
    %2475 = vmatpush2.bf16.xpose.msra.mxu0 0
    %2476 = vmatprep.subr.bf16.mxu0 0
    %2477 = vmatpush2.bf16.xpose.msra.mxu0 0
    %2478 = vmatprep.subr.bf16.mxu0 0
    %2479 = vmatpush2.bf16.xpose.msra.mxu0 0
    %2480 = vmatprep.subr.bf16.mxu0 0
    %2481 = vmatpush2.bf16.xpose.msra.mxu0 0
    %2482 = vmatprep.subr.bf16.mxu0 0
    %2483 = vmatpush2.bf16.xpose.msra.mxu0 0
    %2484 = vmatprep.subr.bf16.mxu0 0
    %2485 = vmatpush2.bf16.xpose.msra.mxu0 0
    %2486 = vmatprep.mubr.bf16.mxu0 0
    %2487 = vmatmul.mubr.bf16.gmra.mxu0 %v2288
    %v2488 = vpop.f32.mrf.mxu0
    %v2489 = vadd.f32 0.0, %v2488
    %v2490 = vpop.f32.mrf.mxu0
    %v2491 = vpop.f32.mrf.mxu0
    %v2492 = vadd.f32 0.0, %v2491
    %v2493 = vpop.f32.mrf.mxu0
    %2494 = vdwg.mxu0
    %2495 = vmatprep.subr.bf16.mxu0 0
    %2496 = vmatpush1.bf16.xpose.msra.mxu0 0
    %2497 = vmatprep.subr.bf16.mxu0 0
    %2498 = vmatpush1.bf16.xpose.msra.mxu0 0
    %2499 = vmatprep.subr.bf16.mxu0 0
    %2500 = vmatpush1.bf16.xpose.msra.mxu0 0
    %2501 = vmatprep.subr.bf16.mxu0 0
    %2502 = vmatpush1.bf16.xpose.msra.mxu0 0
    %2503 = vmatprep.subr.bf16.mxu0 0
    %2504 = vmatpush1.bf16.xpose.msra.mxu0 0
    %2505 = vmatprep.subr.bf16.mxu0 0
    %2506 = vmatpush1.bf16.xpose.msra.mxu0 0
    %2507 = vmatprep.subr.bf16.mxu0 0
    %2508 = vmatpush1.bf16.xpose.msra.mxu0 0
    %2509 = vmatprep.subr.bf16.mxu0 0
    %2510 = vmatpush1.bf16.xpose.msra.mxu0 %v419
    %2511 = vmatprep.subr.bf16.mxu0 0
    %2512 = vmatpush2.bf16.xpose.msra.mxu0 0
    %2513 = vmatprep.subr.bf16.mxu0 0
    %2514 = vmatpush2.bf16.xpose.msra.mxu0 0
    %2515 = vmatprep.subr.bf16.mxu0 0
    %2516 = vmatpush2.bf16.xpose.msra.mxu0 0
    %2517 = vmatprep.subr.bf16.mxu0 0
    %2518 = vmatpush2.bf16.xpose.msra.mxu0 0
    %2519 = vmatprep.subr.bf16.mxu0 0
    %2520 = vmatpush2.bf16.xpose.msra.mxu0 0
    %2521 = vmatprep.subr.bf16.mxu0 0
    %2522 = vmatpush2.bf16.xpose.msra.mxu0 0
    %2523 = vmatprep.subr.bf16.mxu0 0
    %2524 = vmatpush2.bf16.xpose.msra.mxu0 0
    %2525 = vmatprep.subr.bf16.mxu0 0
    %2526 = vmatpush2.bf16.xpose.msra.mxu0 0
    %2527 = vmatprep.mubr.bf16.mxu0 0
    %2528 = vmatmul.mubr.bf16.gmra.mxu0 %v2288
    %v2529 = vpop.f32.mrf.mxu0
    %v2530 = vadd.f32 0.0, %v2529
    %v2531 = vpop.f32.mrf.mxu0
    %v2532 = vpop.f32.mrf.mxu0
    %v2533 = vadd.f32 0.0, %v2532
    %v2534 = vpop.f32.mrf.mxu0
    %2535 = vdwg.mxu0
    %2536 = vmatprep.subr.bf16.mxu0 0
    %2537 = vmatpush1.bf16.xpose.msra.mxu0 0
    %2538 = vmatprep.subr.bf16.mxu0 0
    %2539 = vmatpush1.bf16.xpose.msra.mxu0 0
    %2540 = vmatprep.subr.bf16.mxu0 0
    %2541 = vmatpush1.bf16.xpose.msra.mxu0 0
    %2542 = vmatprep.subr.bf16.mxu0 0
    %2543 = vmatpush1.bf16.xpose.msra.mxu0 0
    %2544 = vmatprep.subr.bf16.mxu0 0
    %2545 = vmatpush1.bf16.xpose.msra.mxu0 0
    %2546 = vmatprep.subr.bf16.mxu0 0
    %2547 = vmatpush1.bf16.xpose.msra.mxu0 0
    %2548 = vmatprep.subr.bf16.mxu0 0
    %2549 = vmatpush1.bf16.xpose.msra.mxu0 0
    %2550 = vmatprep.subr.bf16.mxu0 0
    %2551 = vmatpush1.bf16.xpose.msra.mxu0 %v463
    %2552 = vmatprep.subr.bf16.mxu0 0
    %2553 = vmatpush2.bf16.xpose.msra.mxu0 0
    %2554 = vmatprep.subr.bf16.mxu0 0
    %2555 = vmatpush2.bf16.xpose.msra.mxu0 0
    %2556 = vmatprep.subr.bf16.mxu0 0
    %2557 = vmatpush2.bf16.xpose.msra.mxu0 0
    %2558 = vmatprep.subr.bf16.mxu0 0
    %2559 = vmatpush2.bf16.xpose.msra.mxu0 0
    %2560 = vmatprep.subr.bf16.mxu0 0
    %2561 = vmatpush2.bf16.xpose.msra.mxu0 0
    %2562 = vmatprep.subr.bf16.mxu0 0
    %2563 = vmatpush2.bf16.xpose.msra.mxu0 0
    %2564 = vmatprep.subr.bf16.mxu0 0
    %2565 = vmatpush2.bf16.xpose.msra.mxu0 0
    %2566 = vmatprep.subr.bf16.mxu0 0
    %2567 = vmatpush2.bf16.xpose.msra.mxu0 0
    %2568 = vmatprep.mubr.bf16.mxu0 0
    %2569 = vmatmul.mubr.bf16.gmra.mxu0 %v2288
    %v2570 = vpop.f32.mrf.mxu0
    %v2571 = vadd.f32 0.0, %v2570
    %v2572 = vpop.f32.mrf.mxu0
    %v2573 = vpop.f32.mrf.mxu0
    %v2574 = vadd.f32 0.0, %v2573
    %v2575 = vpop.f32.mrf.mxu0
    %2576 = vdwg.mxu0
    %2577 = vmatprep.subr.bf16.mxu0 0
    %2578 = vmatpush1.bf16.xpose.msra.mxu0 0
    %2579 = vmatprep.subr.bf16.mxu0 0
    %2580 = vmatpush1.bf16.xpose.msra.mxu0 0
    %2581 = vmatprep.subr.bf16.mxu0 0
    %2582 = vmatpush1.bf16.xpose.msra.mxu0 0
    %2583 = vmatprep.subr.bf16.mxu0 0
    %2584 = vmatpush1.bf16.xpose.msra.mxu0 0
    %2585 = vmatprep.subr.bf16.mxu0 0
    %2586 = vmatpush1.bf16.xpose.msra.mxu0 0
    %2587 = vmatprep.subr.bf16.mxu0 0
    %2588 = vmatpush1.bf16.xpose.msra.mxu0 0
    %2589 = vmatprep.subr.bf16.mxu0 0
    %2590 = vmatpush1.bf16.xpose.msra.mxu0 0
    %2591 = vmatprep.subr.bf16.mxu0 0
    %2592 = vmatpush1.bf16.xpose.msra.mxu0 %v507
    %2593 = vmatprep.subr.bf16.mxu0 0
    %2594 = vmatpush2.bf16.xpose.msra.mxu0 0
    %2595 = vmatprep.subr.bf16.mxu0 0
    %2596 = vmatpush2.bf16.xpose.msra.mxu0 0
    %2597 = vmatprep.subr.bf16.mxu0 0
    %2598 = vmatpush2.bf16.xpose.msra.mxu0 0
    %2599 = vmatprep.subr.bf16.mxu0 0
    %2600 = vmatpush2.bf16.xpose.msra.mxu0 0
    %2601 = vmatprep.subr.bf16.mxu0 0
    %2602 = vmatpush2.bf16.xpose.msra.mxu0 0
    %2603 = vmatprep.subr.bf16.mxu0 0
    %2604 = vmatpush2.bf16.xpose.msra.mxu0 0
    %2605 = vmatprep.subr.bf16.mxu0 0
    %2606 = vmatpush2.bf16.xpose.msra.mxu0 0
    %2607 = vmatprep.subr.bf16.mxu0 0
    %2608 = vmatpush2.bf16.xpose.msra.mxu0 0
    %2609 = vmatprep.mubr.bf16.mxu0 0
    %2610 = vmatmul.mubr.bf16.gmra.mxu0 %v2288
    %v2611 = vpop.f32.mrf.mxu0
    %v2612 = vadd.f32 0.0, %v2611
    %v2613 = vpop.f32.mrf.mxu0
    %v2614 = vpop.f32.mrf.mxu0
    %v2615 = vadd.f32 0.0, %v2614
    %v2616 = vpop.f32.mrf.mxu0
    %2617 = vdwg.mxu0
    %v2618 = vpack.c.bf16 %v2328, %v2325
    %v2619 = vpack.c.bf16 %v2369, %v2366
    %v2620 = vpack.c.bf16 %v2410, %v2407
    %v2621 = vpack.c.bf16 %v2451, %v2448
    %v2622 = vpack.c.bf16 %v2492, %v2489
    %v2623 = vpack.c.bf16 %v2533, %v2530
    %v2624 = vpack.c.bf16 %v2574, %v2571
    %v2625 = vpack.c.bf16 %v2615, %v2612
    %2626 = vmatprep.subr.bf16.mxu0 0
    %2627 = vmatpush1.bf16.xpose.msra.mxu0 0
    %2628 = vmatprep.subr.bf16.mxu0 0
    %2629 = vmatpush1.bf16.xpose.msra.mxu0 0
    %2630 = vmatprep.subr.bf16.mxu0 0
    %2631 = vmatpush1.bf16.xpose.msra.mxu0 0
    %2632 = vmatprep.subr.bf16.mxu0 0
    %2633 = vmatpush1.bf16.xpose.msra.mxu0 0
    %2634 = vmatprep.subr.bf16.mxu0 0
    %2635 = vmatpush1.bf16.xpose.msra.mxu0 0
    %2636 = vmatprep.subr.bf16.mxu0 0
    %2637 = vmatpush1.bf16.xpose.msra.mxu0 0
    %2638 = vmatprep.subr.bf16.mxu0 0
    %2639 = vmatpush1.bf16.xpose.msra.mxu0 0
    %2640 = vmatprep.subr.bf16.mxu0 0
    %2641 = vmatpush1.bf16.xpose.msra.mxu0 %v559
    %2642 = vmatprep.subr.bf16.mxu0 0
    %2643 = vmatpush2.bf16.xpose.msra.mxu0 0
    %2644 = vmatprep.subr.bf16.mxu0 0
    %2645 = vmatpush2.bf16.xpose.msra.mxu0 0
    %2646 = vmatprep.subr.bf16.mxu0 0
    %2647 = vmatpush2.bf16.xpose.msra.mxu0 0
    %2648 = vmatprep.subr.bf16.mxu0 0
    %2649 = vmatpush2.bf16.xpose.msra.mxu0 0
    %2650 = vmatprep.subr.bf16.mxu0 0
    %2651 = vmatpush2.bf16.xpose.msra.mxu0 0
    %2652 = vmatprep.subr.bf16.mxu0 0
    %2653 = vmatpush2.bf16.xpose.msra.mxu0 0
    %2654 = vmatprep.subr.bf16.mxu0 0
    %2655 = vmatpush2.bf16.xpose.msra.mxu0 0
    %2656 = vmatprep.subr.bf16.mxu0 0
    %2657 = vmatpush2.bf16.xpose.msra.mxu0 0
    %2658 = vmatprep.mubr.bf16.mxu0 0
    %2659 = vmatmul.mubr.bf16.gmra.mxu0 %v2288
    %v2660 = vpop.f32.mrf.mxu0
    %v2661 = vadd.f32 0.0, %v2660
    %v2662 = vpop.f32.mrf.mxu0
    %v2663 = vpop.f32.mrf.mxu0
    %v2664 = vadd.f32 0.0, %v2663
    %v2665 = vpop.f32.mrf.mxu0
    %2666 = vdwg.mxu0
    %2667 = vmatprep.subr.bf16.mxu0 0
    %2668 = vmatpush1.bf16.xpose.msra.mxu0 0
    %2669 = vmatprep.subr.bf16.mxu0 0
    %2670 = vmatpush1.bf16.xpose.msra.mxu0 0
    %2671 = vmatprep.subr.bf16.mxu0 0
    %2672 = vmatpush1.bf16.xpose.msra.mxu0 0
    %2673 = vmatprep.subr.bf16.mxu0 0
    %2674 = vmatpush1.bf16.xpose.msra.mxu0 0
    %2675 = vmatprep.subr.bf16.mxu0 0
    %2676 = vmatpush1.bf16.xpose.msra.mxu0 0
    %2677 = vmatprep.subr.bf16.mxu0 0
    %2678 = vmatpush1.bf16.xpose.msra.mxu0 0
    %2679 = vmatprep.subr.bf16.mxu0 0
    %2680 = vmatpush1.bf16.xpose.msra.mxu0 0
    %2681 = vmatprep.subr.bf16.mxu0 0
    %2682 = vmatpush1.bf16.xpose.msra.mxu0 %v603
    %2683 = vmatprep.subr.bf16.mxu0 0
    %2684 = vmatpush2.bf16.xpose.msra.mxu0 0
    %2685 = vmatprep.subr.bf16.mxu0 0
    %2686 = vmatpush2.bf16.xpose.msra.mxu0 0
    %2687 = vmatprep.subr.bf16.mxu0 0
    %2688 = vmatpush2.bf16.xpose.msra.mxu0 0
    %2689 = vmatprep.subr.bf16.mxu0 0
    %2690 = vmatpush2.bf16.xpose.msra.mxu0 0
    %2691 = vmatprep.subr.bf16.mxu0 0
    %2692 = vmatpush2.bf16.xpose.msra.mxu0 0
    %2693 = vmatprep.subr.bf16.mxu0 0
    %2694 = vmatpush2.bf16.xpose.msra.mxu0 0
    %2695 = vmatprep.subr.bf16.mxu0 0
    %2696 = vmatpush2.bf16.xpose.msra.mxu0 0
    %2697 = vmatprep.subr.bf16.mxu0 0
    %2698 = vmatpush2.bf16.xpose.msra.mxu0 0
    %2699 = vmatprep.mubr.bf16.mxu0 0
    %2700 = vmatmul.mubr.bf16.gmra.mxu0 %v2288
    %v2701 = vpop.f32.mrf.mxu0
    %v2702 = vadd.f32 0.0, %v2701
    %v2703 = vpop.f32.mrf.mxu0
    %v2704 = vpop.f32.mrf.mxu0
    %v2705 = vadd.f32 0.0, %v2704
    %v2706 = vpop.f32.mrf.mxu0
    %2707 = vdwg.mxu0
    %2708 = vmatprep.subr.bf16.mxu0 0
    %2709 = vmatpush1.bf16.xpose.msra.mxu0 0
    %2710 = vmatprep.subr.bf16.mxu0 0
    %2711 = vmatpush1.bf16.xpose.msra.mxu0 0
    %2712 = vmatprep.subr.bf16.mxu0 0
    %2713 = vmatpush1.bf16.xpose.msra.mxu0 0
    %2714 = vmatprep.subr.bf16.mxu0 0
    %2715 = vmatpush1.bf16.xpose.msra.mxu0 0
    %2716 = vmatprep.subr.bf16.mxu0 0
    %2717 = vmatpush1.bf16.xpose.msra.mxu0 0
    %2718 = vmatprep.subr.bf16.mxu0 0
    %2719 = vmatpush1.bf16.xpose.msra.mxu0 0
    %2720 = vmatprep.subr.bf16.mxu0 0
    %2721 = vmatpush1.bf16.xpose.msra.mxu0 0
    %2722 = vmatprep.subr.bf16.mxu0 0
    %2723 = vmatpush1.bf16.xpose.msra.mxu0 %v647
    %2724 = vmatprep.subr.bf16.mxu0 0
    %2725 = vmatpush2.bf16.xpose.msra.mxu0 0
    %2726 = vmatprep.subr.bf16.mxu0 0
    %2727 = vmatpush2.bf16.xpose.msra.mxu0 0
    %2728 = vmatprep.subr.bf16.mxu0 0
    %2729 = vmatpush2.bf16.xpose.msra.mxu0 0
    %2730 = vmatprep.subr.bf16.mxu0 0
    %2731 = vmatpush2.bf16.xpose.msra.mxu0 0
    %2732 = vmatprep.subr.bf16.mxu0 0
    %2733 = vmatpush2.bf16.xpose.msra.mxu0 0
    %2734 = vmatprep.subr.bf16.mxu0 0
    %2735 = vmatpush2.bf16.xpose.msra.mxu0 0
    %2736 = vmatprep.subr.bf16.mxu0 0
    %2737 = vmatpush2.bf16.xpose.msra.mxu0 0
    %2738 = vmatprep.subr.bf16.mxu0 0
    %2739 = vmatpush2.bf16.xpose.msra.mxu0 0
    %2740 = vmatprep.mubr.bf16.mxu0 0
    %2741 = vmatmul.mubr.bf16.gmra.mxu0 %v2288
    %v2742 = vpop.f32.mrf.mxu0
    %v2743 = vadd.f32 0.0, %v2742
    %v2744 = vpop.f32.mrf.mxu0
    %v2745 = vpop.f32.mrf.mxu0
    %v2746 = vadd.f32 0.0, %v2745
    %v2747 = vpop.f32.mrf.mxu0
    %2748 = vdwg.mxu0
    %2749 = vmatprep.subr.bf16.mxu0 0
    %2750 = vmatpush1.bf16.xpose.msra.mxu0 0
    %2751 = vmatprep.subr.bf16.mxu0 0
    %2752 = vmatpush1.bf16.xpose.msra.mxu0 0
    %2753 = vmatprep.subr.bf16.mxu0 0
    %2754 = vmatpush1.bf16.xpose.msra.mxu0 0
    %2755 = vmatprep.subr.bf16.mxu0 0
    %2756 = vmatpush1.bf16.xpose.msra.mxu0 0
    %2757 = vmatprep.subr.bf16.mxu0 0
    %2758 = vmatpush1.bf16.xpose.msra.mxu0 0
    %2759 = vmatprep.subr.bf16.mxu0 0
    %2760 = vmatpush1.bf16.xpose.msra.mxu0 0
    %2761 = vmatprep.subr.bf16.mxu0 0
    %2762 = vmatpush1.bf16.xpose.msra.mxu0 0
    %2763 = vmatprep.subr.bf16.mxu0 0
    %2764 = vmatpush1.bf16.xpose.msra.mxu0 %v691
    %2765 = vmatprep.subr.bf16.mxu0 0
    %2766 = vmatpush2.bf16.xpose.msra.mxu0 0
    %2767 = vmatprep.subr.bf16.mxu0 0
    %2768 = vmatpush2.bf16.xpose.msra.mxu0 0
    %2769 = vmatprep.subr.bf16.mxu0 0
    %2770 = vmatpush2.bf16.xpose.msra.mxu0 0
    %2771 = vmatprep.subr.bf16.mxu0 0
    %2772 = vmatpush2.bf16.xpose.msra.mxu0 0
    %2773 = vmatprep.subr.bf16.mxu0 0
    %2774 = vmatpush2.bf16.xpose.msra.mxu0 0
    %2775 = vmatprep.subr.bf16.mxu0 0
    %2776 = vmatpush2.bf16.xpose.msra.mxu0 0
    %2777 = vmatprep.subr.bf16.mxu0 0
    %2778 = vmatpush2.bf16.xpose.msra.mxu0 0
    %2779 = vmatprep.subr.bf16.mxu0 0
    %2780 = vmatpush2.bf16.xpose.msra.mxu0 0
    %2781 = vmatprep.mubr.bf16.mxu0 0
    %2782 = vmatmul.mubr.bf16.gmra.mxu0 %v2288
    %v2783 = vpop.f32.mrf.mxu0
    %v2784 = vadd.f32 0.0, %v2783
    %v2785 = vpop.f32.mrf.mxu0
    %v2786 = vpop.f32.mrf.mxu0
    %v2787 = vadd.f32 0.0, %v2786
    %v2788 = vpop.f32.mrf.mxu0
    %2789 = vdwg.mxu0
    %2790 = vmatprep.subr.bf16.mxu0 0
    %2791 = vmatpush1.bf16.xpose.msra.mxu0 0
    %2792 = vmatprep.subr.bf16.mxu0 0
    %2793 = vmatpush1.bf16.xpose.msra.mxu0 0
    %2794 = vmatprep.subr.bf16.mxu0 0
    %2795 = vmatpush1.bf16.xpose.msra.mxu0 0
    %2796 = vmatprep.subr.bf16.mxu0 0
    %2797 = vmatpush1.bf16.xpose.msra.mxu0 0
    %2798 = vmatprep.subr.bf16.mxu0 0
    %2799 = vmatpush1.bf16.xpose.msra.mxu0 0
    %2800 = vmatprep.subr.bf16.mxu0 0
    %2801 = vmatpush1.bf16.xpose.msra.mxu0 0
    %2802 = vmatprep.subr.bf16.mxu0 0
    %2803 = vmatpush1.bf16.xpose.msra.mxu0 0
    %2804 = vmatprep.subr.bf16.mxu0 0
    %2805 = vmatpush1.bf16.xpose.msra.mxu0 %v735
    %2806 = vmatprep.subr.bf16.mxu0 0
    %2807 = vmatpush2.bf16.xpose.msra.mxu0 0
    %2808 = vmatprep.subr.bf16.mxu0 0
    %2809 = vmatpush2.bf16.xpose.msra.mxu0 0
    %2810 = vmatprep.subr.bf16.mxu0 0
    %2811 = vmatpush2.bf16.xpose.msra.mxu0 0
    %2812 = vmatprep.subr.bf16.mxu0 0
    %2813 = vmatpush2.bf16.xpose.msra.mxu0 0
    %2814 = vmatprep.subr.bf16.mxu0 0
    %2815 = vmatpush2.bf16.xpose.msra.mxu0 0
    %2816 = vmatprep.subr.bf16.mxu0 0
    %2817 = vmatpush2.bf16.xpose.msra.mxu0 0
    %2818 = vmatprep.subr.bf16.mxu0 0
    %2819 = vmatpush2.bf16.xpose.msra.mxu0 0
    %2820 = vmatprep.subr.bf16.mxu0 0
    %2821 = vmatpush2.bf16.xpose.msra.mxu0 0
    %2822 = vmatprep.mubr.bf16.mxu0 0
    %2823 = vmatmul.mubr.bf16.gmra.mxu0 %v2288
    %v2824 = vpop.f32.mrf.mxu0
    %v2825 = vadd.f32 0.0, %v2824
    %v2826 = vpop.f32.mrf.mxu0
    %v2827 = vpop.f32.mrf.mxu0
    %v2828 = vadd.f32 0.0, %v2827
    %v2829 = vpop.f32.mrf.mxu0
    %2830 = vdwg.mxu0
    %2831 = vmatprep.subr.bf16.mxu0 0
    %2832 = vmatpush1.bf16.xpose.msra.mxu0 0
    %2833 = vmatprep.subr.bf16.mxu0 0
    %2834 = vmatpush1.bf16.xpose.msra.mxu0 0
    %2835 = vmatprep.subr.bf16.mxu0 0
    %2836 = vmatpush1.bf16.xpose.msra.mxu0 0
    %2837 = vmatprep.subr.bf16.mxu0 0
    %2838 = vmatpush1.bf16.xpose.msra.mxu0 0
    %2839 = vmatprep.subr.bf16.mxu0 0
    %2840 = vmatpush1.bf16.xpose.msra.mxu0 0
    %2841 = vmatprep.subr.bf16.mxu0 0
    %2842 = vmatpush1.bf16.xpose.msra.mxu0 0
    %2843 = vmatprep.subr.bf16.mxu0 0
    %2844 = vmatpush1.bf16.xpose.msra.mxu0 0
    %2845 = vmatprep.subr.bf16.mxu0 0
    %2846 = vmatpush1.bf16.xpose.msra.mxu0 %v779
    %2847 = vmatprep.subr.bf16.mxu0 0
    %2848 = vmatpush2.bf16.xpose.msra.mxu0 0
    %2849 = vmatprep.subr.bf16.mxu0 0
    %2850 = vmatpush2.bf16.xpose.msra.mxu0 0
    %2851 = vmatprep.subr.bf16.mxu0 0
    %2852 = vmatpush2.bf16.xpose.msra.mxu0 0
    %2853 = vmatprep.subr.bf16.mxu0 0
    %2854 = vmatpush2.bf16.xpose.msra.mxu0 0
    %2855 = vmatprep.subr.bf16.mxu0 0
    %2856 = vmatpush2.bf16.xpose.msra.mxu0 0
    %2857 = vmatprep.subr.bf16.mxu0 0
    %2858 = vmatpush2.bf16.xpose.msra.mxu0 0
    %2859 = vmatprep.subr.bf16.mxu0 0
    %2860 = vmatpush2.bf16.xpose.msra.mxu0 0
    %2861 = vmatprep.subr.bf16.mxu0 0
    %2862 = vmatpush2.bf16.xpose.msra.mxu0 0
    %2863 = vmatprep.mubr.bf16.mxu0 0
    %2864 = vmatmul.mubr.bf16.gmra.mxu0 %v2288
    %v2865 = vpop.f32.mrf.mxu0
    %v2866 = vadd.f32 0.0, %v2865
    %v2867 = vpop.f32.mrf.mxu0
    %v2868 = vpop.f32.mrf.mxu0
    %v2869 = vadd.f32 0.0, %v2868
    %v2870 = vpop.f32.mrf.mxu0
    %2871 = vdwg.mxu0
    %2872 = vmatprep.subr.bf16.mxu0 0
    %2873 = vmatpush1.bf16.xpose.msra.mxu0 0
    %2874 = vmatprep.subr.bf16.mxu0 0
    %2875 = vmatpush1.bf16.xpose.msra.mxu0 0
    %2876 = vmatprep.subr.bf16.mxu0 0
    %2877 = vmatpush1.bf16.xpose.msra.mxu0 0
    %2878 = vmatprep.subr.bf16.mxu0 0
    %2879 = vmatpush1.bf16.xpose.msra.mxu0 0
    %2880 = vmatprep.subr.bf16.mxu0 0
    %2881 = vmatpush1.bf16.xpose.msra.mxu0 0
    %2882 = vmatprep.subr.bf16.mxu0 0
    %2883 = vmatpush1.bf16.xpose.msra.mxu0 0
    %2884 = vmatprep.subr.bf16.mxu0 0
    %2885 = vmatpush1.bf16.xpose.msra.mxu0 0
    %2886 = vmatprep.subr.bf16.mxu0 0
    %2887 = vmatpush1.bf16.xpose.msra.mxu0 %v823
    %2888 = vmatprep.subr.bf16.mxu0 0
    %2889 = vmatpush2.bf16.xpose.msra.mxu0 0
    %2890 = vmatprep.subr.bf16.mxu0 0
    %2891 = vmatpush2.bf16.xpose.msra.mxu0 0
    %2892 = vmatprep.subr.bf16.mxu0 0
    %2893 = vmatpush2.bf16.xpose.msra.mxu0 0
    %2894 = vmatprep.subr.bf16.mxu0 0
    %2895 = vmatpush2.bf16.xpose.msra.mxu0 0
    %2896 = vmatprep.subr.bf16.mxu0 0
    %2897 = vmatpush2.bf16.xpose.msra.mxu0 0
    %2898 = vmatprep.subr.bf16.mxu0 0
    %2899 = vmatpush2.bf16.xpose.msra.mxu0 0
    %2900 = vmatprep.subr.bf16.mxu0 0
    %2901 = vmatpush2.bf16.xpose.msra.mxu0 0
    %2902 = vmatprep.subr.bf16.mxu0 0
    %2903 = vmatpush2.bf16.xpose.msra.mxu0 0
    %2904 = vmatprep.mubr.bf16.mxu0 0
    %2905 = vmatmul.mubr.bf16.gmra.mxu0 %v2288
    %v2906 = vpop.f32.mrf.mxu0
    %v2907 = vadd.f32 0.0, %v2906
    %v2908 = vpop.f32.mrf.mxu0
    %v2909 = vpop.f32.mrf.mxu0
    %v2910 = vadd.f32 0.0, %v2909
    %v2911 = vpop.f32.mrf.mxu0
    %2912 = vdwg.mxu0
    %2913 = vmatprep.subr.bf16.mxu0 0
    %2914 = vmatpush1.bf16.xpose.msra.mxu0 0
    %2915 = vmatprep.subr.bf16.mxu0 0
    %2916 = vmatpush1.bf16.xpose.msra.mxu0 0
    %2917 = vmatprep.subr.bf16.mxu0 0
    %2918 = vmatpush1.bf16.xpose.msra.mxu0 0
    %2919 = vmatprep.subr.bf16.mxu0 0
    %2920 = vmatpush1.bf16.xpose.msra.mxu0 0
    %2921 = vmatprep.subr.bf16.mxu0 0
    %2922 = vmatpush1.bf16.xpose.msra.mxu0 0
    %2923 = vmatprep.subr.bf16.mxu0 0
    %2924 = vmatpush1.bf16.xpose.msra.mxu0 0
    %2925 = vmatprep.subr.bf16.mxu0 0
    %2926 = vmatpush1.bf16.xpose.msra.mxu0 0
    %2927 = vmatprep.subr.bf16.mxu0 0
    %2928 = vmatpush1.bf16.xpose.msra.mxu0 %v867
    %2929 = vmatprep.subr.bf16.mxu0 0
    %2930 = vmatpush2.bf16.xpose.msra.mxu0 0
    %2931 = vmatprep.subr.bf16.mxu0 0
    %2932 = vmatpush2.bf16.xpose.msra.mxu0 0
    %2933 = vmatprep.subr.bf16.mxu0 0
    %2934 = vmatpush2.bf16.xpose.msra.mxu0 0
    %2935 = vmatprep.subr.bf16.mxu0 0
    %2936 = vmatpush2.bf16.xpose.msra.mxu0 0
    %2937 = vmatprep.subr.bf16.mxu0 0
    %2938 = vmatpush2.bf16.xpose.msra.mxu0 0
    %2939 = vmatprep.subr.bf16.mxu0 0
    %2940 = vmatpush2.bf16.xpose.msra.mxu0 0
    %2941 = vmatprep.subr.bf16.mxu0 0
    %2942 = vmatpush2.bf16.xpose.msra.mxu0 0
    %2943 = vmatprep.subr.bf16.mxu0 0
    %2944 = vmatpush2.bf16.xpose.msra.mxu0 0
    %2945 = vmatprep.mubr.bf16.mxu0 0
    %2946 = vmatmul.mubr.bf16.gmra.mxu0 %v2288
    %v2947 = vpop.f32.mrf.mxu0
    %v2948 = vadd.f32 0.0, %v2947
    %v2949 = vpop.f32.mrf.mxu0
    %v2950 = vpop.f32.mrf.mxu0
    %v2951 = vadd.f32 0.0, %v2950
    %v2952 = vpop.f32.mrf.mxu0
    %2953 = vdwg.mxu0
    %v2954 = vpack.c.bf16 %v2664, %v2661
    %v2955 = vpack.c.bf16 %v2705, %v2702
    %v2956 = vpack.c.bf16 %v2746, %v2743
    %v2957 = vpack.c.bf16 %v2787, %v2784
    %v2958 = vpack.c.bf16 %v2828, %v2825
    %v2959 = vpack.c.bf16 %v2869, %v2866
    %v2960 = vpack.c.bf16 %v2910, %v2907
    %v2961 = vpack.c.bf16 %v2951, %v2948
    %v2963 = vsel %vm923, %v2618, 0
    %2965 = vmatprep.subr.bf16.mxu0 0
    %2966 = vmatpush1.bf16.xpose.msra.mxu0 0
    %2967 = vmatprep.subr.bf16.mxu0 0
    %2968 = vmatpush1.bf16.xpose.msra.mxu0 0
    %2969 = vmatprep.subr.bf16.mxu0 0
    %2970 = vmatpush1.bf16.xpose.msra.mxu0 0
    %2971 = vmatprep.subr.bf16.mxu0 0
    %2972 = vmatpush1.bf16.xpose.msra.mxu0 0
    %2973 = vmatprep.subr.bf16.mxu0 0
    %2974 = vmatpush1.bf16.xpose.msra.mxu0 0
    %2975 = vmatprep.subr.bf16.mxu0 0
    %2976 = vmatpush1.bf16.xpose.msra.mxu0 0
    %2977 = vmatprep.subr.bf16.mxu0 0
    %2978 = vmatpush1.bf16.xpose.msra.mxu0 0
    %2979 = vmatprep.subr.bf16.mxu0 0
    %2980 = vmatpush1.bf16.xpose.msra.mxu0 %v2963
    %2981 = vmatprep.subr.bf16.mxu0 0
    %2982 = vmatpush2.bf16.xpose.msra.mxu0 0
    %2983 = vmatprep.subr.bf16.mxu0 0
    %2984 = vmatpush2.bf16.xpose.msra.mxu0 0
    %2985 = vmatprep.subr.bf16.mxu0 0
    %2986 = vmatpush2.bf16.xpose.msra.mxu0 0
    %2987 = vmatprep.subr.bf16.mxu0 0
    %2988 = vmatpush2.bf16.xpose.msra.mxu0 0
    %2989 = vmatprep.subr.bf16.mxu0 0
    %2990 = vmatpush2.bf16.xpose.msra.mxu0 0
    %2991 = vmatprep.subr.bf16.mxu0 0
    %2992 = vmatpush2.bf16.xpose.msra.mxu0 0
    %2993 = vmatprep.subr.bf16.mxu0 0
    %2994 = vmatpush2.bf16.xpose.msra.mxu0 0
    %2995 = vmatprep.subr.bf16.mxu0 0
    %2996 = vmatpush2.bf16.xpose.msra.mxu0 0
    %2997 = vmatprep.mubr.bf16.mxu0 0
    %2998 = vmatmul.mubr.bf16.gmra.mxu0 %v925
    %v2999 = vpop.f32.mrf.mxu0
    %v3000 = vadd.f32 0.0, %v2999
    %v3001 = vpop.f32.mrf.mxu0
    %v3002 = vpop.f32.mrf.mxu0
    %v3003 = vadd.f32 0.0, %v3002
    %v3004 = vpop.f32.mrf.mxu0
    %3005 = vdwg.mxu0
    %v3007 = vsel %vm923, %v2619, 0
    %3009 = vmatprep.subr.bf16.mxu0 0
    %3010 = vmatpush1.bf16.xpose.msra.mxu0 0
    %3011 = vmatprep.subr.bf16.mxu0 0
    %3012 = vmatpush1.bf16.xpose.msra.mxu0 0
    %3013 = vmatprep.subr.bf16.mxu0 0
    %3014 = vmatpush1.bf16.xpose.msra.mxu0 0
    %3015 = vmatprep.subr.bf16.mxu0 0
    %3016 = vmatpush1.bf16.xpose.msra.mxu0 0
    %3017 = vmatprep.subr.bf16.mxu0 0
    %3018 = vmatpush1.bf16.xpose.msra.mxu0 0
    %3019 = vmatprep.subr.bf16.mxu0 0
    %3020 = vmatpush1.bf16.xpose.msra.mxu0 0
    %3021 = vmatprep.subr.bf16.mxu0 0
    %3022 = vmatpush1.bf16.xpose.msra.mxu0 0
    %3023 = vmatprep.subr.bf16.mxu0 0
    %3024 = vmatpush1.bf16.xpose.msra.mxu0 %v3007
    %3025 = vmatprep.subr.bf16.mxu0 0
    %3026 = vmatpush2.bf16.xpose.msra.mxu0 0
    %3027 = vmatprep.subr.bf16.mxu0 0
    %3028 = vmatpush2.bf16.xpose.msra.mxu0 0
    %3029 = vmatprep.subr.bf16.mxu0 0
    %3030 = vmatpush2.bf16.xpose.msra.mxu0 0
    %3031 = vmatprep.subr.bf16.mxu0 0
    %3032 = vmatpush2.bf16.xpose.msra.mxu0 0
    %3033 = vmatprep.subr.bf16.mxu0 0
    %3034 = vmatpush2.bf16.xpose.msra.mxu0 0
    %3035 = vmatprep.subr.bf16.mxu0 0
    %3036 = vmatpush2.bf16.xpose.msra.mxu0 0
    %3037 = vmatprep.subr.bf16.mxu0 0
    %3038 = vmatpush2.bf16.xpose.msra.mxu0 0
    %3039 = vmatprep.subr.bf16.mxu0 0
    %3040 = vmatpush2.bf16.xpose.msra.mxu0 0
    %3041 = vmatprep.mubr.bf16.mxu0 0
    %3042 = vmatmul.mubr.bf16.gmra.mxu0 %v977
    %v3043 = vpop.f32.mrf.mxu0
    %v3044 = vadd.f32 0.0, %v3043
    %v3045 = vpop.f32.mrf.mxu0
    %v3046 = vpop.f32.mrf.mxu0
    %v3047 = vadd.f32 0.0, %v3046
    %v3048 = vpop.f32.mrf.mxu0
    %3049 = vdwg.mxu0
    %v3051 = vsel %vm923, %v2620, 0
    %3053 = vmatprep.subr.bf16.mxu0 0
    %3054 = vmatpush1.bf16.xpose.msra.mxu0 0
    %3055 = vmatprep.subr.bf16.mxu0 0
    %3056 = vmatpush1.bf16.xpose.msra.mxu0 0
    %3057 = vmatprep.subr.bf16.mxu0 0
    %3058 = vmatpush1.bf16.xpose.msra.mxu0 0
    %3059 = vmatprep.subr.bf16.mxu0 0
    %3060 = vmatpush1.bf16.xpose.msra.mxu0 0
    %3061 = vmatprep.subr.bf16.mxu0 0
    %3062 = vmatpush1.bf16.xpose.msra.mxu0 0
    %3063 = vmatprep.subr.bf16.mxu0 0
    %3064 = vmatpush1.bf16.xpose.msra.mxu0 0
    %3065 = vmatprep.subr.bf16.mxu0 0
    %3066 = vmatpush1.bf16.xpose.msra.mxu0 0
    %3067 = vmatprep.subr.bf16.mxu0 0
    %3068 = vmatpush1.bf16.xpose.msra.mxu0 %v3051
    %3069 = vmatprep.subr.bf16.mxu0 0
    %3070 = vmatpush2.bf16.xpose.msra.mxu0 0
    %3071 = vmatprep.subr.bf16.mxu0 0
    %3072 = vmatpush2.bf16.xpose.msra.mxu0 0
    %3073 = vmatprep.subr.bf16.mxu0 0
    %3074 = vmatpush2.bf16.xpose.msra.mxu0 0
    %3075 = vmatprep.subr.bf16.mxu0 0
    %3076 = vmatpush2.bf16.xpose.msra.mxu0 0
    %3077 = vmatprep.subr.bf16.mxu0 0
    %3078 = vmatpush2.bf16.xpose.msra.mxu0 0
    %3079 = vmatprep.subr.bf16.mxu0 0
    %3080 = vmatpush2.bf16.xpose.msra.mxu0 0
    %3081 = vmatprep.subr.bf16.mxu0 0
    %3082 = vmatpush2.bf16.xpose.msra.mxu0 0
    %3083 = vmatprep.subr.bf16.mxu0 0
    %3084 = vmatpush2.bf16.xpose.msra.mxu0 0
    %3085 = vmatprep.mubr.bf16.mxu0 0
    %3086 = vmatmul.mubr.bf16.gmra.mxu0 %v1029
    %v3087 = vpop.f32.mrf.mxu0
    %v3088 = vadd.f32 0.0, %v3087
    %v3089 = vpop.f32.mrf.mxu0
    %v3090 = vpop.f32.mrf.mxu0
    %v3091 = vadd.f32 0.0, %v3090
    %v3092 = vpop.f32.mrf.mxu0
    %3093 = vdwg.mxu0
    %v3095 = vsel %vm923, %v2621, 0
    %3097 = vmatprep.subr.bf16.mxu0 0
    %3098 = vmatpush1.bf16.xpose.msra.mxu0 0
    %3099 = vmatprep.subr.bf16.mxu0 0
    %3100 = vmatpush1.bf16.xpose.msra.mxu0 0
    %3101 = vmatprep.subr.bf16.mxu0 0
    %3102 = vmatpush1.bf16.xpose.msra.mxu0 0
    %3103 = vmatprep.subr.bf16.mxu0 0
    %3104 = vmatpush1.bf16.xpose.msra.mxu0 0
    %3105 = vmatprep.subr.bf16.mxu0 0
    %3106 = vmatpush1.bf16.xpose.msra.mxu0 0
    %3107 = vmatprep.subr.bf16.mxu0 0
    %3108 = vmatpush1.bf16.xpose.msra.mxu0 0
    %3109 = vmatprep.subr.bf16.mxu0 0
    %3110 = vmatpush1.bf16.xpose.msra.mxu0 0
    %3111 = vmatprep.subr.bf16.mxu0 0
    %3112 = vmatpush1.bf16.xpose.msra.mxu0 %v3095
    %3113 = vmatprep.subr.bf16.mxu0 0
    %3114 = vmatpush2.bf16.xpose.msra.mxu0 0
    %3115 = vmatprep.subr.bf16.mxu0 0
    %3116 = vmatpush2.bf16.xpose.msra.mxu0 0
    %3117 = vmatprep.subr.bf16.mxu0 0
    %3118 = vmatpush2.bf16.xpose.msra.mxu0 0
    %3119 = vmatprep.subr.bf16.mxu0 0
    %3120 = vmatpush2.bf16.xpose.msra.mxu0 0
    %3121 = vmatprep.subr.bf16.mxu0 0
    %3122 = vmatpush2.bf16.xpose.msra.mxu0 0
    %3123 = vmatprep.subr.bf16.mxu0 0
    %3124 = vmatpush2.bf16.xpose.msra.mxu0 0
    %3125 = vmatprep.subr.bf16.mxu0 0
    %3126 = vmatpush2.bf16.xpose.msra.mxu0 0
    %3127 = vmatprep.subr.bf16.mxu0 0
    %3128 = vmatpush2.bf16.xpose.msra.mxu0 0
    %3129 = vmatprep.mubr.bf16.mxu0 0
    %3130 = vmatmul.mubr.bf16.gmra.mxu0 %v1081
    %v3131 = vpop.f32.mrf.mxu0
    %v3132 = vadd.f32 0.0, %v3131
    %v3133 = vpop.f32.mrf.mxu0
    %v3134 = vpop.f32.mrf.mxu0
    %v3135 = vadd.f32 0.0, %v3134
    %v3136 = vpop.f32.mrf.mxu0
    %3137 = vdwg.mxu0
    %v3139 = vsel %vm923, %v2622, 0
    %3141 = vmatprep.subr.bf16.mxu0 0
    %3142 = vmatpush1.bf16.xpose.msra.mxu0 0
    %3143 = vmatprep.subr.bf16.mxu0 0
    %3144 = vmatpush1.bf16.xpose.msra.mxu0 0
    %3145 = vmatprep.subr.bf16.mxu0 0
    %3146 = vmatpush1.bf16.xpose.msra.mxu0 0
    %3147 = vmatprep.subr.bf16.mxu0 0
    %3148 = vmatpush1.bf16.xpose.msra.mxu0 0
    %3149 = vmatprep.subr.bf16.mxu0 0
    %3150 = vmatpush1.bf16.xpose.msra.mxu0 0
    %3151 = vmatprep.subr.bf16.mxu0 0
    %3152 = vmatpush1.bf16.xpose.msra.mxu0 0
    %3153 = vmatprep.subr.bf16.mxu0 0
    %3154 = vmatpush1.bf16.xpose.msra.mxu0 0
    %3155 = vmatprep.subr.bf16.mxu0 0
    %3156 = vmatpush1.bf16.xpose.msra.mxu0 %v3139
    %3157 = vmatprep.subr.bf16.mxu0 0
    %3158 = vmatpush2.bf16.xpose.msra.mxu0 0
    %3159 = vmatprep.subr.bf16.mxu0 0
    %3160 = vmatpush2.bf16.xpose.msra.mxu0 0
    %3161 = vmatprep.subr.bf16.mxu0 0
    %3162 = vmatpush2.bf16.xpose.msra.mxu0 0
    %3163 = vmatprep.subr.bf16.mxu0 0
    %3164 = vmatpush2.bf16.xpose.msra.mxu0 0
    %3165 = vmatprep.subr.bf16.mxu0 0
    %3166 = vmatpush2.bf16.xpose.msra.mxu0 0
    %3167 = vmatprep.subr.bf16.mxu0 0
    %3168 = vmatpush2.bf16.xpose.msra.mxu0 0
    %3169 = vmatprep.subr.bf16.mxu0 0
    %3170 = vmatpush2.bf16.xpose.msra.mxu0 0
    %3171 = vmatprep.subr.bf16.mxu0 0
    %3172 = vmatpush2.bf16.xpose.msra.mxu0 0
    %3173 = vmatprep.mubr.bf16.mxu0 0
    %3174 = vmatmul.mubr.bf16.gmra.mxu0 %v1133
    %v3175 = vpop.f32.mrf.mxu0
    %v3176 = vadd.f32 0.0, %v3175
    %v3177 = vpop.f32.mrf.mxu0
    %v3178 = vpop.f32.mrf.mxu0
    %v3179 = vadd.f32 0.0, %v3178
    %v3180 = vpop.f32.mrf.mxu0
    %3181 = vdwg.mxu0
    %v3183 = vsel %vm923, %v2623, 0
    %3185 = vmatprep.subr.bf16.mxu0 0
    %3186 = vmatpush1.bf16.xpose.msra.mxu0 0
    %3187 = vmatprep.subr.bf16.mxu0 0
    %3188 = vmatpush1.bf16.xpose.msra.mxu0 0
    %3189 = vmatprep.subr.bf16.mxu0 0
    %3190 = vmatpush1.bf16.xpose.msra.mxu0 0
    %3191 = vmatprep.subr.bf16.mxu0 0
    %3192 = vmatpush1.bf16.xpose.msra.mxu0 0
    %3193 = vmatprep.subr.bf16.mxu0 0
    %3194 = vmatpush1.bf16.xpose.msra.mxu0 0
    %3195 = vmatprep.subr.bf16.mxu0 0
    %3196 = vmatpush1.bf16.xpose.msra.mxu0 0
    %3197 = vmatprep.subr.bf16.mxu0 0
    %3198 = vmatpush1.bf16.xpose.msra.mxu0 0
    %3199 = vmatprep.subr.bf16.mxu0 0
    %3200 = vmatpush1.bf16.xpose.msra.mxu0 %v3183
    %3201 = vmatprep.subr.bf16.mxu0 0
    %3202 = vmatpush2.bf16.xpose.msra.mxu0 0
    %3203 = vmatprep.subr.bf16.mxu0 0
    %3204 = vmatpush2.bf16.xpose.msra.mxu0 0
    %3205 = vmatprep.subr.bf16.mxu0 0
    %3206 = vmatpush2.bf16.xpose.msra.mxu0 0
    %3207 = vmatprep.subr.bf16.mxu0 0
    %3208 = vmatpush2.bf16.xpose.msra.mxu0 0
    %3209 = vmatprep.subr.bf16.mxu0 0
    %3210 = vmatpush2.bf16.xpose.msra.mxu0 0
    %3211 = vmatprep.subr.bf16.mxu0 0
    %3212 = vmatpush2.bf16.xpose.msra.mxu0 0
    %3213 = vmatprep.subr.bf16.mxu0 0
    %3214 = vmatpush2.bf16.xpose.msra.mxu0 0
    %3215 = vmatprep.subr.bf16.mxu0 0
    %3216 = vmatpush2.bf16.xpose.msra.mxu0 0
    %3217 = vmatprep.mubr.bf16.mxu0 0
    %3218 = vmatmul.mubr.bf16.gmra.mxu0 %v1185
    %v3219 = vpop.f32.mrf.mxu0
    %v3220 = vadd.f32 0.0, %v3219
    %v3221 = vpop.f32.mrf.mxu0
    %v3222 = vpop.f32.mrf.mxu0
    %v3223 = vadd.f32 0.0, %v3222
    %v3224 = vpop.f32.mrf.mxu0
    %3225 = vdwg.mxu0
    %v3227 = vsel %vm923, %v2624, 0
    %3229 = vmatprep.subr.bf16.mxu0 0
    %3230 = vmatpush1.bf16.xpose.msra.mxu0 0
    %3231 = vmatprep.subr.bf16.mxu0 0
    %3232 = vmatpush1.bf16.xpose.msra.mxu0 0
    %3233 = vmatprep.subr.bf16.mxu0 0
    %3234 = vmatpush1.bf16.xpose.msra.mxu0 0
    %3235 = vmatprep.subr.bf16.mxu0 0
    %3236 = vmatpush1.bf16.xpose.msra.mxu0 0
    %3237 = vmatprep.subr.bf16.mxu0 0
    %3238 = vmatpush1.bf16.xpose.msra.mxu0 0
    %3239 = vmatprep.subr.bf16.mxu0 0
    %3240 = vmatpush1.bf16.xpose.msra.mxu0 0
    %3241 = vmatprep.subr.bf16.mxu0 0
    %3242 = vmatpush1.bf16.xpose.msra.mxu0 0
    %3243 = vmatprep.subr.bf16.mxu0 0
    %3244 = vmatpush1.bf16.xpose.msra.mxu0 %v3227
    %3245 = vmatprep.subr.bf16.mxu0 0
    %3246 = vmatpush2.bf16.xpose.msra.mxu0 0
    %3247 = vmatprep.subr.bf16.mxu0 0
    %3248 = vmatpush2.bf16.xpose.msra.mxu0 0
    %3249 = vmatprep.subr.bf16.mxu0 0
    %3250 = vmatpush2.bf16.xpose.msra.mxu0 0
    %3251 = vmatprep.subr.bf16.mxu0 0
    %3252 = vmatpush2.bf16.xpose.msra.mxu0 0
    %3253 = vmatprep.subr.bf16.mxu0 0
    %3254 = vmatpush2.bf16.xpose.msra.mxu0 0
    %3255 = vmatprep.subr.bf16.mxu0 0
    %3256 = vmatpush2.bf16.xpose.msra.mxu0 0
    %3257 = vmatprep.subr.bf16.mxu0 0
    %3258 = vmatpush2.bf16.xpose.msra.mxu0 0
    %3259 = vmatprep.subr.bf16.mxu0 0
    %3260 = vmatpush2.bf16.xpose.msra.mxu0 0
    %3261 = vmatprep.mubr.bf16.mxu0 0
    %3262 = vmatmul.mubr.bf16.gmra.mxu0 %v1237
    %v3263 = vpop.f32.mrf.mxu0
    %v3264 = vadd.f32 0.0, %v3263
    %v3265 = vpop.f32.mrf.mxu0
    %v3266 = vpop.f32.mrf.mxu0
    %v3267 = vadd.f32 0.0, %v3266
    %v3268 = vpop.f32.mrf.mxu0
    %3269 = vdwg.mxu0
    %v3271 = vsel %vm923, %v2625, 0
    %3273 = vmatprep.subr.bf16.mxu0 0
    %3274 = vmatpush1.bf16.xpose.msra.mxu0 0
    %3275 = vmatprep.subr.bf16.mxu0 0
    %3276 = vmatpush1.bf16.xpose.msra.mxu0 0
    %3277 = vmatprep.subr.bf16.mxu0 0
    %3278 = vmatpush1.bf16.xpose.msra.mxu0 0
    %3279 = vmatprep.subr.bf16.mxu0 0
    %3280 = vmatpush1.bf16.xpose.msra.mxu0 0
    %3281 = vmatprep.subr.bf16.mxu0 0
    %3282 = vmatpush1.bf16.xpose.msra.mxu0 0
    %3283 = vmatprep.subr.bf16.mxu0 0
    %3284 = vmatpush1.bf16.xpose.msra.mxu0 0
    %3285 = vmatprep.subr.bf16.mxu0 0
    %3286 = vmatpush1.bf16.xpose.msra.mxu0 0
    %3287 = vmatprep.subr.bf16.mxu0 0
    %3288 = vmatpush1.bf16.xpose.msra.mxu0 %v3271
    %3289 = vmatprep.subr.bf16.mxu0 0
    %3290 = vmatpush2.bf16.xpose.msra.mxu0 0
    %3291 = vmatprep.subr.bf16.mxu0 0
    %3292 = vmatpush2.bf16.xpose.msra.mxu0 0
    %3293 = vmatprep.subr.bf16.mxu0 0
    %3294 = vmatpush2.bf16.xpose.msra.mxu0 0
    %3295 = vmatprep.subr.bf16.mxu0 0
    %3296 = vmatpush2.bf16.xpose.msra.mxu0 0
    %3297 = vmatprep.subr.bf16.mxu0 0
    %3298 = vmatpush2.bf16.xpose.msra.mxu0 0
    %3299 = vmatprep.subr.bf16.mxu0 0
    %3300 = vmatpush2.bf16.xpose.msra.mxu0 0
    %3301 = vmatprep.subr.bf16.mxu0 0
    %3302 = vmatpush2.bf16.xpose.msra.mxu0 0
    %3303 = vmatprep.subr.bf16.mxu0 0
    %3304 = vmatpush2.bf16.xpose.msra.mxu0 0
    %3305 = vmatprep.mubr.bf16.mxu0 0
    %3306 = vmatmul.mubr.bf16.gmra.mxu0 %v1289
    %v3307 = vpop.f32.mrf.mxu0
    %v3308 = vadd.f32 0.0, %v3307
    %v3309 = vpop.f32.mrf.mxu0
    %v3310 = vpop.f32.mrf.mxu0
    %v3311 = vadd.f32 0.0, %v3310
    %v3312 = vpop.f32.mrf.mxu0
    %3313 = vdwg.mxu0
    %v3314 = vsel %vm87, %v3000, -inf
    %3315 = vmax.xlane.f32.xlu0 %v3314
    %v3316 = vpop.xlane.xlu0 %3315
    %v3317 = vsel %vm87, %v3003, -inf
    %3318 = vmax.xlane.f32.xlu0 %v3317
    %v3319 = vpop.xlane.xlu0 %3318
    %v3320 = vsel %vm87, %v3044, -inf
    %3321 = vmax.xlane.f32.xlu0 %v3320
    %v3322 = vpop.xlane.xlu0 %3321
    %v3323 = vsel %vm87, %v3047, -inf
    %3324 = vmax.xlane.f32.xlu0 %v3323
    %v3325 = vpop.xlane.xlu0 %3324
    %v3326 = vsel %vm87, %v3088, -inf
    %3327 = vmax.xlane.f32.xlu0 %v3326
    %v3328 = vpop.xlane.xlu0 %3327
    %v3329 = vsel %vm87, %v3091, -inf
    %3330 = vmax.xlane.f32.xlu0 %v3329
    %v3331 = vpop.xlane.xlu0 %3330
    %v3332 = vsel %vm87, %v3132, -inf
    %3333 = vmax.xlane.f32.xlu0 %v3332
    %v3334 = vpop.xlane.xlu0 %3333
    %v3335 = vsel %vm87, %v3135, -inf
    %3336 = vmax.xlane.f32.xlu0 %v3335
    %v3337 = vpop.xlane.xlu0 %3336
    %v3338 = vsel %vm87, %v3176, -inf
    %3339 = vmax.xlane.f32.xlu0 %v3338
    %v3340 = vpop.xlane.xlu0 %3339
    %v3341 = vsel %vm87, %v3179, -inf
    %3342 = vmax.xlane.f32.xlu0 %v3341
    %v3343 = vpop.xlane.xlu0 %3342
    %v3344 = vsel %vm87, %v3220, -inf
    %3345 = vmax.xlane.f32.xlu0 %v3344
    %v3346 = vpop.xlane.xlu0 %3345
    %v3347 = vsel %vm87, %v3223, -inf
    %3348 = vmax.xlane.f32.xlu0 %v3347
    %v3349 = vpop.xlane.xlu0 %3348
    %v3350 = vsel %vm87, %v3264, -inf
    %3351 = vmax.xlane.f32.xlu0 %v3350
    %v3352 = vpop.xlane.xlu0 %3351
    %v3353 = vsel %vm87, %v3267, -inf
    %3354 = vmax.xlane.f32.xlu0 %v3353
    %v3355 = vpop.xlane.xlu0 %3354
    %v3356 = vsel %vm87, %v3308, -inf
    %3357 = vmax.xlane.f32.xlu0 %v3356
    %v3358 = vpop.xlane.xlu0 %3357
    %v3359 = vsel %vm87, %v3311, -inf
    %3360 = vmax.xlane.f32.xlu0 %v3359
    %v3361 = vpop.xlane.xlu0 %3360
    %v3362 = vsub.f32 %v3000, %v3316
    %v3363 = vsub.f32 %v3003, %v3319
    %v3364 = vsub.f32 %v3044, %v3322
    %v3365 = vsub.f32 %v3047, %v3325
    %v3366 = vsub.f32 %v3088, %v3328
    %v3367 = vsub.f32 %v3091, %v3331
    %v3368 = vsub.f32 %v3132, %v3334
    %v3369 = vsub.f32 %v3135, %v3337
    %v3370 = vsub.f32 %v3176, %v3340
    %v3371 = vsub.f32 %v3179, %v3343
    %v3372 = vsub.f32 %v3220, %v3346
    %v3373 = vsub.f32 %v3223, %v3349
    %v3374 = vsub.f32 %v3264, %v3352
    %v3375 = vsub.f32 %v3267, %v3355
    %v3376 = vsub.f32 %v3308, %v3358
    %v3377 = vsub.f32 %v3311, %v3361
    %v3378 = vmul.f32 %v3362, 1.442695
    %v3379 = vpow.pop %v3378
    %v3380 = vmul.f32 %v3363, 1.442695
    %v3381 = vpow.pop %v3380
    %v3382 = vmul.f32 %v3364, 1.442695
    %v3383 = vpow.pop %v3382
    %v3384 = vmul.f32 %v3365, 1.442695
    %v3385 = vpow.pop %v3384
    %v3386 = vmul.f32 %v3366, 1.442695
    %v3387 = vpow.pop %v3386
    %v3388 = vmul.f32 %v3367, 1.442695
    %v3389 = vpow.pop %v3388
    %v3390 = vmul.f32 %v3368, 1.442695
    %v3391 = vpow.pop %v3390
    %v3392 = vmul.f32 %v3369, 1.442695
    %v3393 = vpow.pop %v3392
    %v3394 = vmul.f32 %v3370, 1.442695
    %v3395 = vpow.pop %v3394
    %v3396 = vmul.f32 %v3371, 1.442695
    %v3397 = vpow.pop %v3396
    %v3398 = vmul.f32 %v3372, 1.442695
    %v3399 = vpow.pop %v3398
    %v3400 = vmul.f32 %v3373, 1.442695
    %v3401 = vpow.pop %v3400
    %v3402 = vmul.f32 %v3374, 1.442695
    %v3403 = vpow.pop %v3402
    %v3404 = vmul.f32 %v3375, 1.442695
    %v3405 = vpow.pop %v3404
    %v3406 = vmul.f32 %v3376, 1.442695
    %v3407 = vpow.pop %v3406
    %v3408 = vmul.f32 %v3377, 1.442695
    %v3409 = vpow.pop %v3408
    %v3410 = vsel %vm87, %v3379, 0.0
    %3411 = vadd.xlane.f32.xlu0 %v3410
    %v3412 = vpop.xlane.xlu0 %3411
    %v3413 = vsel %vm87, %v3381, 0.0
    %3414 = vadd.xlane.f32.xlu0 %v3413
    %v3415 = vpop.xlane.xlu0 %3414
    %v3416 = vsel %vm87, %v3383, 0.0
    %3417 = vadd.xlane.f32.xlu0 %v3416
    %v3418 = vpop.xlane.xlu0 %3417
    %v3419 = vsel %vm87, %v3385, 0.0
    %3420 = vadd.xlane.f32.xlu0 %v3419
    %v3421 = vpop.xlane.xlu0 %3420
    %v3422 = vsel %vm87, %v3387, 0.0
    %3423 = vadd.xlane.f32.xlu0 %v3422
    %v3424 = vpop.xlane.xlu0 %3423
    %v3425 = vsel %vm87, %v3389, 0.0
    %3426 = vadd.xlane.f32.xlu0 %v3425
    %v3427 = vpop.xlane.xlu0 %3426
    %v3428 = vsel %vm87, %v3391, 0.0
    %3429 = vadd.xlane.f32.xlu0 %v3428
    %v3430 = vpop.xlane.xlu0 %3429
    %v3431 = vsel %vm87, %v3393, 0.0
    %3432 = vadd.xlane.f32.xlu0 %v3431
    %v3433 = vpop.xlane.xlu0 %3432
    %v3434 = vsel %vm87, %v3395, 0.0
    %3435 = vadd.xlane.f32.xlu0 %v3434
    %v3436 = vpop.xlane.xlu0 %3435
    %v3437 = vsel %vm87, %v3397, 0.0
    %3438 = vadd.xlane.f32.xlu0 %v3437
    %v3439 = vpop.xlane.xlu0 %3438
    %v3440 = vsel %vm87, %v3399, 0.0
    %3441 = vadd.xlane.f32.xlu0 %v3440
    %v3442 = vpop.xlane.xlu0 %3441
    %v3443 = vsel %vm87, %v3401, 0.0
    %3444 = vadd.xlane.f32.xlu0 %v3443
    %v3445 = vpop.xlane.xlu0 %3444
    %v3446 = vsel %vm87, %v3403, 0.0
    %3447 = vadd.xlane.f32.xlu0 %v3446
    %v3448 = vpop.xlane.xlu0 %3447
    %v3449 = vsel %vm87, %v3405, 0.0
    %3450 = vadd.xlane.f32.xlu0 %v3449
    %v3451 = vpop.xlane.xlu0 %3450
    %v3452 = vsel %vm87, %v3407, 0.0
    %3453 = vadd.xlane.f32.xlu0 %v3452
    %v3454 = vpop.xlane.xlu0 %3453
    %v3455 = vsel %vm87, %v3409, 0.0
    %3456 = vadd.xlane.f32.xlu0 %v3455
    %v3457 = vpop.xlane.xlu0 %3456
    %v3458 = vrcp.pop %v3412
    %v3459 = vrcp.pop %v3415
    %v3460 = vrcp.pop %v3418
    %v3461 = vrcp.pop %v3421
    %v3462 = vrcp.pop %v3424
    %v3463 = vrcp.pop %v3427
    %v3464 = vrcp.pop %v3430
    %v3465 = vrcp.pop %v3433
    %v3466 = vrcp.pop %v3436
    %v3467 = vrcp.pop %v3439
    %v3468 = vrcp.pop %v3442
    %v3469 = vrcp.pop %v3445
    %v3470 = vrcp.pop %v3448
    %v3471 = vrcp.pop %v3451
    %v3472 = vrcp.pop %v3454
    %v3473 = vrcp.pop %v3457
    %v3474 = vmul.f32 %v3379, %v3458
    %v3475 = vmul.f32 %v3381, %v3459
    %v3476 = vmul.f32 %v3383, %v3460
    %v3477 = vmul.f32 %v3385, %v3461
    %v3478 = vmul.f32 %v3387, %v3462
    %v3479 = vmul.f32 %v3389, %v3463
    %v3480 = vmul.f32 %v3391, %v3464
    %v3481 = vmul.f32 %v3393, %v3465
    %v3482 = vmul.f32 %v3395, %v3466
    %v3483 = vmul.f32 %v3397, %v3467
    %v3484 = vmul.f32 %v3399, %v3468
    %v3485 = vmul.f32 %v3401, %v3469
    %v3486 = vmul.f32 %v3403, %v3470
    %v3487 = vmul.f32 %v3405, %v3471
    %v3488 = vmul.f32 %v3407, %v3472
    %v3489 = vmul.f32 %v3409, %v3473
    %v3490 = vpack.c.bf16 %v3475, %v3474
    %v3491 = vpack.c.bf16 %v3477, %v3476
    %v3492 = vpack.c.bf16 %v3479, %v3478
    %v3493 = vpack.c.bf16 %v3481, %v3480
    %v3494 = vpack.c.bf16 %v3483, %v3482
    %v3495 = vpack.c.bf16 %v3485, %v3484
    %v3496 = vpack.c.bf16 %v3487, %v3486
    %v3497 = vpack.c.bf16 %v3489, %v3488
    %v3499 = vsel %vm87, %v3490, 0
    %3501 = vmatprep.subr.bf16.mxu0 0
    %3502 = vmatpush1.bf16.msra.mxu0 0
    %3503 = vmatprep.subr.bf16.mxu0 0
    %3504 = vmatpush1.bf16.msra.mxu0 0
    %3505 = vmatprep.subr.bf16.mxu0 0
    %3506 = vmatpush1.bf16.msra.mxu0 0
    %3507 = vmatprep.subr.bf16.mxu0 0
    %3508 = vmatpush1.bf16.msra.mxu0 0
    %3509 = vmatprep.subr.bf16.mxu0 0
    %3510 = vmatpush1.bf16.msra.mxu0 0
    %3511 = vmatprep.subr.bf16.mxu0 0
    %3512 = vmatpush1.bf16.msra.mxu0 0
    %3513 = vmatprep.subr.bf16.mxu0 0
    %3514 = vmatpush1.bf16.msra.mxu0 0
    %3515 = vmatprep.subr.bf16.mxu0 0
    %3516 = vmatpush1.bf16.msra.mxu0 %v2954
    %3517 = vmatprep.subr.bf16.mxu0 0
    %3518 = vmatpush2.bf16.msra.mxu0 0
    %3519 = vmatprep.subr.bf16.mxu0 0
    %3520 = vmatpush2.bf16.msra.mxu0 0
    %3521 = vmatprep.subr.bf16.mxu0 0
    %3522 = vmatpush2.bf16.msra.mxu0 0
    %3523 = vmatprep.subr.bf16.mxu0 0
    %3524 = vmatpush2.bf16.msra.mxu0 0
    %3525 = vmatprep.subr.bf16.mxu0 0
    %3526 = vmatpush2.bf16.msra.mxu0 0
    %3527 = vmatprep.subr.bf16.mxu0 0
    %3528 = vmatpush2.bf16.msra.mxu0 0
    %3529 = vmatprep.subr.bf16.mxu0 0
    %3530 = vmatpush2.bf16.msra.mxu0 0
    %3531 = vmatprep.subr.bf16.mxu0 0
    %3532 = vmatpush2.bf16.msra.mxu0 0
    %3533 = vmatprep.mubr.bf16.mxu0 0
    %3534 = vmatmul.mubr.bf16.gmra.mxu0 %v3499
    %v3535 = vpop.f32.mrf.mxu0
    %v3536 = vadd.f32 0.0, %v3535
    %v3537 = vpop.f32.mrf.mxu0
    %v3538 = vpop.f32.mrf.mxu0
    %v3539 = vadd.f32 0.0, %v3538
    %v3540 = vpop.f32.mrf.mxu0
    %3541 = vdwg.mxu0
    %v3543 = vsel %vm87, %v3491, 0
    %3545 = vmatprep.subr.bf16.mxu0 0
    %3546 = vmatpush1.bf16.msra.mxu0 0
    %3547 = vmatprep.subr.bf16.mxu0 0
    %3548 = vmatpush1.bf16.msra.mxu0 0
    %3549 = vmatprep.subr.bf16.mxu0 0
    %3550 = vmatpush1.bf16.msra.mxu0 0
    %3551 = vmatprep.subr.bf16.mxu0 0
    %3552 = vmatpush1.bf16.msra.mxu0 0
    %3553 = vmatprep.subr.bf16.mxu0 0
    %3554 = vmatpush1.bf16.msra.mxu0 0
    %3555 = vmatprep.subr.bf16.mxu0 0
    %3556 = vmatpush1.bf16.msra.mxu0 0
    %3557 = vmatprep.subr.bf16.mxu0 0
    %3558 = vmatpush1.bf16.msra.mxu0 0
    %3559 = vmatprep.subr.bf16.mxu0 0
    %3560 = vmatpush1.bf16.msra.mxu0 %v2955
    %3561 = vmatprep.subr.bf16.mxu0 0
    %3562 = vmatpush2.bf16.msra.mxu0 0
    %3563 = vmatprep.subr.bf16.mxu0 0
    %3564 = vmatpush2.bf16.msra.mxu0 0
    %3565 = vmatprep.subr.bf16.mxu0 0
    %3566 = vmatpush2.bf16.msra.mxu0 0
    %3567 = vmatprep.subr.bf16.mxu0 0
    %3568 = vmatpush2.bf16.msra.mxu0 0
    %3569 = vmatprep.subr.bf16.mxu0 0
    %3570 = vmatpush2.bf16.msra.mxu0 0
    %3571 = vmatprep.subr.bf16.mxu0 0
    %3572 = vmatpush2.bf16.msra.mxu0 0
    %3573 = vmatprep.subr.bf16.mxu0 0
    %3574 = vmatpush2.bf16.msra.mxu0 0
    %3575 = vmatprep.subr.bf16.mxu0 0
    %3576 = vmatpush2.bf16.msra.mxu0 0
    %3577 = vmatprep.mubr.bf16.mxu0 0
    %3578 = vmatmul.mubr.bf16.gmra.mxu0 %v3543
    %v3579 = vpop.f32.mrf.mxu0
    %v3580 = vadd.f32 0.0, %v3579
    %v3581 = vpop.f32.mrf.mxu0
    %v3582 = vpop.f32.mrf.mxu0
    %v3583 = vadd.f32 0.0, %v3582
    %v3584 = vpop.f32.mrf.mxu0
    %3585 = vdwg.mxu0
    %v3587 = vsel %vm87, %v3492, 0
    %3589 = vmatprep.subr.bf16.mxu0 0
    %3590 = vmatpush1.bf16.msra.mxu0 0
    %3591 = vmatprep.subr.bf16.mxu0 0
    %3592 = vmatpush1.bf16.msra.mxu0 0
    %3593 = vmatprep.subr.bf16.mxu0 0
    %3594 = vmatpush1.bf16.msra.mxu0 0
    %3595 = vmatprep.subr.bf16.mxu0 0
    %3596 = vmatpush1.bf16.msra.mxu0 0
    %3597 = vmatprep.subr.bf16.mxu0 0
    %3598 = vmatpush1.bf16.msra.mxu0 0
    %3599 = vmatprep.subr.bf16.mxu0 0
    %3600 = vmatpush1.bf16.msra.mxu0 0
    %3601 = vmatprep.subr.bf16.mxu0 0
    %3602 = vmatpush1.bf16.msra.mxu0 0
    %3603 = vmatprep.subr.bf16.mxu0 0
    %3604 = vmatpush1.bf16.msra.mxu0 %v2956
    %3605 = vmatprep.subr.bf16.mxu0 0
    %3606 = vmatpush2.bf16.msra.mxu0 0
    %3607 = vmatprep.subr.bf16.mxu0 0
    %3608 = vmatpush2.bf16.msra.mxu0 0
    %3609 = vmatprep.subr.bf16.mxu0 0
    %3610 = vmatpush2.bf16.msra.mxu0 0
    %3611 = vmatprep.subr.bf16.mxu0 0
    %3612 = vmatpush2.bf16.msra.mxu0 0
    %3613 = vmatprep.subr.bf16.mxu0 0
    %3614 = vmatpush2.bf16.msra.mxu0 0
    %3615 = vmatprep.subr.bf16.mxu0 0
    %3616 = vmatpush2.bf16.msra.mxu0 0
    %3617 = vmatprep.subr.bf16.mxu0 0
    %3618 = vmatpush2.bf16.msra.mxu0 0
    %3619 = vmatprep.subr.bf16.mxu0 0
    %3620 = vmatpush2.bf16.msra.mxu0 0
    %3621 = vmatprep.mubr.bf16.mxu0 0
    %3622 = vmatmul.mubr.bf16.gmra.mxu0 %v3587
    %v3623 = vpop.f32.mrf.mxu0
    %v3624 = vadd.f32 0.0, %v3623
    %v3625 = vpop.f32.mrf.mxu0
    %v3626 = vpop.f32.mrf.mxu0
    %v3627 = vadd.f32 0.0, %v3626
    %v3628 = vpop.f32.mrf.mxu0
    %3629 = vdwg.mxu0
    %v3631 = vsel %vm87, %v3493, 0
    %3633 = vmatprep.subr.bf16.mxu0 0
    %3634 = vmatpush1.bf16.msra.mxu0 0
    %3635 = vmatprep.subr.bf16.mxu0 0
    %3636 = vmatpush1.bf16.msra.mxu0 0
    %3637 = vmatprep.subr.bf16.mxu0 0
    %3638 = vmatpush1.bf16.msra.mxu0 0
    %3639 = vmatprep.subr.bf16.mxu0 0
    %3640 = vmatpush1.bf16.msra.mxu0 0
    %3641 = vmatprep.subr.bf16.mxu0 0
    %3642 = vmatpush1.bf16.msra.mxu0 0
    %3643 = vmatprep.subr.bf16.mxu0 0
    %3644 = vmatpush1.bf16.msra.mxu0 0
    %3645 = vmatprep.subr.bf16.mxu0 0
    %3646 = vmatpush1.bf16.msra.mxu0 0
    %3647 = vmatprep.subr.bf16.mxu0 0
    %3648 = vmatpush1.bf16.msra.mxu0 %v2957
    %3649 = vmatprep.subr.bf16.mxu0 0
    %3650 = vmatpush2.bf16.msra.mxu0 0
    %3651 = vmatprep.subr.bf16.mxu0 0
    %3652 = vmatpush2.bf16.msra.mxu0 0
    %3653 = vmatprep.subr.bf16.mxu0 0
    %3654 = vmatpush2.bf16.msra.mxu0 0
    %3655 = vmatprep.subr.bf16.mxu0 0
    %3656 = vmatpush2.bf16.msra.mxu0 0
    %3657 = vmatprep.subr.bf16.mxu0 0
    %3658 = vmatpush2.bf16.msra.mxu0 0
    %3659 = vmatprep.subr.bf16.mxu0 0
    %3660 = vmatpush2.bf16.msra.mxu0 0
    %3661 = vmatprep.subr.bf16.mxu0 0
    %3662 = vmatpush2.bf16.msra.mxu0 0
    %3663 = vmatprep.subr.bf16.mxu0 0
    %3664 = vmatpush2.bf16.msra.mxu0 0
    %3665 = vmatprep.mubr.bf16.mxu0 0
    %3666 = vmatmul.mubr.bf16.gmra.mxu0 %v3631
    %v3667 = vpop.f32.mrf.mxu0
    %v3668 = vadd.f32 0.0, %v3667
    %v3669 = vpop.f32.mrf.mxu0
    %v3670 = vpop.f32.mrf.mxu0
    %v3671 = vadd.f32 0.0, %v3670
    %v3672 = vpop.f32.mrf.mxu0
    %3673 = vdwg.mxu0
    %v3675 = vsel %vm87, %v3494, 0
    %3677 = vmatprep.subr.bf16.mxu0 0
    %3678 = vmatpush1.bf16.msra.mxu0 0
    %3679 = vmatprep.subr.bf16.mxu0 0
    %3680 = vmatpush1.bf16.msra.mxu0 0
    %3681 = vmatprep.subr.bf16.mxu0 0
    %3682 = vmatpush1.bf16.msra.mxu0 0
    %3683 = vmatprep.subr.bf16.mxu0 0
    %3684 = vmatpush1.bf16.msra.mxu0 0
    %3685 = vmatprep.subr.bf16.mxu0 0
    %3686 = vmatpush1.bf16.msra.mxu0 0
    %3687 = vmatprep.subr.bf16.mxu0 0
    %3688 = vmatpush1.bf16.msra.mxu0 0
    %3689 = vmatprep.subr.bf16.mxu0 0
    %3690 = vmatpush1.bf16.msra.mxu0 0
    %3691 = vmatprep.subr.bf16.mxu0 0
    %3692 = vmatpush1.bf16.msra.mxu0 %v2958
    %3693 = vmatprep.subr.bf16.mxu0 0
    %3694 = vmatpush2.bf16.msra.mxu0 0
    %3695 = vmatprep.subr.bf16.mxu0 0
    %3696 = vmatpush2.bf16.msra.mxu0 0
    %3697 = vmatprep.subr.bf16.mxu0 0
    %3698 = vmatpush2.bf16.msra.mxu0 0
    %3699 = vmatprep.subr.bf16.mxu0 0
    %3700 = vmatpush2.bf16.msra.mxu0 0
    %3701 = vmatprep.subr.bf16.mxu0 0
    %3702 = vmatpush2.bf16.msra.mxu0 0
    %3703 = vmatprep.subr.bf16.mxu0 0
    %3704 = vmatpush2.bf16.msra.mxu0 0
    %3705 = vmatprep.subr.bf16.mxu0 0
    %3706 = vmatpush2.bf16.msra.mxu0 0
    %3707 = vmatprep.subr.bf16.mxu0 0
    %3708 = vmatpush2.bf16.msra.mxu0 0
    %3709 = vmatprep.mubr.bf16.mxu0 0
    %3710 = vmatmul.mubr.bf16.gmra.mxu0 %v3675
    %v3711 = vpop.f32.mrf.mxu0
    %v3712 = vadd.f32 0.0, %v3711
    %v3713 = vpop.f32.mrf.mxu0
    %v3714 = vpop.f32.mrf.mxu0
    %v3715 = vadd.f32 0.0, %v3714
    %v3716 = vpop.f32.mrf.mxu0
    %3717 = vdwg.mxu0
    %v3719 = vsel %vm87, %v3495, 0
    %3721 = vmatprep.subr.bf16.mxu0 0
    %3722 = vmatpush1.bf16.msra.mxu0 0
    %3723 = vmatprep.subr.bf16.mxu0 0
    %3724 = vmatpush1.bf16.msra.mxu0 0
    %3725 = vmatprep.subr.bf16.mxu0 0
    %3726 = vmatpush1.bf16.msra.mxu0 0
    %3727 = vmatprep.subr.bf16.mxu0 0
    %3728 = vmatpush1.bf16.msra.mxu0 0
    %3729 = vmatprep.subr.bf16.mxu0 0
    %3730 = vmatpush1.bf16.msra.mxu0 0
    %3731 = vmatprep.subr.bf16.mxu0 0
    %3732 = vmatpush1.bf16.msra.mxu0 0
    %3733 = vmatprep.subr.bf16.mxu0 0
    %3734 = vmatpush1.bf16.msra.mxu0 0
    %3735 = vmatprep.subr.bf16.mxu0 0
    %3736 = vmatpush1.bf16.msra.mxu0 %v2959
    %3737 = vmatprep.subr.bf16.mxu0 0
    %3738 = vmatpush2.bf16.msra.mxu0 0
    %3739 = vmatprep.subr.bf16.mxu0 0
    %3740 = vmatpush2.bf16.msra.mxu0 0
    %3741 = vmatprep.subr.bf16.mxu0 0
    %3742 = vmatpush2.bf16.msra.mxu0 0
    %3743 = vmatprep.subr.bf16.mxu0 0
    %3744 = vmatpush2.bf16.msra.mxu0 0
    %3745 = vmatprep.subr.bf16.mxu0 0
    %3746 = vmatpush2.bf16.msra.mxu0 0
    %3747 = vmatprep.subr.bf16.mxu0 0
    %3748 = vmatpush2.bf16.msra.mxu0 0
    %3749 = vmatprep.subr.bf16.mxu0 0
    %3750 = vmatpush2.bf16.msra.mxu0 0
    %3751 = vmatprep.subr.bf16.mxu0 0
    %3752 = vmatpush2.bf16.msra.mxu0 0
    %3753 = vmatprep.mubr.bf16.mxu0 0
    %3754 = vmatmul.mubr.bf16.gmra.mxu0 %v3719
    %v3755 = vpop.f32.mrf.mxu0
    %v3756 = vadd.f32 0.0, %v3755
    %v3757 = vpop.f32.mrf.mxu0
    %v3758 = vpop.f32.mrf.mxu0
    %v3759 = vadd.f32 0.0, %v3758
    %v3760 = vpop.f32.mrf.mxu0
    %3761 = vdwg.mxu0
    %v3763 = vsel %vm87, %v3496, 0
    %3765 = vmatprep.subr.bf16.mxu0 0
    %3766 = vmatpush1.bf16.msra.mxu0 0
    %3767 = vmatprep.subr.bf16.mxu0 0
    %3768 = vmatpush1.bf16.msra.mxu0 0
    %3769 = vmatprep.subr.bf16.mxu0 0
    %3770 = vmatpush1.bf16.msra.mxu0 0
    %3771 = vmatprep.subr.bf16.mxu0 0
    %3772 = vmatpush1.bf16.msra.mxu0 0
    %3773 = vmatprep.subr.bf16.mxu0 0
    %3774 = vmatpush1.bf16.msra.mxu0 0
    %3775 = vmatprep.subr.bf16.mxu0 0
    %3776 = vmatpush1.bf16.msra.mxu0 0
    %3777 = vmatprep.subr.bf16.mxu0 0
    %3778 = vmatpush1.bf16.msra.mxu0 0
    %3779 = vmatprep.subr.bf16.mxu0 0
    %3780 = vmatpush1.bf16.msra.mxu0 %v2960
    %3781 = vmatprep.subr.bf16.mxu0 0
    %3782 = vmatpush2.bf16.msra.mxu0 0
    %3783 = vmatprep.subr.bf16.mxu0 0
    %3784 = vmatpush2.bf16.msra.mxu0 0
    %3785 = vmatprep.subr.bf16.mxu0 0
    %3786 = vmatpush2.bf16.msra.mxu0 0
    %3787 = vmatprep.subr.bf16.mxu0 0
    %3788 = vmatpush2.bf16.msra.mxu0 0
    %3789 = vmatprep.subr.bf16.mxu0 0
    %3790 = vmatpush2.bf16.msra.mxu0 0
    %3791 = vmatprep.subr.bf16.mxu0 0
    %3792 = vmatpush2.bf16.msra.mxu0 0
    %3793 = vmatprep.subr.bf16.mxu0 0
    %3794 = vmatpush2.bf16.msra.mxu0 0
    %3795 = vmatprep.subr.bf16.mxu0 0
    %3796 = vmatpush2.bf16.msra.mxu0 0
    %3797 = vmatprep.mubr.bf16.mxu0 0
    %3798 = vmatmul.mubr.bf16.gmra.mxu0 %v3763
    %v3799 = vpop.f32.mrf.mxu0
    %v3800 = vadd.f32 0.0, %v3799
    %v3801 = vpop.f32.mrf.mxu0
    %v3802 = vpop.f32.mrf.mxu0
    %v3803 = vadd.f32 0.0, %v3802
    %v3804 = vpop.f32.mrf.mxu0
    %3805 = vdwg.mxu0
    %v3807 = vsel %vm87, %v3497, 0
    %3809 = vmatprep.subr.bf16.mxu0 0
    %3810 = vmatpush1.bf16.msra.mxu0 0
    %3811 = vmatprep.subr.bf16.mxu0 0
    %3812 = vmatpush1.bf16.msra.mxu0 0
    %3813 = vmatprep.subr.bf16.mxu0 0
    %3814 = vmatpush1.bf16.msra.mxu0 0
    %3815 = vmatprep.subr.bf16.mxu0 0
    %3816 = vmatpush1.bf16.msra.mxu0 0
    %3817 = vmatprep.subr.bf16.mxu0 0
    %3818 = vmatpush1.bf16.msra.mxu0 0
    %3819 = vmatprep.subr.bf16.mxu0 0
    %3820 = vmatpush1.bf16.msra.mxu0 0
    %3821 = vmatprep.subr.bf16.mxu0 0
    %3822 = vmatpush1.bf16.msra.mxu0 0
    %3823 = vmatprep.subr.bf16.mxu0 0
    %3824 = vmatpush1.bf16.msra.mxu0 %v2961
    %3825 = vmatprep.subr.bf16.mxu0 0
    %3826 = vmatpush2.bf16.msra.mxu0 0
    %3827 = vmatprep.subr.bf16.mxu0 0
    %3828 = vmatpush2.bf16.msra.mxu0 0
    %3829 = vmatprep.subr.bf16.mxu0 0
    %3830 = vmatpush2.bf16.msra.mxu0 0
    %3831 = vmatprep.subr.bf16.mxu0 0
    %3832 = vmatpush2.bf16.msra.mxu0 0
    %3833 = vmatprep.subr.bf16.mxu0 0
    %3834 = vmatpush2.bf16.msra.mxu0 0
    %3835 = vmatprep.subr.bf16.mxu0 0
    %3836 = vmatpush2.bf16.msra.mxu0 0
    %3837 = vmatprep.subr.bf16.mxu0 0
    %3838 = vmatpush2.bf16.msra.mxu0 0
    %3839 = vmatprep.subr.bf16.mxu0 0
    %3840 = vmatpush2.bf16.msra.mxu0 0
    %3841 = vmatprep.mubr.bf16.mxu0 0
    %3842 = vmatmul.mubr.bf16.gmra.mxu0 %v3807
    %v3843 = vpop.f32.mrf.mxu0
    %v3844 = vadd.f32 0.0, %v3843
    %v3845 = vpop.f32.mrf.mxu0
    %v3846 = vpop.f32.mrf.mxu0
    %v3847 = vadd.f32 0.0, %v3846
    %v3848 = vpop.f32.mrf.mxu0
    %3849 = vdwg.mxu0
    %v3850 = vpack.c.bf16 %v3539, %v3536
    %v3851 = vpack.c.bf16 %v3583, %v3580
    %v3852 = vpack.c.bf16 %v3627, %v3624
    %v3853 = vpack.c.bf16 %v3671, %v3668
    %v3854 = vpack.c.bf16 %v3715, %v3712
    %v3855 = vpack.c.bf16 %v3759, %v3756
    %v3856 = vpack.c.bf16 %v3803, %v3800
    %v3857 = vpack.c.bf16 %v3847, %v3844
    %v3859 = vsel %vm923, %v3850, 0
    %3861 = vmatprep.subr.bf16.mxu0 0
    %3862 = vmatpush1.bf16.msra.mxu0 0
    %3863 = vmatprep.subr.bf16.mxu0 0
    %3864 = vmatpush1.bf16.msra.mxu0 0
    %3865 = vmatprep.subr.bf16.mxu0 0
    %3866 = vmatpush1.bf16.msra.mxu0 0
    %3867 = vmatprep.subr.bf16.mxu0 0
    %3868 = vmatpush1.bf16.msra.mxu0 0
    %3869 = vmatprep.subr.bf16.mxu0 0
    %3870 = vmatpush1.bf16.msra.mxu0 0
    %3871 = vmatprep.subr.bf16.mxu0 0
    %3872 = vmatpush1.bf16.msra.mxu0 0
    %3873 = vmatprep.subr.bf16.mxu0 0
    %3874 = vmatpush1.bf16.msra.mxu0 0
    %3875 = vmatprep.subr.bf16.mxu0 0
    %3876 = vmatpush1.bf16.msra.mxu0 %v1884
    %3877 = vmatprep.subr.bf16.mxu0 0
    %3878 = vmatpush2.bf16.msra.mxu0 0
    %3879 = vmatprep.subr.bf16.mxu0 0
    %3880 = vmatpush2.bf16.msra.mxu0 0
    %3881 = vmatprep.subr.bf16.mxu0 0
    %3882 = vmatpush2.bf16.msra.mxu0 0
    %3883 = vmatprep.subr.bf16.mxu0 0
    %3884 = vmatpush2.bf16.msra.mxu0 0
    %3885 = vmatprep.subr.bf16.mxu0 0
    %3886 = vmatpush2.bf16.msra.mxu0 0
    %3887 = vmatprep.subr.bf16.mxu0 0
    %3888 = vmatpush2.bf16.msra.mxu0 0
    %3889 = vmatprep.subr.bf16.mxu0 0
    %3890 = vmatpush2.bf16.msra.mxu0 0
    %3891 = vmatprep.subr.bf16.mxu0 0
    %3892 = vmatpush2.bf16.msra.mxu0 0
    %3893 = vmatprep.mubr.bf16.mxu0 0
    %3894 = vmatmul.mubr.bf16.gmra.mxu0 %v3859
    %v3895 = vpop.f32.mrf.mxu0
    %v3896 = vadd.f32 0.0, %v3895
    %v3897 = vpop.f32.mrf.mxu0
    %v3898 = vpop.f32.mrf.mxu0
    %v3899 = vadd.f32 0.0, %v3898
    %v3900 = vpop.f32.mrf.mxu0
    %3901 = vdwg.mxu0
    %v3903 = vsel %vm923, %v3851, 0
    %3905 = vmatprep.subr.bf16.mxu0 0
    %3906 = vmatpush1.bf16.msra.mxu0 0
    %3907 = vmatprep.subr.bf16.mxu0 0
    %3908 = vmatpush1.bf16.msra.mxu0 0
    %3909 = vmatprep.subr.bf16.mxu0 0
    %3910 = vmatpush1.bf16.msra.mxu0 0
    %3911 = vmatprep.subr.bf16.mxu0 0
    %3912 = vmatpush1.bf16.msra.mxu0 0
    %3913 = vmatprep.subr.bf16.mxu0 0
    %3914 = vmatpush1.bf16.msra.mxu0 0
    %3915 = vmatprep.subr.bf16.mxu0 0
    %3916 = vmatpush1.bf16.msra.mxu0 0
    %3917 = vmatprep.subr.bf16.mxu0 0
    %3918 = vmatpush1.bf16.msra.mxu0 0
    %3919 = vmatprep.subr.bf16.mxu0 0
    %3920 = vmatpush1.bf16.msra.mxu0 %v1931
    %3921 = vmatprep.subr.bf16.mxu0 0
    %3922 = vmatpush2.bf16.msra.mxu0 0
    %3923 = vmatprep.subr.bf16.mxu0 0
    %3924 = vmatpush2.bf16.msra.mxu0 0
    %3925 = vmatprep.subr.bf16.mxu0 0
    %3926 = vmatpush2.bf16.msra.mxu0 0
    %3927 = vmatprep.subr.bf16.mxu0 0
    %3928 = vmatpush2.bf16.msra.mxu0 0
    %3929 = vmatprep.subr.bf16.mxu0 0
    %3930 = vmatpush2.bf16.msra.mxu0 0
    %3931 = vmatprep.subr.bf16.mxu0 0
    %3932 = vmatpush2.bf16.msra.mxu0 0
    %3933 = vmatprep.subr.bf16.mxu0 0
    %3934 = vmatpush2.bf16.msra.mxu0 0
    %3935 = vmatprep.subr.bf16.mxu0 0
    %3936 = vmatpush2.bf16.msra.mxu0 0
    %3937 = vmatprep.mubr.bf16.mxu0 0
    %3938 = vmatmul.mubr.bf16.gmra.mxu0 %v3903
    %v3939 = vpop.f32.mrf.mxu0
    %v3940 = vadd.f32 0.0, %v3939
    %v3941 = vpop.f32.mrf.mxu0
    %v3942 = vpop.f32.mrf.mxu0
    %v3943 = vadd.f32 0.0, %v3942
    %v3944 = vpop.f32.mrf.mxu0
    %3945 = vdwg.mxu0
    %v3947 = vsel %vm923, %v3852, 0
    %3949 = vmatprep.subr.bf16.mxu0 0
    %3950 = vmatpush1.bf16.msra.mxu0 0
    %3951 = vmatprep.subr.bf16.mxu0 0
    %3952 = vmatpush1.bf16.msra.mxu0 0
    %3953 = vmatprep.subr.bf16.mxu0 0
    %3954 = vmatpush1.bf16.msra.mxu0 0
    %3955 = vmatprep.subr.bf16.mxu0 0
    %3956 = vmatpush1.bf16.msra.mxu0 0
    %3957 = vmatprep.subr.bf16.mxu0 0
    %3958 = vmatpush1.bf16.msra.mxu0 0
    %3959 = vmatprep.subr.bf16.mxu0 0
    %3960 = vmatpush1.bf16.msra.mxu0 0
    %3961 = vmatprep.subr.bf16.mxu0 0
    %3962 = vmatpush1.bf16.msra.mxu0 0
    %3963 = vmatprep.subr.bf16.mxu0 0
    %3964 = vmatpush1.bf16.msra.mxu0 %v1978
    %3965 = vmatprep.subr.bf16.mxu0 0
    %3966 = vmatpush2.bf16.msra.mxu0 0
    %3967 = vmatprep.subr.bf16.mxu0 0
    %3968 = vmatpush2.bf16.msra.mxu0 0
    %3969 = vmatprep.subr.bf16.mxu0 0
    %3970 = vmatpush2.bf16.msra.mxu0 0
    %3971 = vmatprep.subr.bf16.mxu0 0
    %3972 = vmatpush2.bf16.msra.mxu0 0
    %3973 = vmatprep.subr.bf16.mxu0 0
    %3974 = vmatpush2.bf16.msra.mxu0 0
    %3975 = vmatprep.subr.bf16.mxu0 0
    %3976 = vmatpush2.bf16.msra.mxu0 0
    %3977 = vmatprep.subr.bf16.mxu0 0
    %3978 = vmatpush2.bf16.msra.mxu0 0
    %3979 = vmatprep.subr.bf16.mxu0 0
    %3980 = vmatpush2.bf16.msra.mxu0 0
    %3981 = vmatprep.mubr.bf16.mxu0 0
    %3982 = vmatmul.mubr.bf16.gmra.mxu0 %v3947
    %v3983 = vpop.f32.mrf.mxu0
    %v3984 = vadd.f32 0.0, %v3983
    %v3985 = vpop.f32.mrf.mxu0
    %v3986 = vpop.f32.mrf.mxu0
    %v3987 = vadd.f32 0.0, %v3986
    %v3988 = vpop.f32.mrf.mxu0
    %3989 = vdwg.mxu0
    %v3991 = vsel %vm923, %v3853, 0
    %3993 = vmatprep.subr.bf16.mxu0 0
    %3994 = vmatpush1.bf16.msra.mxu0 0
    %3995 = vmatprep.subr.bf16.mxu0 0
    %3996 = vmatpush1.bf16.msra.mxu0 0
    %3997 = vmatprep.subr.bf16.mxu0 0
    %3998 = vmatpush1.bf16.msra.mxu0 0
    %3999 = vmatprep.subr.bf16.mxu0 0
    %4000 = vmatpush1.bf16.msra.mxu0 0
    %4001 = vmatprep.subr.bf16.mxu0 0
    %4002 = vmatpush1.bf16.msra.mxu0 0
    %4003 = vmatprep.subr.bf16.mxu0 0
    %4004 = vmatpush1.bf16.msra.mxu0 0
    %4005 = vmatprep.subr.bf16.mxu0 0
    %4006 = vmatpush1.bf16.msra.mxu0 0
    %4007 = vmatprep.subr.bf16.mxu0 0
    %4008 = vmatpush1.bf16.msra.mxu0 %v2025
    %4009 = vmatprep.subr.bf16.mxu0 0
    %4010 = vmatpush2.bf16.msra.mxu0 0
    %4011 = vmatprep.subr.bf16.mxu0 0
    %4012 = vmatpush2.bf16.msra.mxu0 0
    %4013 = vmatprep.subr.bf16.mxu0 0
    %4014 = vmatpush2.bf16.msra.mxu0 0
    %4015 = vmatprep.subr.bf16.mxu0 0
    %4016 = vmatpush2.bf16.msra.mxu0 0
    %4017 = vmatprep.subr.bf16.mxu0 0
    %4018 = vmatpush2.bf16.msra.mxu0 0
    %4019 = vmatprep.subr.bf16.mxu0 0
    %4020 = vmatpush2.bf16.msra.mxu0 0
    %4021 = vmatprep.subr.bf16.mxu0 0
    %4022 = vmatpush2.bf16.msra.mxu0 0
    %4023 = vmatprep.subr.bf16.mxu0 0
    %4024 = vmatpush2.bf16.msra.mxu0 0
    %4025 = vmatprep.mubr.bf16.mxu0 0
    %4026 = vmatmul.mubr.bf16.gmra.mxu0 %v3991
    %v4027 = vpop.f32.mrf.mxu0
    %v4028 = vadd.f32 0.0, %v4027
    %v4029 = vpop.f32.mrf.mxu0
    %v4030 = vpop.f32.mrf.mxu0
    %v4031 = vadd.f32 0.0, %v4030
    %v4032 = vpop.f32.mrf.mxu0
    %4033 = vdwg.mxu0
    %v4035 = vsel %vm923, %v3854, 0
    %4037 = vmatprep.subr.bf16.mxu0 0
    %4038 = vmatpush1.bf16.msra.mxu0 0
    %4039 = vmatprep.subr.bf16.mxu0 0
    %4040 = vmatpush1.bf16.msra.mxu0 0
    %4041 = vmatprep.subr.bf16.mxu0 0
    %4042 = vmatpush1.bf16.msra.mxu0 0
    %4043 = vmatprep.subr.bf16.mxu0 0
    %4044 = vmatpush1.bf16.msra.mxu0 0
    %4045 = vmatprep.subr.bf16.mxu0 0
    %4046 = vmatpush1.bf16.msra.mxu0 0
    %4047 = vmatprep.subr.bf16.mxu0 0
    %4048 = vmatpush1.bf16.msra.mxu0 0
    %4049 = vmatprep.subr.bf16.mxu0 0
    %4050 = vmatpush1.bf16.msra.mxu0 0
    %4051 = vmatprep.subr.bf16.mxu0 0
    %4052 = vmatpush1.bf16.msra.mxu0 %v2072
    %4053 = vmatprep.subr.bf16.mxu0 0
    %4054 = vmatpush2.bf16.msra.mxu0 0
    %4055 = vmatprep.subr.bf16.mxu0 0
    %4056 = vmatpush2.bf16.msra.mxu0 0
    %4057 = vmatprep.subr.bf16.mxu0 0
    %4058 = vmatpush2.bf16.msra.mxu0 0
    %4059 = vmatprep.subr.bf16.mxu0 0
    %4060 = vmatpush2.bf16.msra.mxu0 0
    %4061 = vmatprep.subr.bf16.mxu0 0
    %4062 = vmatpush2.bf16.msra.mxu0 0
    %4063 = vmatprep.subr.bf16.mxu0 0
    %4064 = vmatpush2.bf16.msra.mxu0 0
    %4065 = vmatprep.subr.bf16.mxu0 0
    %4066 = vmatpush2.bf16.msra.mxu0 0
    %4067 = vmatprep.subr.bf16.mxu0 0
    %4068 = vmatpush2.bf16.msra.mxu0 0
    %4069 = vmatprep.mubr.bf16.mxu0 0
    %4070 = vmatmul.mubr.bf16.gmra.mxu0 %v4035
    %v4071 = vpop.f32.mrf.mxu0
    %v4072 = vadd.f32 0.0, %v4071
    %v4073 = vpop.f32.mrf.mxu0
    %v4074 = vpop.f32.mrf.mxu0
    %v4075 = vadd.f32 0.0, %v4074
    %v4076 = vpop.f32.mrf.mxu0
    %4077 = vdwg.mxu0
    %v4079 = vsel %vm923, %v3855, 0
    %4081 = vmatprep.subr.bf16.mxu0 0
    %4082 = vmatpush1.bf16.msra.mxu0 0
    %4083 = vmatprep.subr.bf16.mxu0 0
    %4084 = vmatpush1.bf16.msra.mxu0 0
    %4085 = vmatprep.subr.bf16.mxu0 0
    %4086 = vmatpush1.bf16.msra.mxu0 0
    %4087 = vmatprep.subr.bf16.mxu0 0
    %4088 = vmatpush1.bf16.msra.mxu0 0
    %4089 = vmatprep.subr.bf16.mxu0 0
    %4090 = vmatpush1.bf16.msra.mxu0 0
    %4091 = vmatprep.subr.bf16.mxu0 0
    %4092 = vmatpush1.bf16.msra.mxu0 0
    %4093 = vmatprep.subr.bf16.mxu0 0
    %4094 = vmatpush1.bf16.msra.mxu0 0
    %4095 = vmatprep.subr.bf16.mxu0 0
    %4096 = vmatpush1.bf16.msra.mxu0 %v2119
    %4097 = vmatprep.subr.bf16.mxu0 0
    %4098 = vmatpush2.bf16.msra.mxu0 0
    %4099 = vmatprep.subr.bf16.mxu0 0
    %4100 = vmatpush2.bf16.msra.mxu0 0
    %4101 = vmatprep.subr.bf16.mxu0 0
    %4102 = vmatpush2.bf16.msra.mxu0 0
    %4103 = vmatprep.subr.bf16.mxu0 0
    %4104 = vmatpush2.bf16.msra.mxu0 0
    %4105 = vmatprep.subr.bf16.mxu0 0
    %4106 = vmatpush2.bf16.msra.mxu0 0
    %4107 = vmatprep.subr.bf16.mxu0 0
    %4108 = vmatpush2.bf16.msra.mxu0 0
    %4109 = vmatprep.subr.bf16.mxu0 0
    %4110 = vmatpush2.bf16.msra.mxu0 0
    %4111 = vmatprep.subr.bf16.mxu0 0
    %4112 = vmatpush2.bf16.msra.mxu0 0
    %4113 = vmatprep.mubr.bf16.mxu0 0
    %4114 = vmatmul.mubr.bf16.gmra.mxu0 %v4079
    %v4115 = vpop.f32.mrf.mxu0
    %v4116 = vadd.f32 0.0, %v4115
    %v4117 = vpop.f32.mrf.mxu0
    %v4118 = vpop.f32.mrf.mxu0
    %v4119 = vadd.f32 0.0, %v4118
    %v4120 = vpop.f32.mrf.mxu0
    %4121 = vdwg.mxu0
    %v4123 = vsel %vm923, %v3856, 0
    %4125 = vmatprep.subr.bf16.mxu0 0
    %4126 = vmatpush1.bf16.msra.mxu0 0
    %4127 = vmatprep.subr.bf16.mxu0 0
    %4128 = vmatpush1.bf16.msra.mxu0 0
    %4129 = vmatprep.subr.bf16.mxu0 0
    %4130 = vmatpush1.bf16.msra.mxu0 0
    %4131 = vmatprep.subr.bf16.mxu0 0
    %4132 = vmatpush1.bf16.msra.mxu0 0
    %4133 = vmatprep.subr.bf16.mxu0 0
    %4134 = vmatpush1.bf16.msra.mxu0 0
    %4135 = vmatprep.subr.bf16.mxu0 0
    %4136 = vmatpush1.bf16.msra.mxu0 0
    %4137 = vmatprep.subr.bf16.mxu0 0
    %4138 = vmatpush1.bf16.msra.mxu0 0
    %4139 = vmatprep.subr.bf16.mxu0 0
    %4140 = vmatpush1.bf16.msra.mxu0 %v2166
    %4141 = vmatprep.subr.bf16.mxu0 0
    %4142 = vmatpush2.bf16.msra.mxu0 0
    %4143 = vmatprep.subr.bf16.mxu0 0
    %4144 = vmatpush2.bf16.msra.mxu0 0
    %4145 = vmatprep.subr.bf16.mxu0 0
    %4146 = vmatpush2.bf16.msra.mxu0 0
    %4147 = vmatprep.subr.bf16.mxu0 0
    %4148 = vmatpush2.bf16.msra.mxu0 0
    %4149 = vmatprep.subr.bf16.mxu0 0
    %4150 = vmatpush2.bf16.msra.mxu0 0
    %4151 = vmatprep.subr.bf16.mxu0 0
    %4152 = vmatpush2.bf16.msra.mxu0 0
    %4153 = vmatprep.subr.bf16.mxu0 0
    %4154 = vmatpush2.bf16.msra.mxu0 0
    %4155 = vmatprep.subr.bf16.mxu0 0
    %4156 = vmatpush2.bf16.msra.mxu0 0
    %4157 = vmatprep.mubr.bf16.mxu0 0
    %4158 = vmatmul.mubr.bf16.gmra.mxu0 %v4123
    %v4159 = vpop.f32.mrf.mxu0
    %v4160 = vadd.f32 0.0, %v4159
    %v4161 = vpop.f32.mrf.mxu0
    %v4162 = vpop.f32.mrf.mxu0
    %v4163 = vadd.f32 0.0, %v4162
    %v4164 = vpop.f32.mrf.mxu0
    %4165 = vdwg.mxu0
    %v4167 = vsel %vm923, %v3857, 0
    %4169 = vmatprep.subr.bf16.mxu0 0
    %4170 = vmatpush1.bf16.msra.mxu0 0
    %4171 = vmatprep.subr.bf16.mxu0 0
    %4172 = vmatpush1.bf16.msra.mxu0 0
    %4173 = vmatprep.subr.bf16.mxu0 0
    %4174 = vmatpush1.bf16.msra.mxu0 0
    %4175 = vmatprep.subr.bf16.mxu0 0
    %4176 = vmatpush1.bf16.msra.mxu0 0
    %4177 = vmatprep.subr.bf16.mxu0 0
    %4178 = vmatpush1.bf16.msra.mxu0 0
    %4179 = vmatprep.subr.bf16.mxu0 0
    %4180 = vmatpush1.bf16.msra.mxu0 0
    %4181 = vmatprep.subr.bf16.mxu0 0
    %4182 = vmatpush1.bf16.msra.mxu0 0
    %4183 = vmatprep.subr.bf16.mxu0 0
    %4184 = vmatpush1.bf16.msra.mxu0 %v2213
    %4185 = vmatprep.subr.bf16.mxu0 0
    %4186 = vmatpush2.bf16.msra.mxu0 0
    %4187 = vmatprep.subr.bf16.mxu0 0
    %4188 = vmatpush2.bf16.msra.mxu0 0
    %4189 = vmatprep.subr.bf16.mxu0 0
    %4190 = vmatpush2.bf16.msra.mxu0 0
    %4191 = vmatprep.subr.bf16.mxu0 0
    %4192 = vmatpush2.bf16.msra.mxu0 0
    %4193 = vmatprep.subr.bf16.mxu0 0
    %4194 = vmatpush2.bf16.msra.mxu0 0
    %4195 = vmatprep.subr.bf16.mxu0 0
    %4196 = vmatpush2.bf16.msra.mxu0 0
    %4197 = vmatprep.subr.bf16.mxu0 0
    %4198 = vmatpush2.bf16.msra.mxu0 0
    %4199 = vmatprep.subr.bf16.mxu0 0
    %4200 = vmatpush2.bf16.msra.mxu0 0
    %4201 = vmatprep.mubr.bf16.mxu0 0
    %4202 = vmatmul.mubr.bf16.gmra.mxu0 %v4167
    %v4203 = vpop.f32.mrf.mxu0
    %v4204 = vadd.f32 0.0, %v4203
    %v4205 = vpop.f32.mrf.mxu0
    %v4206 = vpop.f32.mrf.mxu0
    %v4207 = vadd.f32 0.0, %v4206
    %v4208 = vpop.f32.mrf.mxu0
    %4209 = vdwg.mxu0
    %v4210 = vsel %vm194, %v3896, 0.0
    %v4211 = vsel %vm194, %v3940, 0.0
    %v4212 = vadd.f32 %v4210, %v4211
    %v4213 = vsel %vm194, %v3984, 0.0
    %v4214 = vadd.f32 %v4212, %v4213
    %v4215 = vsel %vm194, %v4028, 0.0
    %v4216 = vadd.f32 %v4214, %v4215
    %v4217 = vsel %vm194, %v4072, 0.0
    %v4218 = vadd.f32 %v4216, %v4217
    %v4219 = vsel %vm194, %v4116, 0.0
    %v4220 = vadd.f32 %v4218, %v4219
    %v4221 = vsel %vm194, %v4160, 0.0
    %v4222 = vadd.f32 %v4220, %v4221
    %v4223 = vsel %vm194, %v4204, 0.0
    %v4224 = vadd.f32 %v4222, %v4223
    %v4225 = vsel %vm194, %v3899, 0.0
    %v4226 = vsel %vm194, %v3943, 0.0
    %v4227 = vadd.f32 %v4225, %v4226
    %v4228 = vsel %vm194, %v3987, 0.0
    %v4229 = vadd.f32 %v4227, %v4228
    %v4230 = vsel %vm194, %v4031, 0.0
    %v4231 = vadd.f32 %v4229, %v4230
    %v4232 = vsel %vm194, %v4075, 0.0
    %v4233 = vadd.f32 %v4231, %v4232
    %v4234 = vsel %vm194, %v4119, 0.0
    %v4235 = vadd.f32 %v4233, %v4234
    %v4236 = vsel %vm194, %v4163, 0.0
    %v4237 = vadd.f32 %v4235, %v4236
    %v4238 = vsel %vm194, %v4207, 0.0
    %v4239 = vadd.f32 %v4237, %v4238
    %v4240 = vld [vmem:[%s8] sm:$0x1]
    %v4242 = vlaneseq
    %v4243 = vshrl.u32 %v4242, 7
    %v4244 = vsub.s32 0, %v4243
    %v4245 = vrot.slane %v4240, %v4244
    %v4247 = vadd.f32 %v2270, %v4245
    %v4248 = vadd.f32 %v2285, %v4245
    %v4249 = vadd.f32 %v4224, %v4245
    %v4250 = vadd.f32 %v4239, %v4245
    %v4251 = vadd.f32 %v4247, %v149
    %v4252 = vadd.f32 %v4248, %v150
    %v4253 = vadd.f32 %v4249, %v151
    %v4254 = vadd.f32 %v4250, %v152
    %v4255 = vsel %vm194, %v4251, 0.0
    %4256 = vadd.xlane.f32.xlu0 %v4255
    %v4257 = vpop.xlane.xlu0 %4256
    %v4258 = vsel %vm194, %v4252, 0.0
    %4259 = vadd.xlane.f32.xlu0 %v4258
    %v4260 = vpop.xlane.xlu0 %4259
    %v4261 = vsel %vm194, %v4253, 0.0
    %4262 = vadd.xlane.f32.xlu0 %v4261
    %v4263 = vpop.xlane.xlu0 %4262
    %v4264 = vsel %vm194, %v4254, 0.0
    %4265 = vadd.xlane.f32.xlu0 %v4264
    %v4266 = vpop.xlane.xlu0 %4265
    %v4267 = vrcp.pop 32.0
    %v4268 = vmul.f32 %v4257, %v4267
    %v4269 = vmul.f32 %v4260, %v4267
    %v4270 = vmul.f32 %v4263, %v4267
    %v4271 = vmul.f32 %v4266, %v4267
    %v4272 = vsub.f32 %v4251, %v4268
    %v4273 = vsub.f32 %v4252, %v4269
    %v4274 = vsub.f32 %v4253, %v4270
    %v4275 = vsub.f32 %v4254, %v4271
    %v4276 = vmul.f32 %v4272, %v4272
    %v4277 = vmul.f32 %v4273, %v4273
    %v4278 = vmul.f32 %v4274, %v4274
    %v4279 = vmul.f32 %v4275, %v4275
    %v4280 = vsel %vm194, %v4276, 0.0
    %4281 = vadd.xlane.f32.xlu0 %v4280
    %v4282 = vpop.xlane.xlu0 %4281
    %v4283 = vsel %vm194, %v4277, 0.0
    %4284 = vadd.xlane.f32.xlu0 %v4283
    %v4285 = vpop.xlane.xlu0 %4284
    %v4286 = vsel %vm194, %v4278, 0.0
    %4287 = vadd.xlane.f32.xlu0 %v4286
    %v4288 = vpop.xlane.xlu0 %4287
    %v4289 = vsel %vm194, %v4279, 0.0
    %4290 = vadd.xlane.f32.xlu0 %v4289
    %v4291 = vpop.xlane.xlu0 %4290
    %v4292 = vmul.f32 %v4282, %v4267
    %v4293 = vmul.f32 %v4285, %v4267
    %v4294 = vmul.f32 %v4288, %v4267
    %v4295 = vmul.f32 %v4291, %v4267
    %v4296 = vadd.f32 %v4292, 1e-05
    %v4297 = vadd.f32 %v4293, 1e-05
    %v4298 = vadd.f32 %v4294, 1e-05
    %v4299 = vadd.f32 %v4295, 1e-05
    %v4300 = vrsqrt.pop %v4296
    %v4301 = vrsqrt.pop %v4297
    %v4302 = vrsqrt.pop %v4298
    %v4303 = vrsqrt.pop %v4299
    %v4304 = vmul.f32 %v4272, %v4300
    %v4305 = vmul.f32 %v4273, %v4301
    %v4306 = vmul.f32 %v4274, %v4302
    %v4307 = vmul.f32 %v4275, %v4303
    %v4308 = vld [vmem:[%s9] sm:$0x1]
    %v4310 = vlaneseq
    %v4311 = vshrl.u32 %v4310, 7
    %v4312 = vsub.s32 0, %v4311
    %v4313 = vrot.slane %v4308, %v4312
    %v4315 = vmul.f32 %v4304, %v4313
    %v4316 = vmul.f32 %v4305, %v4313
    %v4317 = vmul.f32 %v4306, %v4313
    %v4318 = vmul.f32 %v4307, %v4313
    %v4319 = vld [vmem:[%s10] sm:$0x1]
    %v4321 = vlaneseq
    %v4322 = vshrl.u32 %v4321, 7
    %v4323 = vsub.s32 0, %v4322
    %v4324 = vrot.slane %v4319, %v4323
    %v4326 = vadd.f32 %v4315, %v4324
    %v4327 = vadd.f32 %v4316, %v4324
    %v4328 = vadd.f32 %v4317, %v4324
    %v4329 = vadd.f32 %v4318, %v4324
    %v4330 = vpack.c.bf16 %v4327, %v4326
    %v4331 = vpack.c.bf16 %v4329, %v4328
    %v4332 = vld [vmem:[%s11] sm:$0xf]
    %v4333 = vld [vmem:[%s11 + $0x4] sm:$0xf]
    %v4334 = vld [vmem:[%s11 + $0x8] sm:$0xf]
    %v4335 = vld [vmem:[%s11 + $0xc] sm:$0xf]
    %v4336 = vld [vmem:[%s12] sm:$0x1]
    %v4338 = vlaneseq
    %v4339 = vshrl.u32 %v4338, 7
    %v4340 = vsub.s32 0, %v4339
    %v4341 = vrot.slane %v4336, %v4340
    %v4347 = vunpack.c.l.b16 %v4332
    %v4348 = vunpack.c.l.b16 %v4333
    %v4349 = vunpack.c.l.b16 %v4334
    %v4350 = vunpack.c.l.b16 %v4335
    %v4351 = vpack.c.b16 %v4348, %v4347
    %v4352 = vpack.c.b16 %v4350, %v4349
    %v4356 = vsel %vm194, %v4330, 0
    %v4359 = vsel %vm194, %v4331, 0
    %4361 = vmatprep.subr.bf16.mxu0 0
    %4362 = vmatpush1.bf16.msra.mxu0 0
    %4363 = vmatprep.subr.bf16.mxu0 0
    %4364 = vmatpush1.bf16.msra.mxu0 0
    %4365 = vmatprep.subr.bf16.mxu0 0
    %4366 = vmatpush1.bf16.msra.mxu0 0
    %4367 = vmatprep.subr.bf16.mxu0 0
    %4368 = vmatpush1.bf16.msra.mxu0 0
    %4369 = vmatprep.subr.bf16.mxu0 0
    %4370 = vmatpush1.bf16.msra.mxu0 0
    %4371 = vmatprep.subr.bf16.mxu0 0
    %4372 = vmatpush1.bf16.msra.mxu0 0
    %4373 = vmatprep.subr.bf16.mxu0 0
    %4374 = vmatpush1.bf16.msra.mxu0 %v4352
    %4375 = vmatprep.subr.bf16.mxu0 0
    %4376 = vmatpush1.bf16.msra.mxu0 %v4351
    %4377 = vmatprep.subr.bf16.mxu0 0
    %4378 = vmatpush2.bf16.msra.mxu0 0
    %4379 = vmatprep.subr.bf16.mxu0 0
    %4380 = vmatpush2.bf16.msra.mxu0 0
    %4381 = vmatprep.subr.bf16.mxu0 0
    %4382 = vmatpush2.bf16.msra.mxu0 0
    %4383 = vmatprep.subr.bf16.mxu0 0
    %4384 = vmatpush2.bf16.msra.mxu0 0
    %4385 = vmatprep.subr.bf16.mxu0 0
    %4386 = vmatpush2.bf16.msra.mxu0 0
    %4387 = vmatprep.subr.bf16.mxu0 0
    %4388 = vmatpush2.bf16.msra.mxu0 0
    %4389 = vmatprep.subr.bf16.mxu0 0
    %4390 = vmatpush2.bf16.msra.mxu0 0
    %4391 = vmatprep.subr.bf16.mxu0 0
    %4392 = vmatpush2.bf16.msra.mxu0 0
    %4393 = vmatprep.mubr.bf16.mxu0 0
    %4394 = vmatmul.mubr.bf16.gmra.mxu0 %v4356
    %v4395 = vpop.f32.mrf.mxu0
    %v4396 = vadd.f32 %v4341, %v4395
    %v4397 = vpop.f32.mrf.mxu0
    %v4398 = vpop.f32.mrf.mxu0
    %v4399 = vadd.f32 %v4341, %v4398
    %v4400 = vpop.f32.mrf.mxu0
    %4401 = vmatprep.mubr.bf16.mxu0 0
    %4402 = vmatmul.mubr.bf16.gmra.mxu0 %v4359
    %v4403 = vpop.f32.mrf.mxu0
    %v4404 = vadd.f32 %v4341, %v4403
    %v4405 = vpop.f32.mrf.mxu0
    %v4406 = vpop.f32.mrf.mxu0
    %v4407 = vadd.f32 %v4341, %v4406
    %v4408 = vpop.f32.mrf.mxu0
    %4409 = vdwg.mxu0
    %v4410 = vmax.f32 %v4396, 0.0
    %v4411 = vmax.f32 %v4399, 0.0
    %v4412 = vmax.f32 %v4404, 0.0
    %v4413 = vmax.f32 %v4407, 0.0
    %v4414 = vpack.c.bf16 %v4411, %v4410
    %v4415 = vpack.c.bf16 %v4413, %v4412
    %v4416 = vld [vmem:[%s13] sm:$0xf]
    %v4417 = vld [vmem:[%s13 + $0x4] sm:$0xf]
    %v4418 = vld [vmem:[%s13 + $0x8] sm:$0xf]
    %v4419 = vld [vmem:[%s13 + $0xc] sm:$0xf]
    %v4420 = vld [vmem:[%s13 + $0x10] sm:$0xf]
    %v4421 = vld [vmem:[%s13 + $0x14] sm:$0xf]
    %v4422 = vld [vmem:[%s13 + $0x18] sm:$0xf]
    %v4423 = vld [vmem:[%s13 + $0x1c] sm:$0xf]
    %v4424 = vld [vmem:[%s13 + $0x20] sm:$0xf]
    %v4425 = vld [vmem:[%s13 + $0x24] sm:$0xf]
    %v4426 = vld [vmem:[%s13 + $0x28] sm:$0xf]
    %v4427 = vld [vmem:[%s13 + $0x2c] sm:$0xf]
    %v4428 = vld [vmem:[%s13 + $0x30] sm:$0xf]
    %v4429 = vld [vmem:[%s13 + $0x34] sm:$0xf]
    %v4430 = vld [vmem:[%s13 + $0x38] sm:$0xf]
    %v4431 = vld [vmem:[%s13 + $0x3c] sm:$0xf]
    %v4432 = vld [vmem:[%s14] sm:$0x1]
    %v4434 = vlaneseq
    %v4435 = vshrl.u32 %v4434, 7
    %v4436 = vsub.s32 0, %v4435
    %v4437 = vrot.slane %v4432, %v4436
    %v4455 = vunpack.c.l.b16 %v4416
    %v4456 = vunpack.c.l.b16 %v4417
    %v4457 = vunpack.c.l.b16 %v4418
    %v4458 = vunpack.c.l.b16 %v4419
    %v4459 = vunpack.c.l.b16 %v4420
    %v4460 = vunpack.c.l.b16 %v4421
    %v4461 = vunpack.c.l.b16 %v4422
    %v4462 = vunpack.c.l.b16 %v4423
    %v4463 = vunpack.c.l.b16 %v4424
    %v4464 = vunpack.c.l.b16 %v4425
    %v4465 = vunpack.c.l.b16 %v4426
    %v4466 = vunpack.c.l.b16 %v4427
    %v4467 = vunpack.c.l.b16 %v4428
    %v4468 = vunpack.c.l.b16 %v4429
    %v4469 = vunpack.c.l.b16 %v4430
    %v4470 = vunpack.c.l.b16 %v4431
    %v4471 = vpack.c.b16 %v4456, %v4455
    %v4472 = vpack.c.b16 %v4458, %v4457
    %v4473 = vpack.c.b16 %v4460, %v4459
    %v4474 = vpack.c.b16 %v4462, %v4461
    %v4475 = vpack.c.b16 %v4464, %v4463
    %v4476 = vpack.c.b16 %v4466, %v4465
    %v4477 = vpack.c.b16 %v4468, %v4467
    %v4478 = vpack.c.b16 %v4470, %v4469
    %4487 = vmatprep.subr.bf16.mxu0 0
    %4488 = vmatpush1.bf16.msra.mxu0 %v4478
    %4489 = vmatprep.subr.bf16.mxu0 0
    %4490 = vmatpush1.bf16.msra.mxu0 %v4477
    %4491 = vmatprep.subr.bf16.mxu0 0
    %4492 = vmatpush1.bf16.msra.mxu0 %v4476
    %4493 = vmatprep.subr.bf16.mxu0 0
    %4494 = vmatpush1.bf16.msra.mxu0 %v4475
    %4495 = vmatprep.subr.bf16.mxu0 0
    %4496 = vmatpush1.bf16.msra.mxu0 %v4474
    %4497 = vmatprep.subr.bf16.mxu0 0
    %4498 = vmatpush1.bf16.msra.mxu0 %v4473
    %4499 = vmatprep.subr.bf16.mxu0 0
    %4500 = vmatpush1.bf16.msra.mxu0 %v4472
    %4501 = vmatprep.subr.bf16.mxu0 0
    %4502 = vmatpush1.bf16.msra.mxu0 %v4471
    %4503 = vmatprep.subr.bf16.mxu0 0
    %4504 = vmatpush2.bf16.msra.mxu0 0
    %4505 = vmatprep.subr.bf16.mxu0 0
    %4506 = vmatpush2.bf16.msra.mxu0 0
    %4507 = vmatprep.subr.bf16.mxu0 0
    %4508 = vmatpush2.bf16.msra.mxu0 0
    %4509 = vmatprep.subr.bf16.mxu0 0
    %4510 = vmatpush2.bf16.msra.mxu0 0
    %4511 = vmatprep.subr.bf16.mxu0 0
    %4512 = vmatpush2.bf16.msra.mxu0 0
    %4513 = vmatprep.subr.bf16.mxu0 0
    %4514 = vmatpush2.bf16.msra.mxu0 0
    %4515 = vmatprep.subr.bf16.mxu0 0
    %4516 = vmatpush2.bf16.msra.mxu0 0
    %4517 = vmatprep.subr.bf16.mxu0 0
    %4518 = vmatpush2.bf16.msra.mxu0 0
    %4519 = vmatprep.mubr.bf16.mxu0 0
    %4520 = vmatmul.mubr.bf16.gmra.mxu0 %v4414
    %v4521 = vpop.f32.mrf.mxu0
    %v4522 = vadd.f32 %v4437, %v4521
    %v4523 = vpop.f32.mrf.mxu0
    %v4524 = vpop.f32.mrf.mxu0
    %v4525 = vadd.f32 %v4437, %v4524
    %v4526 = vpop.f32.mrf.mxu0
    %4527 = vmatprep.mubr.bf16.mxu0 0
    %4528 = vmatmul.mubr.bf16.gmra.mxu0 %v4415
    %v4529 = vpop.f32.mrf.mxu0
    %v4530 = vadd.f32 %v4437, %v4529
    %v4531 = vpop.f32.mrf.mxu0
    %v4532 = vpop.f32.mrf.mxu0
    %v4533 = vadd.f32 %v4437, %v4532
    %v4534 = vpop.f32.mrf.mxu0
    %4535 = vdwg.mxu0
    %v4536 = vadd.f32 %v4326, %v4522
    %v4537 = vadd.f32 %v4327, %v4525
    %v4538 = vadd.f32 %v4328, %v4530
    %v4539 = vadd.f32 %v4329, %v4533
    %v4540 = vsel %vm194, %v4536, 0.0
    %4541 = vadd.xlane.f32.xlu0 %v4540
    %v4542 = vpop.xlane.xlu0 %4541
    %v4543 = vsel %vm194, %v4537, 0.0
    %4544 = vadd.xlane.f32.xlu0 %v4543
    %v4545 = vpop.xlane.xlu0 %4544
    %v4546 = vsel %vm194, %v4538, 0.0
    %4547 = vadd.xlane.f32.xlu0 %v4546
    %v4548 = vpop.xlane.xlu0 %4547
    %v4549 = vsel %vm194, %v4539, 0.0
    %4550 = vadd.xlane.f32.xlu0 %v4549
    %v4551 = vpop.xlane.xlu0 %4550
    %v4552 = vmul.f32 %v4542, %v4267
    %v4553 = vmul.f32 %v4545, %v4267
    %v4554 = vmul.f32 %v4548, %v4267
    %v4555 = vmul.f32 %v4551, %v4267
    %v4556 = vsub.f32 %v4536, %v4552
    %v4557 = vsub.f32 %v4537, %v4553
    %v4558 = vsub.f32 %v4538, %v4554
    %v4559 = vsub.f32 %v4539, %v4555
    %v4560 = vmul.f32 %v4556, %v4556
    %v4561 = vmul.f32 %v4557, %v4557
    %v4562 = vmul.f32 %v4558, %v4558
    %v4563 = vmul.f32 %v4559, %v4559
    %v4564 = vsel %vm194, %v4560, 0.0
    %4565 = vadd.xlane.f32.xlu0 %v4564
    %v4566 = vpop.xlane.xlu0 %4565
    %v4567 = vsel %vm194, %v4561, 0.0
    %4568 = vadd.xlane.f32.xlu0 %v4567
    %v4569 = vpop.xlane.xlu0 %4568
    %v4570 = vsel %vm194, %v4562, 0.0
    %4571 = vadd.xlane.f32.xlu0 %v4570
    %v4572 = vpop.xlane.xlu0 %4571
    %v4573 = vsel %vm194, %v4563, 0.0
    %4574 = vadd.xlane.f32.xlu0 %v4573
    %v4575 = vpop.xlane.xlu0 %4574
    %v4576 = vmul.f32 %v4566, %v4267
    %v4577 = vmul.f32 %v4569, %v4267
    %v4578 = vmul.f32 %v4572, %v4267
    %v4579 = vmul.f32 %v4575, %v4267
    %v4580 = vadd.f32 %v4576, 1e-05
    %v4581 = vadd.f32 %v4577, 1e-05
    %v4582 = vadd.f32 %v4578, 1e-05
    %v4583 = vadd.f32 %v4579, 1e-05
    %v4584 = vrsqrt.pop %v4580
    %v4585 = vrsqrt.pop %v4581
    %v4586 = vrsqrt.pop %v4582
    %v4587 = vrsqrt.pop %v4583
    %v4588 = vmul.f32 %v4556, %v4584
    %v4589 = vmul.f32 %v4557, %v4585
    %v4590 = vmul.f32 %v4558, %v4586
    %v4591 = vmul.f32 %v4559, %v4587
    %v4592 = vld [vmem:[%s15] sm:$0x1]
    %v4594 = vlaneseq
    %v4595 = vshrl.u32 %v4594, 7
    %v4596 = vsub.s32 0, %v4595
    %v4597 = vrot.slane %v4592, %v4596
    %v4599 = vmul.f32 %v4588, %v4597
    %v4600 = vmul.f32 %v4589, %v4597
    %v4601 = vmul.f32 %v4590, %v4597
    %v4602 = vmul.f32 %v4591, %v4597
    %v4603 = vld [vmem:[%s16] sm:$0x1]
    %v4605 = vlaneseq
    %v4606 = vshrl.u32 %v4605, 7
    %v4607 = vsub.s32 0, %v4606
    %v4608 = vrot.slane %v4603, %v4607
    %v4610 = vadd.f32 %v4599, %v4608
    %v4611 = vadd.f32 %v4600, %v4608
    %v4612 = vadd.f32 %v4601, %v4608
    %v4613 = vadd.f32 %v4602, %v4608
    %4614 = vst.msk [vmem:[#allocation2] sm:$0xff] %vm194, %v4610
    %4615 = vst.msk [vmem:[#allocation2 + $0x8] sm:$0xff] %vm194, %v4611
    %4616 = vst.msk [vmem:[#allocation2 + $0x10] sm:$0xff] %vm194, %v4612
    %4617 = vst.msk [vmem:[#allocation2 + $0x18] sm:$0xff] %vm194, %v4613
    // Predicated region
    $region70: #{tpu_custom_call.1} parent=1 // pred_check
      _
    $region71: #{tpu_custom_call.1} parent=1 // pred_check_branch
      %4619 = sbr.rel (0) target = $region73
    $region72: #{tpu_custom_call.1} parent=1 // pred_region
      %s4621 = ssub.s32 512, 512
      %4622 = vsyncadd [#allocation3], %s4621
      %s4623 = sshll.u32 [#allocation2], 4
      %s4624 = int_to_ptr.vmem [resolvable:$true] %s4623
      %4629 = dma.vmem_to_hbm [thread:$0]  %s4624, 512, %s17, [#allocation3], 128, 128, 8
    $region73: #{tpu_custom_call.1} parent=1 // pred_fallthru
      _
    // Predicated region
    $region74: #{tpu_custom_call.1} parent=1 // pred_check
      _
    $region75: #{tpu_custom_call.1} parent=1 // pred_check_branch
      %4631 = sbr.rel (0) target = $region77
    $region76: #{tpu_custom_call.1} parent=1 // pred_region
      %4632 = dma.done [#allocation3], 512
    $region77: #{tpu_custom_call.1} parent=1 // pred_fallthru
      _
    %4633 = vsyncpa [#allocation3], 1

</llo_original>
